<compile_context>
chip_gen: v7x
topology: tpu7x:2x2x1
jax: 0.10.0
libtpu: 0.0.40
codegen_flags: <defaults>
</compile_context>

<pallas_src>
import functools

import jax
import jax.numpy as jnp
import numpy as np
from jax import lax
from jax.experimental import pallas as pl
from jax.experimental.pallas import tpu as pltpu


def _round_up(v, m):
    return (v + m - 1) // m * m


def hinet_kernel(w1_ref, b1_ref, w2_ref, b2_ref, wid_ref, bid_ref,
                 gamma_ref, beta_ref, x_ref,
                 o_ref, fbig_ref, col_ref,
                 *, C, H, W, NB, slot, margin, slope, eps, use_hin, nh):
    Hp, Wp = H + 2, W + 2
    P = NB * slot                      # lanes per grid step (multiple of 128)
    M = margin                         # lane-aligned shift margin on each side
    f32 = jnp.float32
    cdt = fbig_ref.dtype               # MXU operand dtype (bf16)

    # Interior-pixel mask for one image slot, built on the VPU (no DMA'd
    # constants).  row = floor((p+0.5)/Wp) via float mul avoids vector int div.
    lane = lax.broadcasted_iota(jnp.int32, (1, slot), 1)
    lane_f = lane.astype(f32)
    row = jnp.floor((lane_f + 0.5) * (1.0 / Wp)).astype(jnp.int32)
    colp = lane - row * Wp
    interior = ((lane < Hp * Wp) & (row >= 1) & (row <= H)
                & (colp >= 1) & (colp <= W)).astype(f32)       # (1, slot)
    mask_full = jnp.tile(interior, (1, NB))                    # (1, P)

    def leaky(v):
        return jnp.where(v > 0, v, slope * v)

    def conv3x3(w_ref):
        # im2col: stack the 9 shifted views into (9C, P), then ONE K=9C matmul
        # (bf16 operands, f32 accumulation).
        for t in range(9):
            ky, kx = t // 3, t % 3
            d = (ky - 1) * Wp + (kx - 1)
            col_ref[t * C:(t + 1) * C, :] = fbig_ref[:, M + d:M + d + P]
        return jnp.dot(w_ref[...], col_ref[...], preferred_element_type=f32)

    # Margins re-zeroed every step (scratch is per-core; halo-position results
    # must stay finite even though they are masked out downstream).
    fbig_ref[:, 0:M] = jnp.zeros((C, M), cdt)
    fbig_ref[:, M + P:] = jnp.zeros((C, M), cdt)

    # --------------------------- conv_1 (3x3, pad=1) -------------------------
    fbig_ref[:, M:M + P] = x_ref[...]
    out1 = conv3x3(w1_ref) + b1_ref[...]                       # (C, P) f32

    # ------- Half Instance Norm (first nh channels) + relu_1 + masking -------
    # Results are written straight into the conv_2 input slab (no splice
    # round-trip).  Stats: per-image XLU lane reductions in f32, VPU broadcast.
    inv_hw = 1.0 / float(H * W)
    if use_hin:
        if nh < C:
            fbig_ref[nh:, M:M + P] = (leaky(out1[nh:]) * mask_full).astype(cdt)
        first = out1[:nh]
        g = gamma_ref[...]
        bta = beta_ref[...]
        for b in range(NB):                                    # NB is small & static
            f = first[:, b * slot:(b + 1) * slot]              # lane-aligned slice
            fm = f * interior
            s1 = jnp.sum(fm, axis=-1, keepdims=True)
            s2 = jnp.sum(fm * fm, axis=-1, keepdims=True)
            mean = s1 * inv_hw
            var = s2 * inv_hw - mean * mean                    # eps covers cancellation
            y = (f - mean) * lax.rsqrt(var + eps)
            y = leaky(g * y + bta) * interior
            fbig_ref[0:nh, M + b * slot:M + (b + 1) * slot] = y.astype(cdt)
    else:
        fbig_ref[:, M:M + P] = (leaky(out1) * mask_full).astype(cdt)

    # --------------------------- conv_2 (3x3, pad=1) -------------------------
    out2 = leaky(conv3x3(w2_ref) + b2_ref[...])                # relu_2

    # ------------ 1x1 identity conv on the original input + residual ---------
    ident = jnp.dot(wid_ref[...], x_ref[...],
                    preferred_element_type=f32) + bid_ref[...]
    o_ref[...] = (out2 + ident).astype(o_ref.dtype)


def _vmem_capacity_bytes():
    try:
        return int(pltpu.get_tpu_info().vmem_capacity_bytes)
    except Exception:
        return 128 * 1024 * 1024          # v5e / v6e physical size


def _pick_images_per_step(n, c, slot, margin, out_bytes, vmem_cap, min_steps=2):
    """Largest divisor of n whose per-step working set fits ~half of VMEM while
    keeping the grid at >= min_steps steps (so v7x can use both TensorCores)."""
    budget = vmem_cap // 2
    best = 1
    for d in range(1, n + 1):
        if n % d:
            continue
        p = d * slot
        need = (2 * c * p * 2                 # double-buffered bf16 input block
                + 2 * c * p * out_bytes       # double-buffered output block
                + c * (p + 2 * margin) * 2    # padded-slab scratch (bf16)
                + 9 * c * p * 2)              # im2col slab scratch (bf16)
        if need > budget:
            continue
        if n // d < min(min_steps, n):
            continue
        best = d
    return best


def hinet_forward(x, params, relu_slope=0.2, eps=1e-5, use_hin=True,
                  images_per_step=None, compute_dtype=jnp.bfloat16):
    N, C, H, W = x.shape
    w1, b1, w2, b2, wid, bid, gamma, beta = params
    Hp, Wp = H + 2, W + 2
    slot = _round_up(Hp * Wp, 128)            # lanes reserved per image
    margin = _round_up(Wp + 1, 128)           # lane-aligned shift margin
    nh = C // 2 if C % 2 == 0 else C
    assert gamma.shape[0] == nh and beta.shape[0] == nh

    out_bytes = jnp.dtype(x.dtype).itemsize
    vmem_cap = _vmem_capacity_bytes()
    # Scoped VMEM limit scales with the part: ~96 MiB on 128-MiB v5e/v6e,
    # automatically smaller on v7x's 64-MiB VMEM.
    vmem_limit = min(int(vmem_cap * 3 // 4), 112 * 1024 * 1024)

    NB = images_per_step or _pick_images_per_step(
        N, C, slot, margin, out_bytes, vmem_cap)
    assert N % NB == 0, "batch must be divisible by images_per_step"
    P = NB * slot

    # Activations: channel-major, zero-padded spatial flattened onto lanes.
    xp = jnp.pad(x, ((0, 0), (0, 0), (1, 1), (1, 1)))          # (N,C,Hp,Wp)
    xp = xp.reshape(N, C, Hp * Wp)
    xp = jnp.pad(xp, ((0, 0), (0, 0), (0, slot - Hp * Wp)))    # (N,C,slot)
    x2 = jnp.transpose(xp, (1, 0, 2)).reshape(C, N * slot).astype(compute_dtype)

    # Weights: (C_out, 9*C_in), tap-major inner order matching the im2col slab.
    w1t = jnp.transpose(w1, (0, 2, 3, 1)).reshape(C, 9 * C).astype(compute_dtype)
    w2t = jnp.transpose(w2, (0, 2, 3, 1)).reshape(C, 9 * C).astype(compute_dtype)
    widt = wid.reshape(C, C).astype(compute_dtype)
    b1c = b1.reshape(C, 1).astype(jnp.float32)
    b2c = b2.reshape(C, 1).astype(jnp.float32)
    bidc = bid.reshape(C, 1).astype(jnp.float32)
    gammac = gamma.reshape(nh, 1).astype(jnp.float32)
    betac = beta.reshape(nh, 1).astype(jnp.float32)

    kern = functools.partial(
        hinet_kernel, C=C, H=H, W=W, NB=NB, slot=slot, margin=margin,
        slope=relu_slope, eps=eps, use_hin=use_hin, nh=nh)

    def run(single_buffer_consts):
        const_kw = {}
        if single_buffer_consts:
            # Grid-constant operands: one VMEM buffer instead of two (matters
            # for the 9*C^2 weight slabs at production C, esp. on v7x).
            const_kw = dict(pipeline_mode=pl.Buffered(1))

        def const(shape):
            return pl.BlockSpec(shape, lambda n: (0, 0), **const_kw)

        act_spec = pl.BlockSpec((C, P), lambda n: (0, n))

        return pl.pallas_call(
            kern,
            out_shape=jax.ShapeDtypeStruct((C, N * slot), x.dtype),
            grid_spec=pltpu.PrefetchScalarGridSpec(
                num_scalar_prefetch=0,
                grid=(N // NB,),
                in_specs=[const((C, 9 * C)), const((C, 1)),
                          const((C, 9 * C)), const((C, 1)),
                          const((C, C)), const((C, 1)),
                          const((nh, 1)), const((nh, 1)),
                          act_spec],
                out_specs=act_spec,
                scratch_shapes=[
                    pltpu.VMEM((C, P + 2 * margin), compute_dtype),  # padded slab
                    pltpu.VMEM((9 * C, P), compute_dtype),           # im2col slab
                ],
            ),
            compiler_params=pltpu.CompilerParams(
                dimension_semantics=("parallel",),
                vmem_limit_bytes=vmem_limit),
        )(w1t, b1c, w2t, b2c, widt, bidc, gammac, betac, x2)

    try:
        out2d = run(True)
    except Exception:
        # pl.Buffered(1) / pipeline_mode not supported by this jax version:
        # fall back to default double-buffered constants (same numerics, only
        # costs VMEM headroom at large C).
        out2d = run(False)

    # Un-flatten: drop halo / tail lanes, back to NCHW.
    out = out2d.reshape(C, N, slot)[:, :, :Hp * Wp].reshape(C, N, Hp, Wp)
    out = out[:, :, 1:H + 1, 1:W + 1]
    return jnp.transpose(out, (1, 0, 2, 3))


def hinet_reference(x, params, relu_slope=0.2, eps=1e-5):
    """Pure-JAX reference mirroring the PyTorch module (NCHW)."""
    w1, b1, w2, b2, wid, bid, gamma, beta = params

    def conv(v, w, b, pad):
        y = lax.conv_general_dilated(
            v, w, (1, 1), ((pad, pad), (pad, pad)),
            dimension_numbers=("NCHW", "OIHW", "NCHW"),
            precision=lax.Precision.HIGHEST)
        return y + b[None, :, None, None]

    out = conv(x, w1, b1, 1)
    C = x.shape[1]
    nh = C // 2 if C % 2 == 0 else C
    first = out[:, :nh]
    mean = first.mean(axis=(2, 3), keepdims=True)
    var = ((first - mean) ** 2).mean(axis=(2, 3), keepdims=True)
    first = (first - mean) / jnp.sqrt(var + eps)
    first = gamma[None, :, None, None] * first + beta[None, :, None, None]
    out = jnp.concatenate([first, out[:, nh:]], axis=1)
    out = jnp.where(out > 0, out, relu_slope * out)        # relu_1
    out = conv(out, w2, b2, 1)
    out = jnp.where(out > 0, out, relu_slope * out)        # relu_2
    ident = conv(x, wid, bid, 0)                           # 1x1 identity conv
    return out + ident


if __name__ == "__main__":
    N, C, H, W = 2, 4, 16, 16
    key = jax.random.PRNGKey(0)
    ks = jax.random.split(key, 9)

    x = jax.random.normal(ks[0], (N, C, H, W), jnp.float32)
    nh = C // 2 if C % 2 == 0 else C
    w1 = jax.random.normal(ks[1], (C, C, 3, 3), jnp.float32) * 0.1
    b1 = jax.random.normal(ks[2], (C,), jnp.float32) * 0.1
    w2 = jax.random.normal(ks[3], (C, C, 3, 3), jnp.float32) * 0.1
    b2 = jax.random.normal(ks[4], (C,), jnp.float32) * 0.1
    wid = jax.random.normal(ks[5], (C, C, 1, 1), jnp.float32) * 0.1
    bid = jax.random.normal(ks[6], (C,), jnp.float32) * 0.1
    gamma = 1.0 + 0.1 * jax.random.normal(ks[7], (nh,), jnp.float32)
    beta = 0.1 * jax.random.normal(ks[8], (nh,), jnp.float32)
    params = (w1, b1, w2, b2, wid, bid, gamma, beta)

    out = jax.block_until_ready(hinet_forward(x, params))
    ref = jax.block_until_ready(hinet_reference(x, params))

    # Kernel uses bf16 MXU operands (per the perf review) against an f32
    # HIGHEST-precision reference; observed max error is ~1e-3..1e-2 at these
    # magnitudes, so the tolerance below leaves comfortable margin.
    np.testing.assert_allclose(np.asarray(out), np.asarray(ref),
                               atol=3e-2, rtol=3e-2)
    print("KERNEL_OK")
</pallas_src>

<mosaic_0001>
module attributes {stable_mosaic.version = 11 : i64} {
  func.func @hinet_kernel(%arg0: i32, %arg1: memref<4x36xbf16, #tpu.memory_space<vmem>>, %arg2: memref<4x1xf32, #tpu.memory_space<vmem>>, %arg3: memref<4x36xbf16, #tpu.memory_space<vmem>>, %arg4: memref<4x1xf32, #tpu.memory_space<vmem>>, %arg5: memref<4x4xbf16, #tpu.memory_space<vmem>>, %arg6: memref<4x1xf32, #tpu.memory_space<vmem>>, %arg7: memref<2x1xf32, #tpu.memory_space<vmem>>, %arg8: memref<2x1xf32, #tpu.memory_space<vmem>>, %arg9: memref<4x384xbf16, #tpu.memory_space<vmem>>, %arg10: memref<4x384xf32, #tpu.memory_space<vmem>>, %arg11: memref<4x640xbf16, #tpu.memory_space<vmem>>, %arg12: memref<36x384xbf16, #tpu.memory_space<vmem>>) attributes {dimension_semantics = [#tpu.dimension_semantics<parallel>], iteration_bounds = array<i64: 2>, scalar_prefetch = 0 : i64, scratch_operands = 2 : i64, tpu.core_type = #tpu.core_type<tc>, window_params = [{pipeline_mode = #tpu.pipeline_mode<synchronous>, transform_indices = @transform_0, window_bounds = array<i64: 4, 36>}, {pipeline_mode = #tpu.pipeline_mode<synchronous>, transform_indices = @transform_1, window_bounds = array<i64: 4, 1>}, {pipeline_mode = #tpu.pipeline_mode<synchronous>, transform_indices = @transform_2, window_bounds = array<i64: 4, 36>}, {pipeline_mode = #tpu.pipeline_mode<synchronous>, transform_indices = @transform_3, window_bounds = array<i64: 4, 1>}, {pipeline_mode = #tpu.pipeline_mode<synchronous>, transform_indices = @transform_4, window_bounds = array<i64: 4, 4>}, {pipeline_mode = #tpu.pipeline_mode<synchronous>, transform_indices = @transform_5, window_bounds = array<i64: 4, 1>}, {pipeline_mode = #tpu.pipeline_mode<synchronous>, transform_indices = @transform_6, window_bounds = array<i64: 2, 1>}, {pipeline_mode = #tpu.pipeline_mode<synchronous>, transform_indices = @transform_7, window_bounds = array<i64: 2, 1>}, {transform_indices = @transform_8, window_bounds = array<i64: 4, 384>}, {transform_indices = @transform_9, window_bounds = array<i64: 4, 384>}]} {
    %0 = tpu.iota {dimensions = array<i32: 1>} : vector<1x384xi32>
    %1 = arith.sitofp %0 : vector<1x384xi32> to vector<1x384xf32>
    %cst = arith.constant 5.000000e-01 : f32
    %2 = vector.broadcast %cst : f32 to vector<1x384xf32>
    %3 = arith.addf %1, %2 : vector<1x384xf32>
    %cst_0 = arith.constant 0.055555556 : f32
    %4 = vector.broadcast %cst_0 : f32 to vector<1x384xf32>
    %5 = arith.mulf %3, %4 : vector<1x384xf32>
    %6 = math.floor %5 : vector<1x384xf32>
    %7 = arith.fptosi %6 : vector<1x384xf32> to vector<1x384xi32>
    %c18_i32 = arith.constant 18 : i32
    %8 = vector.broadcast %c18_i32 : i32 to vector<1x384xi32>
    %9 = arith.muli %7, %8 : vector<1x384xi32>
    %10 = arith.subi %0, %9 : vector<1x384xi32>
    %c324_i32 = arith.constant 324 : i32
    %11 = vector.broadcast %c324_i32 : i32 to vector<1x384xi32>
    %12 = arith.cmpi slt, %0, %11 : vector<1x384xi32>
    %c1_i32 = arith.constant 1 : i32
    %13 = vector.broadcast %c1_i32 : i32 to vector<1x384xi32>
    %14 = arith.cmpi sge, %7, %13 : vector<1x384xi32>
    %15 = arith.andi %12, %14 : vector<1x384xi1>
    %c16_i32 = arith.constant 16 : i32
    %16 = vector.broadcast %c16_i32 : i32 to vector<1x384xi32>
    %17 = arith.cmpi sle, %7, %16 : vector<1x384xi32>
    %18 = arith.andi %15, %17 : vector<1x384xi1>
    %c1_i32_1 = arith.constant 1 : i32
    %19 = vector.broadcast %c1_i32_1 : i32 to vector<1x384xi32>
    %20 = arith.cmpi sge, %10, %19 : vector<1x384xi32>
    %21 = arith.andi %18, %20 : vector<1x384xi1>
    %c16_i32_2 = arith.constant 16 : i32
    %22 = vector.broadcast %c16_i32_2 : i32 to vector<1x384xi32>
    %23 = arith.cmpi sle, %10, %22 : vector<1x384xi32>
    %24 = arith.andi %21, %23 : vector<1x384xi1>
    %25 = arith.extui %24 : vector<1x384xi1> to vector<1x384xi32>
    %26 = arith.sitofp %25 : vector<1x384xi32> to vector<1x384xf32>
    %cst_3 = arith.constant 0.000000e+00 : bf16
    %27 = vector.broadcast %cst_3 : bf16 to vector<4x128xbf16>
    %c0 = arith.constant 0 : index
    %c0_4 = arith.constant 0 : index
    %28 = vector.load %arg11[%c0, %c0_4] : memref<4x640xbf16, #tpu.memory_space<vmem>>, vector<4x128xbf16>
    tpu.vector_store %arg11[%c0, %c0_4], %27 {strides = array<i32>} : memref<4x640xbf16, #tpu.memory_space<vmem>>, vector<4x128xbf16>,
    %cst_5 = arith.constant 0.000000e+00 : bf16
    %29 = vector.broadcast %cst_5 : bf16 to vector<4x128xbf16>
    %c0_6 = arith.constant 0 : index
    %c512 = arith.constant 512 : index
    %30 = vector.load %arg11[%c0_6, %c512] : memref<4x640xbf16, #tpu.memory_space<vmem>>, vector<4x128xbf16>
    tpu.vector_store %arg11[%c0_6, %c512], %29 {strides = array<i32>} : memref<4x640xbf16, #tpu.memory_space<vmem>>, vector<4x128xbf16>,
    %c0_7 = arith.constant 0 : index
    %c0_8 = arith.constant 0 : index
    %31 = vector.load %arg9[%c0_7, %c0_8] : memref<4x384xbf16, #tpu.memory_space<vmem>>, vector<4x384xbf16>
    %c0_9 = arith.constant 0 : index
    %c128 = arith.constant 128 : index
    %32 = vector.load %arg11[%c0_9, %c128] : memref<4x640xbf16, #tpu.memory_space<vmem>>, vector<4x384xbf16>
    tpu.vector_store %arg11[%c0_9, %c128], %31 {strides = array<i32>} : memref<4x640xbf16, #tpu.memory_space<vmem>>, vector<4x384xbf16>,
    %c0_10 = arith.constant 0 : index
    %c109 = arith.constant 109 : index
    %33 = vector.load %arg11[%c0_10, %c109] : memref<4x640xbf16, #tpu.memory_space<vmem>>, vector<4x384xbf16>
    %c0_11 = arith.constant 0 : index
    %c0_12 = arith.constant 0 : index
    %34 = vector.load %arg12[%c0_11, %c0_12] : memref<36x384xbf16, #tpu.memory_space<vmem>>, vector<4x384xbf16>
    tpu.vector_store %arg12[%c0_11, %c0_12], %33 {strides = array<i32>} : memref<36x384xbf16, #tpu.memory_space<vmem>>, vector<4x384xbf16>,
    %c0_13 = arith.constant 0 : index
    %c110 = arith.constant 110 : index
    %35 = vector.load %arg11[%c0_13, %c110] : memref<4x640xbf16, #tpu.memory_space<vmem>>, vector<4x384xbf16>
    %c4 = arith.constant 4 : index
    %c0_14 = arith.constant 0 : index
    %36 = vector.load %arg12[%c4, %c0_14] : memref<36x384xbf16, #tpu.memory_space<vmem>>, vector<4x384xbf16>
    tpu.vector_store %arg12[%c4, %c0_14], %35 {strides = array<i32>} : memref<36x384xbf16, #tpu.memory_space<vmem>>, vector<4x384xbf16>,
    %c0_15 = arith.constant 0 : index
    %c111 = arith.constant 111 : index
    %37 = vector.load %arg11[%c0_15, %c111] : memref<4x640xbf16, #tpu.memory_space<vmem>>, vector<4x384xbf16>
    %c8 = arith.constant 8 : index
    %c0_16 = arith.constant 0 : index
    %38 = vector.load %arg12[%c8, %c0_16] : memref<36x384xbf16, #tpu.memory_space<vmem>>, vector<4x384xbf16>
    tpu.vector_store %arg12[%c8, %c0_16], %37 {strides = array<i32>} : memref<36x384xbf16, #tpu.memory_space<vmem>>, vector<4x384xbf16>,
    %c0_17 = arith.constant 0 : index
    %c127 = arith.constant 127 : index
    %39 = vector.load %arg11[%c0_17, %c127] : memref<4x640xbf16, #tpu.memory_space<vmem>>, vector<4x384xbf16>
    %c12 = arith.constant 12 : index
    %c0_18 = arith.constant 0 : index
    %40 = vector.load %arg12[%c12, %c0_18] : memref<36x384xbf16, #tpu.memory_space<vmem>>, vector<4x384xbf16>
    tpu.vector_store %arg12[%c12, %c0_18], %39 {strides = array<i32>} : memref<36x384xbf16, #tpu.memory_space<vmem>>, vector<4x384xbf16>,
    %c0_19 = arith.constant 0 : index
    %c128_20 = arith.constant 128 : index
    %41 = vector.load %arg11[%c0_19, %c128_20] : memref<4x640xbf16, #tpu.memory_space<vmem>>, vector<4x384xbf16>
    %c16 = arith.constant 16 : index
    %c0_21 = arith.constant 0 : index
    %42 = vector.load %arg12[%c16, %c0_21] : memref<36x384xbf16, #tpu.memory_space<vmem>>, vector<4x384xbf16>
    tpu.vector_store %arg12[%c16, %c0_21], %41 {strides = array<i32>} : memref<36x384xbf16, #tpu.memory_space<vmem>>, vector<4x384xbf16>,
    %c0_22 = arith.constant 0 : index
    %c129 = arith.constant 129 : index
    %43 = vector.load %arg11[%c0_22, %c129] : memref<4x640xbf16, #tpu.memory_space<vmem>>, vector<4x384xbf16>
    %c20 = arith.constant 20 : index
    %c0_23 = arith.constant 0 : index
    %44 = vector.load %arg12[%c20, %c0_23] : memref<36x384xbf16, #tpu.memory_space<vmem>>, vector<4x384xbf16>
    tpu.vector_store %arg12[%c20, %c0_23], %43 {strides = array<i32>} : memref<36x384xbf16, #tpu.memory_space<vmem>>, vector<4x384xbf16>,
    %c0_24 = arith.constant 0 : index
    %c145 = arith.constant 145 : index
    %45 = vector.load %arg11[%c0_24, %c145] : memref<4x640xbf16, #tpu.memory_space<vmem>>, vector<4x384xbf16>
    %c24 = arith.constant 24 : index
    %c0_25 = arith.constant 0 : index
    %46 = vector.load %arg12[%c24, %c0_25] : memref<36x384xbf16, #tpu.memory_space<vmem>>, vector<4x384xbf16>
    tpu.vector_store %arg12[%c24, %c0_25], %45 {strides = array<i32>} : memref<36x384xbf16, #tpu.memory_space<vmem>>, vector<4x384xbf16>,
    %c0_26 = arith.constant 0 : index
    %c146 = arith.constant 146 : index
    %47 = vector.load %arg11[%c0_26, %c146] : memref<4x640xbf16, #tpu.memory_space<vmem>>, vector<4x384xbf16>
    %c28 = arith.constant 28 : index
    %c0_27 = arith.constant 0 : index
    %48 = vector.load %arg12[%c28, %c0_27] : memref<36x384xbf16, #tpu.memory_space<vmem>>, vector<4x384xbf16>
    tpu.vector_store %arg12[%c28, %c0_27], %47 {strides = array<i32>} : memref<36x384xbf16, #tpu.memory_space<vmem>>, vector<4x384xbf16>,
    %c0_28 = arith.constant 0 : index
    %c147 = arith.constant 147 : index
    %49 = vector.load %arg11[%c0_28, %c147] : memref<4x640xbf16, #tpu.memory_space<vmem>>, vector<4x384xbf16>
    %c32 = arith.constant 32 : index
    %c0_29 = arith.constant 0 : index
    %50 = vector.load %arg12[%c32, %c0_29] : memref<36x384xbf16, #tpu.memory_space<vmem>>, vector<4x384xbf16>
    tpu.vector_store %arg12[%c32, %c0_29], %49 {strides = array<i32>} : memref<36x384xbf16, #tpu.memory_space<vmem>>, vector<4x384xbf16>,
    %c0_30 = arith.constant 0 : index
    %c0_31 = arith.constant 0 : index
    %51 = vector.load %arg1[%c0_30, %c0_31] : memref<4x36xbf16, #tpu.memory_space<vmem>>, vector<4x36xbf16>
    %c0_32 = arith.constant 0 : index
    %c0_33 = arith.constant 0 : index
    %52 = vector.load %arg12[%c0_32, %c0_33] : memref<36x384xbf16, #tpu.memory_space<vmem>>, vector<36x384xbf16>
    %cst_34 = arith.constant dense<0.000000e+00> : vector<4x384xf32>
    %53 = tpu.matmul %51, %52, %cst_34 {dimension_numbers = #tpu.dot_dimension_numbers<[1], [0], [0], [1], [0, 0, 1, 1], [], []>} : vector<4x36xbf16>, vector<36x384xbf16>, vector<4x384xf32> -> vector<4x384xf32>
    %c0_35 = arith.constant 0 : index
    %c0_36 = arith.constant 0 : index
    %54 = vector.load %arg2[%c0_35, %c0_36] : memref<4x1xf32, #tpu.memory_space<vmem>>, vector<4x1xf32>
    %55 = vector.broadcast %54 : vector<4x1xf32> to vector<4x384xf32>
    %56 = arith.addf %53, %55 : vector<4x384xf32>
    %57 = vector.extract_strided_slice %56 {offsets = [2, 0], sizes = [2, 384], strides = [1, 1]} : vector<4x384xf32> to vector<2x384xf32>
    %cst_37 = arith.constant 0.000000e+00 : f32
    %58 = vector.broadcast %cst_37 : f32 to vector<2x384xf32>
    %59 = arith.cmpf ogt, %57, %58 : vector<2x384xf32>
    %cst_38 = arith.constant 2.000000e-01 : f32
    %60 = vector.broadcast %cst_38 : f32 to vector<2x384xf32>
    %61 = arith.mulf %60, %57 : vector<2x384xf32>
    %62 = arith.select %59, %57, %61 : vector<2x384xi1>, vector<2x384xf32>
    %63 = vector.broadcast %26 : vector<1x384xf32> to vector<2x384xf32>
    %64 = arith.mulf %62, %63 : vector<2x384xf32>
    %65 = arith.truncf %64 : vector<2x384xf32> to vector<2x384xbf16>
    %c2 = arith.constant 2 : index
    %c128_39 = arith.constant 128 : index
    %66 = vector.load %arg11[%c2, %c128_39] : memref<4x640xbf16, #tpu.memory_space<vmem>>, vector<2x384xbf16>
    tpu.vector_store %arg11[%c2, %c128_39], %65 {strides = array<i32>} : memref<4x640xbf16, #tpu.memory_space<vmem>>, vector<2x384xbf16>,
    %67 = vector.extract_strided_slice %56 {offsets = [0, 0], sizes = [2, 384], strides = [1, 1]} : vector<4x384xf32> to vector<2x384xf32>
    %c0_40 = arith.constant 0 : index
    %c0_41 = arith.constant 0 : index
    %68 = vector.load %arg7[%c0_40, %c0_41] : memref<2x1xf32, #tpu.memory_space<vmem>>, vector<2x1xf32>
    %c0_42 = arith.constant 0 : index
    %c0_43 = arith.constant 0 : index
    %69 = vector.load %arg8[%c0_42, %c0_43] : memref<2x1xf32, #tpu.memory_space<vmem>>, vector<2x1xf32>
    %70 = vector.broadcast %26 : vector<1x384xf32> to vector<2x384xf32>
    %71 = arith.mulf %67, %70 : vector<2x384xf32>
    %cst_44 = arith.constant dense<0.000000e+00> : vector<2xf32>
    %72 = vector.multi_reduction <add>, %71, %cst_44 [1] : vector<2x384xf32> to vector<2xf32>
    %73 = vector.shape_cast %72 : vector<2xf32> to vector<2x1xf32>
    %74 = arith.mulf %71, %71 : vector<2x384xf32>
    %cst_45 = arith.constant dense<0.000000e+00> : vector<2xf32>
    %75 = vector.multi_reduction <add>, %74, %cst_45 [1] : vector<2x384xf32> to vector<2xf32>
    %76 = vector.shape_cast %75 : vector<2xf32> to vector<2x1xf32>
    %cst_46 = arith.constant 3.906250e-03 : f32
    %77 = vector.broadcast %cst_46 : f32 to vector<2x1xf32>
    %78 = arith.mulf %73, %77 : vector<2x1xf32>
    %cst_47 = arith.constant 3.906250e-03 : f32
    %79 = vector.broadcast %cst_47 : f32 to vector<2x1xf32>
    %80 = arith.mulf %76, %79 : vector<2x1xf32>
    %81 = arith.mulf %78, %78 : vector<2x1xf32>
    %82 = arith.subf %80, %81 : vector<2x1xf32>
    %83 = vector.broadcast %78 : vector<2x1xf32> to vector<2x384xf32>
    %84 = arith.subf %67, %83 : vector<2x384xf32>
    %cst_48 = arith.constant 9.99999974E-6 : f32
    %85 = vector.broadcast %cst_48 : f32 to vector<2x1xf32>
    %86 = arith.addf %82, %85 : vector<2x1xf32>
    %87 = math.rsqrt %86 : vector<2x1xf32>
    %88 = vector.broadcast %87 : vector<2x1xf32> to vector<2x384xf32>
    %89 = arith.mulf %84, %88 : vector<2x384xf32>
    %90 = vector.broadcast %68 : vector<2x1xf32> to vector<2x384xf32>
    %91 = arith.mulf %90, %89 : vector<2x384xf32>
    %92 = vector.broadcast %69 : vector<2x1xf32> to vector<2x384xf32>
    %93 = arith.addf %91, %92 : vector<2x384xf32>
    %cst_49 = arith.constant 0.000000e+00 : f32
    %94 = vector.broadcast %cst_49 : f32 to vector<2x384xf32>
    %95 = arith.cmpf ogt, %93, %94 : vector<2x384xf32>
    %cst_50 = arith.constant 2.000000e-01 : f32
    %96 = vector.broadcast %cst_50 : f32 to vector<2x384xf32>
    %97 = arith.mulf %96, %93 : vector<2x384xf32>
    %98 = arith.select %95, %93, %97 : vector<2x384xi1>, vector<2x384xf32>
    %99 = vector.broadcast %26 : vector<1x384xf32> to vector<2x384xf32>
    %100 = arith.mulf %98, %99 : vector<2x384xf32>
    %101 = arith.truncf %100 : vector<2x384xf32> to vector<2x384xbf16>
    %c0_51 = arith.constant 0 : index
    %c128_52 = arith.constant 128 : index
    %102 = vector.load %arg11[%c0_51, %c128_52] : memref<4x640xbf16, #tpu.memory_space<vmem>>, vector<2x384xbf16>
    tpu.vector_store %arg11[%c0_51, %c128_52], %101 {strides = array<i32>} : memref<4x640xbf16, #tpu.memory_space<vmem>>, vector<2x384xbf16>,
    %c0_53 = arith.constant 0 : index
    %c109_54 = arith.constant 109 : index
    %103 = vector.load %arg11[%c0_53, %c109_54] : memref<4x640xbf16, #tpu.memory_space<vmem>>, vector<4x384xbf16>
    %c0_55 = arith.constant 0 : index
    %c0_56 = arith.constant 0 : index
    %104 = vector.load %arg12[%c0_55, %c0_56] : memref<36x384xbf16, #tpu.memory_space<vmem>>, vector<4x384xbf16>
    tpu.vector_store %arg12[%c0_55, %c0_56], %103 {strides = array<i32>} : memref<36x384xbf16, #tpu.memory_space<vmem>>, vector<4x384xbf16>,
    %c0_57 = arith.constant 0 : index
    %c110_58 = arith.constant 110 : index
    %105 = vector.load %arg11[%c0_57, %c110_58] : memref<4x640xbf16, #tpu.memory_space<vmem>>, vector<4x384xbf16>
    %c4_59 = arith.constant 4 : index
    %c0_60 = arith.constant 0 : index
    %106 = vector.load %arg12[%c4_59, %c0_60] : memref<36x384xbf16, #tpu.memory_space<vmem>>, vector<4x384xbf16>
    tpu.vector_store %arg12[%c4_59, %c0_60], %105 {strides = array<i32>} : memref<36x384xbf16, #tpu.memory_space<vmem>>, vector<4x384xbf16>,
    %c0_61 = arith.constant 0 : index
    %c111_62 = arith.constant 111 : index
    %107 = vector.load %arg11[%c0_61, %c111_62] : memref<4x640xbf16, #tpu.memory_space<vmem>>, vector<4x384xbf16>
    %c8_63 = arith.constant 8 : index
    %c0_64 = arith.constant 0 : index
    %108 = vector.load %arg12[%c8_63, %c0_64] : memref<36x384xbf16, #tpu.memory_space<vmem>>, vector<4x384xbf16>
    tpu.vector_store %arg12[%c8_63, %c0_64], %107 {strides = array<i32>} : memref<36x384xbf16, #tpu.memory_space<vmem>>, vector<4x384xbf16>,
    %c0_65 = arith.constant 0 : index
    %c127_66 = arith.constant 127 : index
    %109 = vector.load %arg11[%c0_65, %c127_66] : memref<4x640xbf16, #tpu.memory_space<vmem>>, vector<4x384xbf16>
    %c12_67 = arith.constant 12 : index
    %c0_68 = arith.constant 0 : index
    %110 = vector.load %arg12[%c12_67, %c0_68] : memref<36x384xbf16, #tpu.memory_space<vmem>>, vector<4x384xbf16>
    tpu.vector_store %arg12[%c12_67, %c0_68], %109 {strides = array<i32>} : memref<36x384xbf16, #tpu.memory_space<vmem>>, vector<4x384xbf16>,
    %c0_69 = arith.constant 0 : index
    %c128_70 = arith.constant 128 : index
    %111 = vector.load %arg11[%c0_69, %c128_70] : memref<4x640xbf16, #tpu.memory_space<vmem>>, vector<4x384xbf16>
    %c16_71 = arith.constant 16 : index
    %c0_72 = arith.constant 0 : index
    %112 = vector.load %arg12[%c16_71, %c0_72] : memref<36x384xbf16, #tpu.memory_space<vmem>>, vector<4x384xbf16>
    tpu.vector_store %arg12[%c16_71, %c0_72], %111 {strides = array<i32>} : memref<36x384xbf16, #tpu.memory_space<vmem>>, vector<4x384xbf16>,
    %c0_73 = arith.constant 0 : index
    %c129_74 = arith.constant 129 : index
    %113 = vector.load %arg11[%c0_73, %c129_74] : memref<4x640xbf16, #tpu.memory_space<vmem>>, vector<4x384xbf16>
    %c20_75 = arith.constant 20 : index
    %c0_76 = arith.constant 0 : index
    %114 = vector.load %arg12[%c20_75, %c0_76] : memref<36x384xbf16, #tpu.memory_space<vmem>>, vector<4x384xbf16>
    tpu.vector_store %arg12[%c20_75, %c0_76], %113 {strides = array<i32>} : memref<36x384xbf16, #tpu.memory_space<vmem>>, vector<4x384xbf16>,
    %c0_77 = arith.constant 0 : index
    %c145_78 = arith.constant 145 : index
    %115 = vector.load %arg11[%c0_77, %c145_78] : memref<4x640xbf16, #tpu.memory_space<vmem>>, vector<4x384xbf16>
    %c24_79 = arith.constant 24 : index
    %c0_80 = arith.constant 0 : index
    %116 = vector.load %arg12[%c24_79, %c0_80] : memref<36x384xbf16, #tpu.memory_space<vmem>>, vector<4x384xbf16>
    tpu.vector_store %arg12[%c24_79, %c0_80], %115 {strides = array<i32>} : memref<36x384xbf16, #tpu.memory_space<vmem>>, vector<4x384xbf16>,
    %c0_81 = arith.constant 0 : index
    %c146_82 = arith.constant 146 : index
    %117 = vector.load %arg11[%c0_81, %c146_82] : memref<4x640xbf16, #tpu.memory_space<vmem>>, vector<4x384xbf16>
    %c28_83 = arith.constant 28 : index
    %c0_84 = arith.constant 0 : index
    %118 = vector.load %arg12[%c28_83, %c0_84] : memref<36x384xbf16, #tpu.memory_space<vmem>>, vector<4x384xbf16>
    tpu.vector_store %arg12[%c28_83, %c0_84], %117 {strides = array<i32>} : memref<36x384xbf16, #tpu.memory_space<vmem>>, vector<4x384xbf16>,
    %c0_85 = arith.constant 0 : index
    %c147_86 = arith.constant 147 : index
    %119 = vector.load %arg11[%c0_85, %c147_86] : memref<4x640xbf16, #tpu.memory_space<vmem>>, vector<4x384xbf16>
    %c32_87 = arith.constant 32 : index
    %c0_88 = arith.constant 0 : index
    %120 = vector.load %arg12[%c32_87, %c0_88] : memref<36x384xbf16, #tpu.memory_space<vmem>>, vector<4x384xbf16>
    tpu.vector_store %arg12[%c32_87, %c0_88], %119 {strides = array<i32>} : memref<36x384xbf16, #tpu.memory_space<vmem>>, vector<4x384xbf16>,
    %c0_89 = arith.constant 0 : index
    %c0_90 = arith.constant 0 : index
    %121 = vector.load %arg3[%c0_89, %c0_90] : memref<4x36xbf16, #tpu.memory_space<vmem>>, vector<4x36xbf16>
    %c0_91 = arith.constant 0 : index
    %c0_92 = arith.constant 0 : index
    %122 = vector.load %arg12[%c0_91, %c0_92] : memref<36x384xbf16, #tpu.memory_space<vmem>>, vector<36x384xbf16>
    %cst_93 = arith.constant dense<0.000000e+00> : vector<4x384xf32>
    %123 = tpu.matmul %121, %122, %cst_93 {dimension_numbers = #tpu.dot_dimension_numbers<[1], [0], [0], [1], [0, 0, 1, 1], [], []>} : vector<4x36xbf16>, vector<36x384xbf16>, vector<4x384xf32> -> vector<4x384xf32>
    %c0_94 = arith.constant 0 : index
    %c0_95 = arith.constant 0 : index
    %124 = vector.load %arg4[%c0_94, %c0_95] : memref<4x1xf32, #tpu.memory_space<vmem>>, vector<4x1xf32>
    %125 = vector.broadcast %124 : vector<4x1xf32> to vector<4x384xf32>
    %126 = arith.addf %123, %125 : vector<4x384xf32>
    %cst_96 = arith.constant 0.000000e+00 : f32
    %127 = vector.broadcast %cst_96 : f32 to vector<4x384xf32>
    %128 = arith.cmpf ogt, %126, %127 : vector<4x384xf32>
    %cst_97 = arith.constant 2.000000e-01 : f32
    %129 = vector.broadcast %cst_97 : f32 to vector<4x384xf32>
    %130 = arith.mulf %129, %126 : vector<4x384xf32>
    %131 = arith.select %128, %126, %130 : vector<4x384xi1>, vector<4x384xf32>
    %c0_98 = arith.constant 0 : index
    %c0_99 = arith.constant 0 : index
    %132 = vector.load %arg5[%c0_98, %c0_99] : memref<4x4xbf16, #tpu.memory_space<vmem>>, vector<4x4xbf16>
    %c0_100 = arith.constant 0 : index
    %c0_101 = arith.constant 0 : index
    %133 = vector.load %arg9[%c0_100, %c0_101] : memref<4x384xbf16, #tpu.memory_space<vmem>>, vector<4x384xbf16>
    %cst_102 = arith.constant dense<0.000000e+00> : vector<4x384xf32>
    %134 = tpu.matmul %132, %133, %cst_102 {dimension_numbers = #tpu.dot_dimension_numbers<[1], [0], [0], [1], [0, 0, 1, 1], [], []>} : vector<4x4xbf16>, vector<4x384xbf16>, vector<4x384xf32> -> vector<4x384xf32>
    %c0_103 = arith.constant 0 : index
    %c0_104 = arith.constant 0 : index
    %135 = vector.load %arg6[%c0_103, %c0_104] : memref<4x1xf32, #tpu.memory_space<vmem>>, vector<4x1xf32>
    %136 = vector.broadcast %135 : vector<4x1xf32> to vector<4x384xf32>
    %137 = arith.addf %134, %136 : vector<4x384xf32>
    %138 = arith.addf %131, %137 : vector<4x384xf32>
    %c0_105 = arith.constant 0 : index
    %c0_106 = arith.constant 0 : index
    %139 = vector.load %arg10[%c0_105, %c0_106] : memref<4x384xf32, #tpu.memory_space<vmem>>, vector<4x384xf32>
    tpu.vector_store %arg10[%c0_105, %c0_106], %138 {strides = array<i32>} : memref<4x384xf32, #tpu.memory_space<vmem>>, vector<4x384xf32>,
    return
  }
  func.func @transform_0(%arg0: i32) -> (i32, i32) {
    %c0_i32 = arith.constant 0 : i32
    %c0_i32_0 = arith.constant 0 : i32
    %c0_i32_1 = arith.constant 0 : i32
    return %c0_i32, %c0_i32_0 : i32, i32
  }
  func.func @transform_1(%arg0: i32) -> (i32, i32) {
    %c0_i32 = arith.constant 0 : i32
    %c0_i32_0 = arith.constant 0 : i32
    %c0_i32_1 = arith.constant 0 : i32
    return %c0_i32, %c0_i32_0 : i32, i32
  }
  func.func @transform_2(%arg0: i32) -> (i32, i32) {
    %c0_i32 = arith.constant 0 : i32
    %c0_i32_0 = arith.constant 0 : i32
    %c0_i32_1 = arith.constant 0 : i32
    return %c0_i32, %c0_i32_0 : i32, i32
  }
  func.func @transform_3(%arg0: i32) -> (i32, i32) {
    %c0_i32 = arith.constant 0 : i32
    %c0_i32_0 = arith.constant 0 : i32
    %c0_i32_1 = arith.constant 0 : i32
    return %c0_i32, %c0_i32_0 : i32, i32
  }
  func.func @transform_4(%arg0: i32) -> (i32, i32) {
    %c0_i32 = arith.constant 0 : i32
    %c0_i32_0 = arith.constant 0 : i32
    %c0_i32_1 = arith.constant 0 : i32
    return %c0_i32, %c0_i32_0 : i32, i32
  }
  func.func @transform_5(%arg0: i32) -> (i32, i32) {
    %c0_i32 = arith.constant 0 : i32
    %c0_i32_0 = arith.constant 0 : i32
    %c0_i32_1 = arith.constant 0 : i32
    return %c0_i32, %c0_i32_0 : i32, i32
  }
  func.func @transform_6(%arg0: i32) -> (i32, i32) {
    %c0_i32 = arith.constant 0 : i32
    %c0_i32_0 = arith.constant 0 : i32
    %c0_i32_1 = arith.constant 0 : i32
    return %c0_i32, %c0_i32_0 : i32, i32
  }
  func.func @transform_7(%arg0: i32) -> (i32, i32) {
    %c0_i32 = arith.constant 0 : i32
    %c0_i32_0 = arith.constant 0 : i32
    %c0_i32_1 = arith.constant 0 : i32
    return %c0_i32, %c0_i32_0 : i32, i32
  }
  func.func @transform_8(%arg0: i32) -> (i32, i32) {
    %c0_i32 = arith.constant 0 : i32
    %c0_i32_0 = arith.constant 0 : i32
    return %c0_i32, %arg0 : i32, i32
  }
  func.func @transform_9(%arg0: i32) -> (i32, i32) {
    %c0_i32 = arith.constant 0 : i32
    %c0_i32_0 = arith.constant 0 : i32
    return %c0_i32, %arg0 : i32, i32
  }
}

module attributes {stable_mosaic.version = 11 : i64} {
  func.func @hinet_kernel(%arg0: i32, %arg1: memref<4x36xbf16, #tpu.memory_space<vmem>>, %arg2: memref<4x1xf32, #tpu.memory_space<vmem>>, %arg3: memref<4x36xbf16, #tpu.memory_space<vmem>>, %arg4: memref<4x1xf32, #tpu.memory_space<vmem>>, %arg5: memref<4x4xbf16, #tpu.memory_space<vmem>>, %arg6: memref<4x1xf32, #tpu.memory_space<vmem>>, %arg7: memref<2x1xf32, #tpu.memory_space<vmem>>, %arg8: memref<2x1xf32, #tpu.memory_space<vmem>>, %arg9: memref<4x384xbf16, #tpu.memory_space<vmem>>, %arg10: memref<4x384xf32, #tpu.memory_space<vmem>>, %arg11: memref<4x640xbf16, #tpu.memory_space<vmem>>, %arg12: memref<36x384xbf16, #tpu.memory_space<vmem>>) attributes {dimension_semantics = [#tpu.dimension_semantics<parallel>], iteration_bounds = array<i64: 2>, scalar_prefetch = 0 : i64, scratch_operands = 2 : i64, tpu.core_type = #tpu.core_type<tc>, window_params = [{pipeline_mode = #tpu.pipeline_mode<synchronous>, transform_indices = @transform_0, window_bounds = array<i64: 4, 36>}, {pipeline_mode = #tpu.pipeline_mode<synchronous>, transform_indices = @transform_1, window_bounds = array<i64: 4, 1>}, {pipeline_mode = #tpu.pipeline_mode<synchronous>, transform_indices = @transform_2, window_bounds = array<i64: 4, 36>}, {pipeline_mode = #tpu.pipeline_mode<synchronous>, transform_indices = @transform_3, window_bounds = array<i64: 4, 1>}, {pipeline_mode = #tpu.pipeline_mode<synchronous>, transform_indices = @transform_4, window_bounds = array<i64: 4, 4>}, {pipeline_mode = #tpu.pipeline_mode<synchronous>, transform_indices = @transform_5, window_bounds = array<i64: 4, 1>}, {pipeline_mode = #tpu.pipeline_mode<synchronous>, transform_indices = @transform_6, window_bounds = array<i64: 2, 1>}, {pipeline_mode = #tpu.pipeline_mode<synchronous>, transform_indices = @transform_7, window_bounds = array<i64: 2, 1>}, {transform_indices = @transform_8, window_bounds = array<i64: 4, 384>}, {transform_indices = @transform_9, window_bounds = array<i64: 4, 384>}]} {
    %0 = tpu.iota {dimensions = array<i32: 1>} : vector<1x384xi32>
    %1 = arith.sitofp %0 : vector<1x384xi32> to vector<1x384xf32>
    %cst = arith.constant 5.000000e-01 : f32
    %2 = vector.broadcast %cst : f32 to vector<1x384xf32>
    %3 = arith.addf %1, %2 : vector<1x384xf32>
    %cst_0 = arith.constant 0.055555556 : f32
    %4 = vector.broadcast %cst_0 : f32 to vector<1x384xf32>
    %5 = arith.mulf %3, %4 : vector<1x384xf32>
    %6 = math.floor %5 : vector<1x384xf32>
    %7 = arith.fptosi %6 : vector<1x384xf32> to vector<1x384xi32>
    %c18_i32 = arith.constant 18 : i32
    %8 = vector.broadcast %c18_i32 : i32 to vector<1x384xi32>
    %9 = arith.muli %7, %8 : vector<1x384xi32>
    %10 = arith.subi %0, %9 : vector<1x384xi32>
    %c324_i32 = arith.constant 324 : i32
    %11 = vector.broadcast %c324_i32 : i32 to vector<1x384xi32>
    %12 = arith.cmpi slt, %0, %11 : vector<1x384xi32>
    %c1_i32 = arith.constant 1 : i32
    %13 = vector.broadcast %c1_i32 : i32 to vector<1x384xi32>
    %14 = arith.cmpi sge, %7, %13 : vector<1x384xi32>
    %15 = arith.andi %12, %14 : vector<1x384xi1>
    %c16_i32 = arith.constant 16 : i32
    %16 = vector.broadcast %c16_i32 : i32 to vector<1x384xi32>
    %17 = arith.cmpi sle, %7, %16 : vector<1x384xi32>
    %18 = arith.andi %15, %17 : vector<1x384xi1>
    %c1_i32_1 = arith.constant 1 : i32
    %19 = vector.broadcast %c1_i32_1 : i32 to vector<1x384xi32>
    %20 = arith.cmpi sge, %10, %19 : vector<1x384xi32>
    %21 = arith.andi %18, %20 : vector<1x384xi1>
    %c16_i32_2 = arith.constant 16 : i32
    %22 = vector.broadcast %c16_i32_2 : i32 to vector<1x384xi32>
    %23 = arith.cmpi sle, %10, %22 : vector<1x384xi32>
    %24 = arith.andi %21, %23 : vector<1x384xi1>
    %25 = arith.extui %24 : vector<1x384xi1> to vector<1x384xi32>
    %26 = arith.sitofp %25 : vector<1x384xi32> to vector<1x384xf32>
    %cst_3 = arith.constant 0.000000e+00 : bf16
    %27 = vector.broadcast %cst_3 : bf16 to vector<4x128xbf16>
    %c0 = arith.constant 0 : index
    %c0_4 = arith.constant 0 : index
    %28 = vector.load %arg11[%c0, %c0_4] : memref<4x640xbf16, #tpu.memory_space<vmem>>, vector<4x128xbf16>
    tpu.vector_store %arg11[%c0, %c0_4], %27 {strides = array<i32>} : memref<4x640xbf16, #tpu.memory_space<vmem>>, vector<4x128xbf16>,
    %cst_5 = arith.constant 0.000000e+00 : bf16
    %29 = vector.broadcast %cst_5 : bf16 to vector<4x128xbf16>
    %c0_6 = arith.constant 0 : index
    %c512 = arith.constant 512 : index
    %30 = vector.load %arg11[%c0_6, %c512] : memref<4x640xbf16, #tpu.memory_space<vmem>>, vector<4x128xbf16>
    tpu.vector_store %arg11[%c0_6, %c512], %29 {strides = array<i32>} : memref<4x640xbf16, #tpu.memory_space<vmem>>, vector<4x128xbf16>,
    %c0_7 = arith.constant 0 : index
    %c0_8 = arith.constant 0 : index
    %31 = vector.load %arg9[%c0_7, %c0_8] : memref<4x384xbf16, #tpu.memory_space<vmem>>, vector<4x384xbf16>
    %c0_9 = arith.constant 0 : index
    %c128 = arith.constant 128 : index
    %32 = vector.load %arg11[%c0_9, %c128] : memref<4x640xbf16, #tpu.memory_space<vmem>>, vector<4x384xbf16>
    tpu.vector_store %arg11[%c0_9, %c128], %31 {strides = array<i32>} : memref<4x640xbf16, #tpu.memory_space<vmem>>, vector<4x384xbf16>,
    %c0_10 = arith.constant 0 : index
    %c109 = arith.constant 109 : index
    %33 = vector.load %arg11[%c0_10, %c109] : memref<4x640xbf16, #tpu.memory_space<vmem>>, vector<4x384xbf16>
    %c0_11 = arith.constant 0 : index
    %c0_12 = arith.constant 0 : index
    %34 = vector.load %arg12[%c0_11, %c0_12] : memref<36x384xbf16, #tpu.memory_space<vmem>>, vector<4x384xbf16>
    tpu.vector_store %arg12[%c0_11, %c0_12], %33 {strides = array<i32>} : memref<36x384xbf16, #tpu.memory_space<vmem>>, vector<4x384xbf16>,
    %c0_13 = arith.constant 0 : index
    %c110 = arith.constant 110 : index
    %35 = vector.load %arg11[%c0_13, %c110] : memref<4x640xbf16, #tpu.memory_space<vmem>>, vector<4x384xbf16>
    %c4 = arith.constant 4 : index
    %c0_14 = arith.constant 0 : index
    %36 = vector.load %arg12[%c4, %c0_14] : memref<36x384xbf16, #tpu.memory_space<vmem>>, vector<4x384xbf16>
    tpu.vector_store %arg12[%c4, %c0_14], %35 {strides = array<i32>} : memref<36x384xbf16, #tpu.memory_space<vmem>>, vector<4x384xbf16>,
    %c0_15 = arith.constant 0 : index
    %c111 = arith.constant 111 : index
    %37 = vector.load %arg11[%c0_15, %c111] : memref<4x640xbf16, #tpu.memory_space<vmem>>, vector<4x384xbf16>
    %c8 = arith.constant 8 : index
    %c0_16 = arith.constant 0 : index
    %38 = vector.load %arg12[%c8, %c0_16] : memref<36x384xbf16, #tpu.memory_space<vmem>>, vector<4x384xbf16>
    tpu.vector_store %arg12[%c8, %c0_16], %37 {strides = array<i32>} : memref<36x384xbf16, #tpu.memory_space<vmem>>, vector<4x384xbf16>,
    %c0_17 = arith.constant 0 : index
    %c127 = arith.constant 127 : index
    %39 = vector.load %arg11[%c0_17, %c127] : memref<4x640xbf16, #tpu.memory_space<vmem>>, vector<4x384xbf16>
    %c12 = arith.constant 12 : index
    %c0_18 = arith.constant 0 : index
    %40 = vector.load %arg12[%c12, %c0_18] : memref<36x384xbf16, #tpu.memory_space<vmem>>, vector<4x384xbf16>
    tpu.vector_store %arg12[%c12, %c0_18], %39 {strides = array<i32>} : memref<36x384xbf16, #tpu.memory_space<vmem>>, vector<4x384xbf16>,
    %c0_19 = arith.constant 0 : index
    %c128_20 = arith.constant 128 : index
    %41 = vector.load %arg11[%c0_19, %c128_20] : memref<4x640xbf16, #tpu.memory_space<vmem>>, vector<4x384xbf16>
    %c16 = arith.constant 16 : index
    %c0_21 = arith.constant 0 : index
    %42 = vector.load %arg12[%c16, %c0_21] : memref<36x384xbf16, #tpu.memory_space<vmem>>, vector<4x384xbf16>
    tpu.vector_store %arg12[%c16, %c0_21], %41 {strides = array<i32>} : memref<36x384xbf16, #tpu.memory_space<vmem>>, vector<4x384xbf16>,
    %c0_22 = arith.constant 0 : index
    %c129 = arith.constant 129 : index
    %43 = vector.load %arg11[%c0_22, %c129] : memref<4x640xbf16, #tpu.memory_space<vmem>>, vector<4x384xbf16>
    %c20 = arith.constant 20 : index
    %c0_23 = arith.constant 0 : index
    %44 = vector.load %arg12[%c20, %c0_23] : memref<36x384xbf16, #tpu.memory_space<vmem>>, vector<4x384xbf16>
    tpu.vector_store %arg12[%c20, %c0_23], %43 {strides = array<i32>} : memref<36x384xbf16, #tpu.memory_space<vmem>>, vector<4x384xbf16>,
    %c0_24 = arith.constant 0 : index
    %c145 = arith.constant 145 : index
    %45 = vector.load %arg11[%c0_24, %c145] : memref<4x640xbf16, #tpu.memory_space<vmem>>, vector<4x384xbf16>
    %c24 = arith.constant 24 : index
    %c0_25 = arith.constant 0 : index
    %46 = vector.load %arg12[%c24, %c0_25] : memref<36x384xbf16, #tpu.memory_space<vmem>>, vector<4x384xbf16>
    tpu.vector_store %arg12[%c24, %c0_25], %45 {strides = array<i32>} : memref<36x384xbf16, #tpu.memory_space<vmem>>, vector<4x384xbf16>,
    %c0_26 = arith.constant 0 : index
    %c146 = arith.constant 146 : index
    %47 = vector.load %arg11[%c0_26, %c146] : memref<4x640xbf16, #tpu.memory_space<vmem>>, vector<4x384xbf16>
    %c28 = arith.constant 28 : index
    %c0_27 = arith.constant 0 : index
    %48 = vector.load %arg12[%c28, %c0_27] : memref<36x384xbf16, #tpu.memory_space<vmem>>, vector<4x384xbf16>
    tpu.vector_store %arg12[%c28, %c0_27], %47 {strides = array<i32>} : memref<36x384xbf16, #tpu.memory_space<vmem>>, vector<4x384xbf16>,
    %c0_28 = arith.constant 0 : index
    %c147 = arith.constant 147 : index
    %49 = vector.load %arg11[%c0_28, %c147] : memref<4x640xbf16, #tpu.memory_space<vmem>>, vector<4x384xbf16>
    %c32 = arith.constant 32 : index
    %c0_29 = arith.constant 0 : index
    %50 = vector.load %arg12[%c32, %c0_29] : memref<36x384xbf16, #tpu.memory_space<vmem>>, vector<4x384xbf16>
    tpu.vector_store %arg12[%c32, %c0_29], %49 {strides = array<i32>} : memref<36x384xbf16, #tpu.memory_space<vmem>>, vector<4x384xbf16>,
    %c0_30 = arith.constant 0 : index
    %c0_31 = arith.constant 0 : index
    %51 = vector.load %arg1[%c0_30, %c0_31] : memref<4x36xbf16, #tpu.memory_space<vmem>>, vector<4x36xbf16>
    %c0_32 = arith.constant 0 : index
    %c0_33 = arith.constant 0 : index
    %52 = vector.load %arg12[%c0_32, %c0_33] : memref<36x384xbf16, #tpu.memory_space<vmem>>, vector<36x384xbf16>
    %cst_34 = arith.constant dense<0.000000e+00> : vector<4x384xf32>
    %53 = tpu.matmul %51, %52, %cst_34 {dimension_numbers = #tpu.dot_dimension_numbers<[1], [0], [0], [1], [0, 0, 1, 1], [], []>} : vector<4x36xbf16>, vector<36x384xbf16>, vector<4x384xf32> -> vector<4x384xf32>
    %c0_35 = arith.constant 0 : index
    %c0_36 = arith.constant 0 : index
    %54 = vector.load %arg2[%c0_35, %c0_36] : memref<4x1xf32, #tpu.memory_space<vmem>>, vector<4x1xf32>
    %55 = vector.broadcast %54 : vector<4x1xf32> to vector<4x384xf32>
    %56 = arith.addf %53, %55 : vector<4x384xf32>
    %57 = vector.extract_strided_slice %56 {offsets = [2, 0], sizes = [2, 384], strides = [1, 1]} : vector<4x384xf32> to vector<2x384xf32>
    %cst_37 = arith.constant 0.000000e+00 : f32
    %58 = vector.broadcast %cst_37 : f32 to vector<2x384xf32>
    %59 = arith.cmpf ogt, %57, %58 : vector<2x384xf32>
    %cst_38 = arith.constant 2.000000e-01 : f32
    %60 = vector.broadcast %cst_38 : f32 to vector<2x384xf32>
    %61 = arith.mulf %60, %57 : vector<2x384xf32>
    %62 = arith.select %59, %57, %61 : vector<2x384xi1>, vector<2x384xf32>
    %63 = vector.broadcast %26 : vector<1x384xf32> to vector<2x384xf32>
    %64 = arith.mulf %62, %63 : vector<2x384xf32>
    %65 = arith.truncf %64 : vector<2x384xf32> to vector<2x384xbf16>
    %c2 = arith.constant 2 : index
    %c128_39 = arith.constant 128 : index
    %66 = vector.load %arg11[%c2, %c128_39] : memref<4x640xbf16, #tpu.memory_space<vmem>>, vector<2x384xbf16>
    tpu.vector_store %arg11[%c2, %c128_39], %65 {strides = array<i32>} : memref<4x640xbf16, #tpu.memory_space<vmem>>, vector<2x384xbf16>,
    %67 = vector.extract_strided_slice %56 {offsets = [0, 0], sizes = [2, 384], strides = [1, 1]} : vector<4x384xf32> to vector<2x384xf32>
    %c0_40 = arith.constant 0 : index
    %c0_41 = arith.constant 0 : index
    %68 = vector.load %arg7[%c0_40, %c0_41] : memref<2x1xf32, #tpu.memory_space<vmem>>, vector<2x1xf32>
    %c0_42 = arith.constant 0 : index
    %c0_43 = arith.constant 0 : index
    %69 = vector.load %arg8[%c0_42, %c0_43] : memref<2x1xf32, #tpu.memory_space<vmem>>, vector<2x1xf32>
    %70 = vector.broadcast %26 : vector<1x384xf32> to vector<2x384xf32>
    %71 = arith.mulf %67, %70 : vector<2x384xf32>
    %cst_44 = arith.constant dense<0.000000e+00> : vector<2xf32>
    %72 = vector.multi_reduction <add>, %71, %cst_44 [1] : vector<2x384xf32> to vector<2xf32>
    %73 = vector.shape_cast %72 : vector<2xf32> to vector<2x1xf32>
    %74 = arith.mulf %71, %71 : vector<2x384xf32>
    %cst_45 = arith.constant dense<0.000000e+00> : vector<2xf32>
    %75 = vector.multi_reduction <add>, %74, %cst_45 [1] : vector<2x384xf32> to vector<2xf32>
    %76 = vector.shape_cast %75 : vector<2xf32> to vector<2x1xf32>
    %cst_46 = arith.constant 3.906250e-03 : f32
    %77 = vector.broadcast %cst_46 : f32 to vector<2x1xf32>
    %78 = arith.mulf %73, %77 : vector<2x1xf32>
    %cst_47 = arith.constant 3.906250e-03 : f32
    %79 = vector.broadcast %cst_47 : f32 to vector<2x1xf32>
    %80 = arith.mulf %76, %79 : vector<2x1xf32>
    %81 = arith.mulf %78, %78 : vector<2x1xf32>
    %82 = arith.subf %80, %81 : vector<2x1xf32>
    %83 = vector.broadcast %78 : vector<2x1xf32> to vector<2x384xf32>
    %84 = arith.subf %67, %83 : vector<2x384xf32>
    %cst_48 = arith.constant 9.99999974E-6 : f32
    %85 = vector.broadcast %cst_48 : f32 to vector<2x1xf32>
    %86 = arith.addf %82, %85 : vector<2x1xf32>
    %87 = math.rsqrt %86 : vector<2x1xf32>
    %88 = vector.broadcast %87 : vector<2x1xf32> to vector<2x384xf32>
    %89 = arith.mulf %84, %88 : vector<2x384xf32>
    %90 = vector.broadcast %68 : vector<2x1xf32> to vector<2x384xf32>
    %91 = arith.mulf %90, %89 : vector<2x384xf32>
    %92 = vector.broadcast %69 : vector<2x1xf32> to vector<2x384xf32>
    %93 = arith.addf %91, %92 : vector<2x384xf32>
    %cst_49 = arith.constant 0.000000e+00 : f32
    %94 = vector.broadcast %cst_49 : f32 to vector<2x384xf32>
    %95 = arith.cmpf ogt, %93, %94 : vector<2x384xf32>
    %cst_50 = arith.constant 2.000000e-01 : f32
    %96 = vector.broadcast %cst_50 : f32 to vector<2x384xf32>
    %97 = arith.mulf %96, %93 : vector<2x384xf32>
    %98 = arith.select %95, %93, %97 : vector<2x384xi1>, vector<2x384xf32>
    %99 = vector.broadcast %26 : vector<1x384xf32> to vector<2x384xf32>
    %100 = arith.mulf %98, %99 : vector<2x384xf32>
    %101 = arith.truncf %100 : vector<2x384xf32> to vector<2x384xbf16>
    %c0_51 = arith.constant 0 : index
    %c128_52 = arith.constant 128 : index
    %102 = vector.load %arg11[%c0_51, %c128_52] : memref<4x640xbf16, #tpu.memory_space<vmem>>, vector<2x384xbf16>
    tpu.vector_store %arg11[%c0_51, %c128_52], %101 {strides = array<i32>} : memref<4x640xbf16, #tpu.memory_space<vmem>>, vector<2x384xbf16>,
    %c0_53 = arith.constant 0 : index
    %c109_54 = arith.constant 109 : index
    %103 = vector.load %arg11[%c0_53, %c109_54] : memref<4x640xbf16, #tpu.memory_space<vmem>>, vector<4x384xbf16>
    %c0_55 = arith.constant 0 : index
    %c0_56 = arith.constant 0 : index
    %104 = vector.load %arg12[%c0_55, %c0_56] : memref<36x384xbf16, #tpu.memory_space<vmem>>, vector<4x384xbf16>
    tpu.vector_store %arg12[%c0_55, %c0_56], %103 {strides = array<i32>} : memref<36x384xbf16, #tpu.memory_space<vmem>>, vector<4x384xbf16>,
    %c0_57 = arith.constant 0 : index
    %c110_58 = arith.constant 110 : index
    %105 = vector.load %arg11[%c0_57, %c110_58] : memref<4x640xbf16, #tpu.memory_space<vmem>>, vector<4x384xbf16>
    %c4_59 = arith.constant 4 : index
    %c0_60 = arith.constant 0 : index
    %106 = vector.load %arg12[%c4_59, %c0_60] : memref<36x384xbf16, #tpu.memory_space<vmem>>, vector<4x384xbf16>
    tpu.vector_store %arg12[%c4_59, %c0_60], %105 {strides = array<i32>} : memref<36x384xbf16, #tpu.memory_space<vmem>>, vector<4x384xbf16>,
    %c0_61 = arith.constant 0 : index
    %c111_62 = arith.constant 111 : index
    %107 = vector.load %arg11[%c0_61, %c111_62] : memref<4x640xbf16, #tpu.memory_space<vmem>>, vector<4x384xbf16>
    %c8_63 = arith.constant 8 : index
    %c0_64 = arith.constant 0 : index
    %108 = vector.load %arg12[%c8_63, %c0_64] : memref<36x384xbf16, #tpu.memory_space<vmem>>, vector<4x384xbf16>
    tpu.vector_store %arg12[%c8_63, %c0_64], %107 {strides = array<i32>} : memref<36x384xbf16, #tpu.memory_space<vmem>>, vector<4x384xbf16>,
    %c0_65 = arith.constant 0 : index
    %c127_66 = arith.constant 127 : index
    %109 = vector.load %arg11[%c0_65, %c127_66] : memref<4x640xbf16, #tpu.memory_space<vmem>>, vector<4x384xbf16>
    %c12_67 = arith.constant 12 : index
    %c0_68 = arith.constant 0 : index
    %110 = vector.load %arg12[%c12_67, %c0_68] : memref<36x384xbf16, #tpu.memory_space<vmem>>, vector<4x384xbf16>
    tpu.vector_store %arg12[%c12_67, %c0_68], %109 {strides = array<i32>} : memref<36x384xbf16, #tpu.memory_space<vmem>>, vector<4x384xbf16>,
    %c0_69 = arith.constant 0 : index
    %c128_70 = arith.constant 128 : index
    %111 = vector.load %arg11[%c0_69, %c128_70] : memref<4x640xbf16, #tpu.memory_space<vmem>>, vector<4x384xbf16>
    %c16_71 = arith.constant 16 : index
    %c0_72 = arith.constant 0 : index
    %112 = vector.load %arg12[%c16_71, %c0_72] : memref<36x384xbf16, #tpu.memory_space<vmem>>, vector<4x384xbf16>
    tpu.vector_store %arg12[%c16_71, %c0_72], %111 {strides = array<i32>} : memref<36x384xbf16, #tpu.memory_space<vmem>>, vector<4x384xbf16>,
    %c0_73 = arith.constant 0 : index
    %c129_74 = arith.constant 129 : index
    %113 = vector.load %arg11[%c0_73, %c129_74] : memref<4x640xbf16, #tpu.memory_space<vmem>>, vector<4x384xbf16>
    %c20_75 = arith.constant 20 : index
    %c0_76 = arith.constant 0 : index
    %114 = vector.load %arg12[%c20_75, %c0_76] : memref<36x384xbf16, #tpu.memory_space<vmem>>, vector<4x384xbf16>
    tpu.vector_store %arg12[%c20_75, %c0_76], %113 {strides = array<i32>} : memref<36x384xbf16, #tpu.memory_space<vmem>>, vector<4x384xbf16>,
    %c0_77 = arith.constant 0 : index
    %c145_78 = arith.constant 145 : index
    %115 = vector.load %arg11[%c0_77, %c145_78] : memref<4x640xbf16, #tpu.memory_space<vmem>>, vector<4x384xbf16>
    %c24_79 = arith.constant 24 : index
    %c0_80 = arith.constant 0 : index
    %116 = vector.load %arg12[%c24_79, %c0_80] : memref<36x384xbf16, #tpu.memory_space<vmem>>, vector<4x384xbf16>
    tpu.vector_store %arg12[%c24_79, %c0_80], %115 {strides = array<i32>} : memref<36x384xbf16, #tpu.memory_space<vmem>>, vector<4x384xbf16>,
    %c0_81 = arith.constant 0 : index
    %c146_82 = arith.constant 146 : index
    %117 = vector.load %arg11[%c0_81, %c146_82] : memref<4x640xbf16, #tpu.memory_space<vmem>>, vector<4x384xbf16>
    %c28_83 = arith.constant 28 : index
    %c0_84 = arith.constant 0 : index
    %118 = vector.load %arg12[%c28_83, %c0_84] : memref<36x384xbf16, #tpu.memory_space<vmem>>, vector<4x384xbf16>
    tpu.vector_store %arg12[%c28_83, %c0_84], %117 {strides = array<i32>} : memref<36x384xbf16, #tpu.memory_space<vmem>>, vector<4x384xbf16>,
    %c0_85 = arith.constant 0 : index
    %c147_86 = arith.constant 147 : index
    %119 = vector.load %arg11[%c0_85, %c147_86] : memref<4x640xbf16, #tpu.memory_space<vmem>>, vector<4x384xbf16>
    %c32_87 = arith.constant 32 : index
    %c0_88 = arith.constant 0 : index
    %120 = vector.load %arg12[%c32_87, %c0_88] : memref<36x384xbf16, #tpu.memory_space<vmem>>, vector<4x384xbf16>
    tpu.vector_store %arg12[%c32_87, %c0_88], %119 {strides = array<i32>} : memref<36x384xbf16, #tpu.memory_space<vmem>>, vector<4x384xbf16>,
    %c0_89 = arith.constant 0 : index
    %c0_90 = arith.constant 0 : index
    %121 = vector.load %arg3[%c0_89, %c0_90] : memref<4x36xbf16, #tpu.memory_space<vmem>>, vector<4x36xbf16>
    %c0_91 = arith.constant 0 : index
    %c0_92 = arith.constant 0 : index
    %122 = vector.load %arg12[%c0_91, %c0_92] : memref<36x384xbf16, #tpu.memory_space<vmem>>, vector<36x384xbf16>
    %cst_93 = arith.constant dense<0.000000e+00> : vector<4x384xf32>
    %123 = tpu.matmul %121, %122, %cst_93 {dimension_numbers = #tpu.dot_dimension_numbers<[1], [0], [0], [1], [0, 0, 1, 1], [], []>} : vector<4x36xbf16>, vector<36x384xbf16>, vector<4x384xf32> -> vector<4x384xf32>
    %c0_94 = arith.constant 0 : index
    %c0_95 = arith.constant 0 : index
    %124 = vector.load %arg4[%c0_94, %c0_95] : memref<4x1xf32, #tpu.memory_space<vmem>>, vector<4x1xf32>
    %125 = vector.broadcast %124 : vector<4x1xf32> to vector<4x384xf32>
    %126 = arith.addf %123, %125 : vector<4x384xf32>
    %cst_96 = arith.constant 0.000000e+00 : f32
    %127 = vector.broadcast %cst_96 : f32 to vector<4x384xf32>
    %128 = arith.cmpf ogt, %126, %127 : vector<4x384xf32>
    %cst_97 = arith.constant 2.000000e-01 : f32
    %129 = vector.broadcast %cst_97 : f32 to vector<4x384xf32>
    %130 = arith.mulf %129, %126 : vector<4x384xf32>
    %131 = arith.select %128, %126, %130 : vector<4x384xi1>, vector<4x384xf32>
    %c0_98 = arith.constant 0 : index
    %c0_99 = arith.constant 0 : index
    %132 = vector.load %arg5[%c0_98, %c0_99] : memref<4x4xbf16, #tpu.memory_space<vmem>>, vector<4x4xbf16>
    %c0_100 = arith.constant 0 : index
    %c0_101 = arith.constant 0 : index
    %133 = vector.load %arg9[%c0_100, %c0_101] : memref<4x384xbf16, #tpu.memory_space<vmem>>, vector<4x384xbf16>
    %cst_102 = arith.constant dense<0.000000e+00> : vector<4x384xf32>
    %134 = tpu.matmul %132, %133, %cst_102 {dimension_numbers = #tpu.dot_dimension_numbers<[1], [0], [0], [1], [0, 0, 1, 1], [], []>} : vector<4x4xbf16>, vector<4x384xbf16>, vector<4x384xf32> -> vector<4x384xf32>
    %c0_103 = arith.constant 0 : index
    %c0_104 = arith.constant 0 : index
    %135 = vector.load %arg6[%c0_103, %c0_104] : memref<4x1xf32, #tpu.memory_space<vmem>>, vector<4x1xf32>
    %136 = vector.broadcast %135 : vector<4x1xf32> to vector<4x384xf32>
    %137 = arith.addf %134, %136 : vector<4x384xf32>
    %138 = arith.addf %131, %137 : vector<4x384xf32>
    %c0_105 = arith.constant 0 : index
    %c0_106 = arith.constant 0 : index
    %139 = vector.load %arg10[%c0_105, %c0_106] : memref<4x384xf32, #tpu.memory_space<vmem>>, vector<4x384xf32>
    tpu.vector_store %arg10[%c0_105, %c0_106], %138 {strides = array<i32>} : memref<4x384xf32, #tpu.memory_space<vmem>>, vector<4x384xf32>,
    return
  }
  func.func @transform_0(%arg0: i32) -> (i32, i32) {
    %c0_i32 = arith.constant 0 : i32
    %c0_i32_0 = arith.constant 0 : i32
    %c0_i32_1 = arith.constant 0 : i32
    return %c0_i32, %c0_i32_0 : i32, i32
  }
  func.func @transform_1(%arg0: i32) -> (i32, i32) {
    %c0_i32 = arith.constant 0 : i32
    %c0_i32_0 = arith.constant 0 : i32
    %c0_i32_1 = arith.constant 0 : i32
    return %c0_i32, %c0_i32_0 : i32, i32
  }
  func.func @transform_2(%arg0: i32) -> (i32, i32) {
    %c0_i32 = arith.constant 0 : i32
    %c0_i32_0 = arith.constant 0 : i32
    %c0_i32_1 = arith.constant 0 : i32
    return %c0_i32, %c0_i32_0 : i32, i32
  }
  func.func @transform_3(%arg0: i32) -> (i32, i32) {
    %c0_i32 = arith.constant 0 : i32
    %c0_i32_0 = arith.constant 0 : i32
    %c0_i32_1 = arith.constant 0 : i32
    return %c0_i32, %c0_i32_0 : i32, i32
  }
  func.func @transform_4(%arg0: i32) -> (i32, i32) {
    %c0_i32 = arith.constant 0 : i32
    %c0_i32_0 = arith.constant 0 : i32
    %c0_i32_1 = arith.constant 0 : i32
    return %c0_i32, %c0_i32_0 : i32, i32
  }
  func.func @transform_5(%arg0: i32) -> (i32, i32) {
    %c0_i32 = arith.constant 0 : i32
    %c0_i32_0 = arith.constant 0 : i32
    %c0_i32_1 = arith.constant 0 : i32
    return %c0_i32, %c0_i32_0 : i32, i32
  }
  func.func @transform_6(%arg0: i32) -> (i32, i32) {
    %c0_i32 = arith.constant 0 : i32
    %c0_i32_0 = arith.constant 0 : i32
    %c0_i32_1 = arith.constant 0 : i32
    return %c0_i32, %c0_i32_0 : i32, i32
  }
  func.func @transform_7(%arg0: i32) -> (i32, i32) {
    %c0_i32 = arith.constant 0 : i32
    %c0_i32_0 = arith.constant 0 : i32
    %c0_i32_1 = arith.constant 0 : i32
    return %c0_i32, %c0_i32_0 : i32, i32
  }
  func.func @transform_8(%arg0: i32) -> (i32, i32) {
    %c0_i32 = arith.constant 0 : i32
    %c0_i32_0 = arith.constant 0 : i32
    return %c0_i32, %arg0 : i32, i32
  }
  func.func @transform_9(%arg0: i32) -> (i32, i32) {
    %c0_i32 = arith.constant 0 : i32
    %c0_i32_0 = arith.constant 0 : i32
    return %c0_i32, %arg0 : i32, i32
  }
}

</mosaic_0001>

<llo_original>
// kernel: tpu_custom_call.1
$region0: #{tpu_custom_call.1}
  #allocation0 [shape = 'u32[]', space=smem, size = 0x4, offset = 0x4, fixed_abs, tag = 'smem constant byte address 0x4 - core index']
  #allocation1 [shape = 'u32[144,128]{1,0:T(1,128)}', space=vmem, size = 0x12000, scoped, tag = 'internal scratch']
  #allocation2 [shape = 'bf16[4,640]{1,0:T(4,128)(2,1)}', space=vmem, size = 0x1400, scoped, tag = 'scratch operand']
  #allocation3 [shape = 'bf16[36,384]{1,0:T(8,128)(2,1)}', space=vmem, size = 0x7800, scoped, tag = 'scratch operand']
  %s0 = inlined_call_operand.hbm [shape: bf16[4,36], index: 0, kind: input, shape index: {}]
  %s1 = inlined_call_operand.hbm [shape: f32[4,1], index: 1, kind: input, shape index: {}]
  %s2 = inlined_call_operand.hbm [shape: bf16[4,36], index: 2, kind: input, shape index: {}]
  %s3 = inlined_call_operand.hbm [shape: f32[4,1], index: 3, kind: input, shape index: {}]
  %s4 = inlined_call_operand.hbm [shape: bf16[4,4], index: 4, kind: input, shape index: {}]
  %s5 = inlined_call_operand.hbm [shape: f32[4,1], index: 5, kind: input, shape index: {}]
  %s6 = inlined_call_operand.hbm [shape: f32[2,1], index: 6, kind: input, shape index: {}]
  %s7 = inlined_call_operand.hbm [shape: f32[2,1], index: 7, kind: input, shape index: {}]
  %s8 = inlined_call_operand.hbm [shape: bf16[4,768], index: 8, kind: input, shape index: {}]
  %s9 = inlined_call_operand.hbm [shape: f32[4,768], index: 9, kind: output, shape index: {}]
  %s10 = sld [smem:[#allocation0]]
  $region105: #{tpu_custom_call.1} parent=0
    _
  %s12 = ssub.s32 1, %s10
  %s13 = scalar_select 0, %s12, %s10
  $region1: #{tpu_custom_call.1} parent=0
    #allocation4 [shape = 'u8[1024]{0}', space=vmem, size = 0x400, scoped, tag = 'input window, operand 0, single buffered']
    #allocation5 [shape = 's32[2]{0}', space=sflag, size = 0x8, scoped, tag = 'scoped memory for tpu_custom_call.1']
    #allocation6 [shape = 's32[2]{0}', space=sflag, size = 0x8, scoped, tag = 'scoped memory for tpu_custom_call.1']
    #allocation7 [shape = 'u8[2048]{0}', space=vmem, size = 0x800, scoped, tag = 'input window, operand 1, single buffered']
    #allocation8 [shape = 's32[1]{0}', space=sflag, size = 0x4, scoped, tag = 'scoped memory for tpu_custom_call.1']
    #allocation9 [shape = 'u8[1024]{0}', space=vmem, size = 0x400, scoped, tag = 'input window, operand 2, single buffered']
    #allocation10 [shape = 'u8[2048]{0}', space=vmem, size = 0x800, scoped, tag = 'input window, operand 3, single buffered']
    #allocation11 [shape = 's32[1]{0}', space=sflag, size = 0x4, scoped, tag = 'scoped memory for tpu_custom_call.1']
    #allocation12 [shape = 'u8[1024]{0}', space=vmem, size = 0x400, scoped, tag = 'input window, operand 4, single buffered']
    #allocation13 [shape = 'u8[2048]{0}', space=vmem, size = 0x800, scoped, tag = 'input window, operand 5, single buffered']
    #allocation14 [shape = 's32[1]{0}', space=sflag, size = 0x4, scoped, tag = 'scoped memory for tpu_custom_call.1']
    #allocation15 [shape = 'u8[1024]{0}', space=vmem, size = 0x400, scoped, tag = 'input window, operand 6, single buffered']
    #allocation16 [shape = 'u8[1024]{0}', space=vmem, size = 0x400, scoped, tag = 'input window, operand 7, single buffered']
    #allocation17 [shape = 's32[1]{0}', space=sflag, size = 0x4, scoped, tag = 'scoped memory for tpu_custom_call.1']
    #allocation18 [shape = 'u8[6144]{0}', space=vmem, size = 0x1800, scoped, tag = 'input window, operand 8']
    #allocation19 [shape = 'u8[12288]{0}', space=vmem, size = 0x3000, scoped, tag = 'output window, operand 0']
    %14 = vsyncpa [#allocation5], 0
    %15 = vsyncpa [#allocation8], 0
    %16 = vsyncpa [#allocation11], 0
    %17 = vsyncpa [#allocation14], 0
    %18 = vsyncpa [#allocation17], 0
    %19 = vsyncpa [#allocation6], 0
    %s20 = scalar_lea.sflag [#allocation6], 1
    %21 = vsyncpa %s20, 0
    loop: start=0, step=1, limit=4
    $region2: #{tpu_custom_call.1} parent=1 // loop_pre_header
      _
    $region3: #{tpu_custom_call.1} parent=1 // loop_header
      %s23 = sphi 0, %s27
      %p24 = scmp.ge.s32.totalorder %s23, 4
      %s31 = sphi 0, %s31
      %s33 = sphi 0, %s31
      %s34 = sphi 0, %s33
      %s48 = sphi 0, %s34
      %s52 = sphi 0, %s52
      %s54 = sphi 0, %s52
      %s55 = sphi 0, %s54
      %s69 = sphi 0, %s55
      %s73 = sphi 0, %s73
      %s75 = sphi 0, %s73
      %s76 = sphi 0, %s75
      %s90 = sphi 0, %s76
      %s94 = sphi 0, %s94
      %s96 = sphi 0, %s94
      %s97 = sphi 0, %s96
      %s111 = sphi 0, %s97
      %s115 = sphi 0, %s115
      %s117 = sphi 0, %s115
      %s118 = sphi 0, %s117
      %s132 = sphi 0, %s118
      %s136 = sphi 0, %s136
      %s138 = sphi 0, %s136
      %s139 = sphi 0, %s138
      %s153 = sphi 0, %s139
      %s157 = sphi 0, %s157
      %s159 = sphi 0, %s157
      %s160 = sphi 0, %s159
      %s174 = sphi 0, %s160
      %s178 = sphi 0, %s178
      %s180 = sphi 0, %s178
      %s181 = sphi 0, %s180
      %s195 = sphi 0, %s181
      %s201 = sphi 0, %s203
      %s204 = sphi 0, %s201
      %s205 = sphi 0, %s204
      %s221 = sphi 0, %s205
      %s227 = sphi 0, %s229
      %s230 = sphi 0, %s227
      %s231 = sphi 0, %s230
      %s247 = sphi 0, %s231
    $region4: #{tpu_custom_call.1} parent=1 // loop_header_branch
      %26 = sbr.rel (%p24) target = $region8
    $region5: #{tpu_custom_call.1} parent=1 // loop_body
      %s28 = ssub.s32 %s23, 1
      %s29 = ssub.s32 %s23, 2
      %s30 = sadd.s32 %s23, 1
      %s32 = sadd.s32 %s31, 1
      %p35 = scmp.eq.s32.totalorder %s23, 1
      %p36 = scmp.ne.s32.totalorder %s31, %s33
      %p37 = scmp.eq.s32.totalorder %s23, 0
      %p38 = por %p36, %p37
      %p39 = scmp.ne.s32.totalorder %s31, %s33
      %p40 = scmp.eq.s32.totalorder %s28, 1
      %p41 = por %p39, %p40
      %p42 = scmp.ne.s32.totalorder %s33, %s34
      %p43 = scmp.eq.s32.totalorder %s28, 0
      %p44 = por %p42, %p43
      %p45 = scmp.ne.s32.totalorder %s33, %s34
      %p46 = scmp.eq.s32.totalorder %s29, 1
      %p47 = por %p45, %p46
      %p49 = scmp.ne.s32.totalorder %s34, %s48
      %p50 = scmp.eq.s32.totalorder %s29, 0
      %p51 = por %p49, %p50
      %s53 = sadd.s32 %s52, 1
      %p56 = scmp.eq.s32.totalorder %s23, 1
      %p57 = scmp.ne.s32.totalorder %s52, %s54
      %p58 = scmp.eq.s32.totalorder %s23, 0
      %p59 = por %p57, %p58
      %p60 = scmp.ne.s32.totalorder %s52, %s54
      %p61 = scmp.eq.s32.totalorder %s28, 1
      %p62 = por %p60, %p61
      %p63 = scmp.ne.s32.totalorder %s54, %s55
      %p64 = scmp.eq.s32.totalorder %s28, 0
      %p65 = por %p63, %p64
      %p66 = scmp.ne.s32.totalorder %s54, %s55
      %p67 = scmp.eq.s32.totalorder %s29, 1
      %p68 = por %p66, %p67
      %p70 = scmp.ne.s32.totalorder %s55, %s69
      %p71 = scmp.eq.s32.totalorder %s29, 0
      %p72 = por %p70, %p71
      %s74 = sadd.s32 %s73, 1
      %p77 = scmp.eq.s32.totalorder %s23, 1
      %p78 = scmp.ne.s32.totalorder %s73, %s75
      %p79 = scmp.eq.s32.totalorder %s23, 0
      %p80 = por %p78, %p79
      %p81 = scmp.ne.s32.totalorder %s73, %s75
      %p82 = scmp.eq.s32.totalorder %s28, 1
      %p83 = por %p81, %p82
      %p84 = scmp.ne.s32.totalorder %s75, %s76
      %p85 = scmp.eq.s32.totalorder %s28, 0
      %p86 = por %p84, %p85
      %p87 = scmp.ne.s32.totalorder %s75, %s76
      %p88 = scmp.eq.s32.totalorder %s29, 1
      %p89 = por %p87, %p88
      %p91 = scmp.ne.s32.totalorder %s76, %s90
      %p92 = scmp.eq.s32.totalorder %s29, 0
      %p93 = por %p91, %p92
      %s95 = sadd.s32 %s94, 1
      %p98 = scmp.eq.s32.totalorder %s23, 1
      %p99 = scmp.ne.s32.totalorder %s94, %s96
      %p100 = scmp.eq.s32.totalorder %s23, 0
      %p101 = por %p99, %p100
      %p102 = scmp.ne.s32.totalorder %s94, %s96
      %p103 = scmp.eq.s32.totalorder %s28, 1
      %p104 = por %p102, %p103
      %p105 = scmp.ne.s32.totalorder %s96, %s97
      %p106 = scmp.eq.s32.totalorder %s28, 0
      %p107 = por %p105, %p106
      %p108 = scmp.ne.s32.totalorder %s96, %s97
      %p109 = scmp.eq.s32.totalorder %s29, 1
      %p110 = por %p108, %p109
      %p112 = scmp.ne.s32.totalorder %s97, %s111
      %p113 = scmp.eq.s32.totalorder %s29, 0
      %p114 = por %p112, %p113
      %s116 = sadd.s32 %s115, 1
      %p119 = scmp.eq.s32.totalorder %s23, 1
      %p120 = scmp.ne.s32.totalorder %s115, %s117
      %p121 = scmp.eq.s32.totalorder %s23, 0
      %p122 = por %p120, %p121
      %p123 = scmp.ne.s32.totalorder %s115, %s117
      %p124 = scmp.eq.s32.totalorder %s28, 1
      %p125 = por %p123, %p124
      %p126 = scmp.ne.s32.totalorder %s117, %s118
      %p127 = scmp.eq.s32.totalorder %s28, 0
      %p128 = por %p126, %p127
      %p129 = scmp.ne.s32.totalorder %s117, %s118
      %p130 = scmp.eq.s32.totalorder %s29, 1
      %p131 = por %p129, %p130
      %p133 = scmp.ne.s32.totalorder %s118, %s132
      %p134 = scmp.eq.s32.totalorder %s29, 0
      %p135 = por %p133, %p134
      %s137 = sadd.s32 %s136, 1
      %p140 = scmp.eq.s32.totalorder %s23, 1
      %p141 = scmp.ne.s32.totalorder %s136, %s138
      %p142 = scmp.eq.s32.totalorder %s23, 0
      %p143 = por %p141, %p142
      %p144 = scmp.ne.s32.totalorder %s136, %s138
      %p145 = scmp.eq.s32.totalorder %s28, 1
      %p146 = por %p144, %p145
      %p147 = scmp.ne.s32.totalorder %s138, %s139
      %p148 = scmp.eq.s32.totalorder %s28, 0
      %p149 = por %p147, %p148
      %p150 = scmp.ne.s32.totalorder %s138, %s139
      %p151 = scmp.eq.s32.totalorder %s29, 1
      %p152 = por %p150, %p151
      %p154 = scmp.ne.s32.totalorder %s139, %s153
      %p155 = scmp.eq.s32.totalorder %s29, 0
      %p156 = por %p154, %p155
      %s158 = sadd.s32 %s157, 1
      %p161 = scmp.eq.s32.totalorder %s23, 1
      %p162 = scmp.ne.s32.totalorder %s157, %s159
      %p163 = scmp.eq.s32.totalorder %s23, 0
      %p164 = por %p162, %p163
      %p165 = scmp.ne.s32.totalorder %s157, %s159
      %p166 = scmp.eq.s32.totalorder %s28, 1
      %p167 = por %p165, %p166
      %p168 = scmp.ne.s32.totalorder %s159, %s160
      %p169 = scmp.eq.s32.totalorder %s28, 0
      %p170 = por %p168, %p169
      %p171 = scmp.ne.s32.totalorder %s159, %s160
      %p172 = scmp.eq.s32.totalorder %s29, 1
      %p173 = por %p171, %p172
      %p175 = scmp.ne.s32.totalorder %s160, %s174
      %p176 = scmp.eq.s32.totalorder %s29, 0
      %p177 = por %p175, %p176
      %s179 = sadd.s32 %s178, 1
      %p182 = scmp.eq.s32.totalorder %s23, 1
      %p183 = scmp.ne.s32.totalorder %s178, %s180
      %p184 = scmp.eq.s32.totalorder %s23, 0
      %p185 = por %p183, %p184
      %p186 = scmp.ne.s32.totalorder %s178, %s180
      %p187 = scmp.eq.s32.totalorder %s28, 1
      %p188 = por %p186, %p187
      %p189 = scmp.ne.s32.totalorder %s180, %s181
      %p190 = scmp.eq.s32.totalorder %s28, 0
      %p191 = por %p189, %p190
      %p192 = scmp.ne.s32.totalorder %s180, %s181
      %p193 = scmp.eq.s32.totalorder %s29, 1
      %p194 = por %p192, %p193
      %p196 = scmp.ne.s32.totalorder %s181, %s195
      %p197 = scmp.eq.s32.totalorder %s29, 0
      %p198 = por %p196, %p197
      %s199 = ssub.s32 %s23, %s30
      %p200 = scmp.eq.s32.totalorder %s199, 0
      %s202 = sadd.s32 %s201, 1
      %s203 = scalar_select %p200, %s201, %s202
      %p206 = pneg %p200
      %p207 = scmp.eq.s32.totalorder %s23, 1
      %p208 = por %p206, %p207
      %p209 = scmp.ne.s32.totalorder %s201, %s204
      %p210 = scmp.eq.s32.totalorder %s23, 0
      %p211 = por %p209, %p210
      %p212 = scmp.ne.s32.totalorder %s201, %s204
      %p213 = scmp.eq.s32.totalorder %s28, 1
      %p214 = por %p212, %p213
      %p215 = scmp.ne.s32.totalorder %s204, %s205
      %p216 = scmp.eq.s32.totalorder %s28, 0
      %p217 = por %p215, %p216
      %p218 = scmp.ne.s32.totalorder %s204, %s205
      %p219 = scmp.eq.s32.totalorder %s29, 1
      %p220 = por %p218, %p219
      %p222 = scmp.ne.s32.totalorder %s205, %s221
      %p223 = scmp.eq.s32.totalorder %s29, 0
      %p224 = por %p222, %p223
      %s225 = ssub.s32 %s23, %s30
      %p226 = scmp.eq.s32.totalorder %s225, 0
      %s228 = sadd.s32 %s227, 1
      %s229 = scalar_select %p226, %s227, %s228
      %p232 = pneg %p226
      %p233 = scmp.eq.s32.totalorder %s23, 1
      %p234 = por %p232, %p233
      %p235 = scmp.ne.s32.totalorder %s227, %s230
      %p236 = scmp.eq.s32.totalorder %s23, 0
      %p237 = por %p235, %p236
      %p238 = scmp.ne.s32.totalorder %s227, %s230
      %p239 = scmp.eq.s32.totalorder %s28, 1
      %p240 = por %p238, %p239
      %p241 = scmp.ne.s32.totalorder %s230, %s231
      %p242 = scmp.eq.s32.totalorder %s28, 0
      %p243 = por %p241, %p242
      %p244 = scmp.ne.s32.totalorder %s230, %s231
      %p245 = scmp.eq.s32.totalorder %s29, 1
      %p246 = por %p244, %p245
      %p248 = scmp.ne.s32.totalorder %s231, %s247
      %p249 = scmp.eq.s32.totalorder %s29, 0
      %p250 = por %p248, %p249
      %p251 = scmp.le.s32.totalorder 1, %s23
      %p252 = scmp.lt.s32.totalorder %s23, 3
      %p253 = pnand %p251, %p252
      %p254 = pneg %p253
      // Predicated region
      $region9: #{tpu_custom_call.1} parent=5 // pred_check
        _
      $region10: #{tpu_custom_call.1} parent=5 // pred_check_branch
        %256 = sbr.rel (%p253) target = $region12
      $region11: #{tpu_custom_call.1} parent=5 // pred_region
        %s257 = ssub.s32 %s23, 1
        // Predicated region
        $region13: #{tpu_custom_call.1} parent=11 // pred_check
          %p258 = pneg %p44
        $region14: #{tpu_custom_call.1} parent=11 // pred_check_branch
          %260 = sbr.rel (%p258) target = $region16
        $region15: #{tpu_custom_call.1} parent=11 // pred_region
          %s262 = ssub.s32 32, 32
          %263 = vsyncadd [#allocation5], %s262
          %s265 = sshll.u32 [#allocation4], 4
          %s266 = int_to_ptr.vmem [resolvable:$true] %s265
          %268 = dma.hbm_to_vmem [thread:$0]  %s0, 32, %s266, [#allocation5]
        $region16: #{tpu_custom_call.1} parent=11 // pred_fallthru
          _
        // Predicated region
        $region17: #{tpu_custom_call.1} parent=11 // pred_check
          %p269 = pneg %p65
        $region18: #{tpu_custom_call.1} parent=11 // pred_check_branch
          %271 = sbr.rel (%p269) target = $region20
        $region19: #{tpu_custom_call.1} parent=11 // pred_region
          %s273 = ssub.s32 64, 64
          %274 = vsyncadd [#allocation8], %s273
          %s276 = sshll.u32 [#allocation7], 4
          %s277 = int_to_ptr.vmem [resolvable:$true] %s276
          %279 = dma.hbm_to_vmem [thread:$0]  %s1, 64, %s277, [#allocation8]
        $region20: #{tpu_custom_call.1} parent=11 // pred_fallthru
          _
        // Predicated region
        $region21: #{tpu_custom_call.1} parent=11 // pred_check
          %p280 = pneg %p86
        $region22: #{tpu_custom_call.1} parent=11 // pred_check_branch
          %282 = sbr.rel (%p280) target = $region24
        $region23: #{tpu_custom_call.1} parent=11 // pred_region
          %s284 = ssub.s32 32, 32
          %285 = vsyncadd [#allocation8], %s284
          %s287 = sshll.u32 [#allocation9], 4
          %s288 = int_to_ptr.vmem [resolvable:$true] %s287
          %290 = dma.hbm_to_vmem [thread:$0]  %s2, 32, %s288, [#allocation8]
        $region24: #{tpu_custom_call.1} parent=11 // pred_fallthru
          _
        // Predicated region
        $region25: #{tpu_custom_call.1} parent=11 // pred_check
          %p291 = pneg %p107
        $region26: #{tpu_custom_call.1} parent=11 // pred_check_branch
          %293 = sbr.rel (%p291) target = $region28
        $region27: #{tpu_custom_call.1} parent=11 // pred_region
          %s295 = ssub.s32 64, 64
          %296 = vsyncadd [#allocation11], %s295
          %s298 = sshll.u32 [#allocation10], 4
          %s299 = int_to_ptr.vmem [resolvable:$true] %s298
          %301 = dma.hbm_to_vmem [thread:$0]  %s3, 64, %s299, [#allocation11]
        $region28: #{tpu_custom_call.1} parent=11 // pred_fallthru
          _
        // Predicated region
        $region29: #{tpu_custom_call.1} parent=11 // pred_check
          %p302 = pneg %p128
        $region30: #{tpu_custom_call.1} parent=11 // pred_check_branch
          %304 = sbr.rel (%p302) target = $region32
        $region31: #{tpu_custom_call.1} parent=11 // pred_region
          %s306 = ssub.s32 32, 32
          %307 = vsyncadd [#allocation11], %s306
          %s309 = sshll.u32 [#allocation12], 4
          %s310 = int_to_ptr.vmem [resolvable:$true] %s309
          %312 = dma.hbm_to_vmem [thread:$0]  %s4, 32, %s310, [#allocation11]
        $region32: #{tpu_custom_call.1} parent=11 // pred_fallthru
          _
        // Predicated region
        $region33: #{tpu_custom_call.1} parent=11 // pred_check
          %p313 = pneg %p149
        $region34: #{tpu_custom_call.1} parent=11 // pred_check_branch
          %315 = sbr.rel (%p313) target = $region36
        $region35: #{tpu_custom_call.1} parent=11 // pred_region
          %s317 = ssub.s32 64, 64
          %318 = vsyncadd [#allocation14], %s317
          %s320 = sshll.u32 [#allocation13], 4
          %s321 = int_to_ptr.vmem [resolvable:$true] %s320
          %323 = dma.hbm_to_vmem [thread:$0]  %s5, 64, %s321, [#allocation14]
        $region36: #{tpu_custom_call.1} parent=11 // pred_fallthru
          _
        // Predicated region
        $region37: #{tpu_custom_call.1} parent=11 // pred_check
          %p324 = pneg %p170
        $region38: #{tpu_custom_call.1} parent=11 // pred_check_branch
          %326 = sbr.rel (%p324) target = $region40
        $region39: #{tpu_custom_call.1} parent=11 // pred_region
          %s328 = ssub.s32 32, 32
          %329 = vsyncadd [#allocation14], %s328
          %s331 = sshll.u32 [#allocation15], 4
          %s332 = int_to_ptr.vmem [resolvable:$true] %s331
          %334 = dma.hbm_to_vmem [thread:$0]  %s6, 32, %s332, [#allocation14]
        $region40: #{tpu_custom_call.1} parent=11 // pred_fallthru
          _
        // Predicated region
        $region41: #{tpu_custom_call.1} parent=11 // pred_check
          %p335 = pneg %p191
        $region42: #{tpu_custom_call.1} parent=11 // pred_check_branch
          %337 = sbr.rel (%p335) target = $region44
        $region43: #{tpu_custom_call.1} parent=11 // pred_region
          %s339 = ssub.s32 32, 32
          %340 = vsyncadd [#allocation17], %s339
          %s342 = sshll.u32 [#allocation16], 4
          %s343 = int_to_ptr.vmem [resolvable:$true] %s342
          %345 = dma.hbm_to_vmem [thread:$0]  %s7, 32, %s343, [#allocation17]
        $region44: #{tpu_custom_call.1} parent=11 // pred_fallthru
          _
      $region12: #{tpu_custom_call.1} parent=5 // pred_fallthru
        _
      %p346 = scmp.lt.s32.totalorder %s23, 2
      // Predicated region
      $region45: #{tpu_custom_call.1} parent=5 // pred_check
        %p347 = pneg %p346
      $region46: #{tpu_custom_call.1} parent=5 // pred_check_branch
        %349 = sbr.rel (%p347) target = $region48
      $region47: #{tpu_custom_call.1} parent=5 // pred_region
        // Predicated region
        $region49: #{tpu_custom_call.1} parent=47 // pred_check
          %p350 = pneg %p211
        $region50: #{tpu_custom_call.1} parent=47 // pred_check_branch
          %352 = sbr.rel (%p350) target = $region52
        $region51: #{tpu_custom_call.1} parent=47 // pred_region
          %s353 = sand.u32 %s23, 1
          %s354 = scalar_lea.sflag [#allocation5], %s353
          %s355 = sand.u32 %s201, 1
          %s356 = smul.addr %s355, 6
          %s357 = scalar_lea.vmem [#allocation18], %s356
          %s358 = smul.u32 3, %s23
          %s360 = ssub.s32 96, 96
          %361 = vsyncadd %s354, %s360
          %s362 = smul.addr %s358, 32
          %s363 = scalar_lea.hbm %s8, %s362
          %s365 = sshll.u32 %s357, 4
          %s366 = int_to_ptr.vmem [resolvable:$true] %s365
          %368 = dma.hbm_to_vmem [thread:$0]  %s363, 96, %s366, %s354
        $region52: #{tpu_custom_call.1} parent=47 // pred_fallthru
          _
      $region48: #{tpu_custom_call.1} parent=5 // pred_fallthru
        _
      %p369 = scmp.le.s32.totalorder 1, %s23
      %p370 = scmp.lt.s32.totalorder %s23, 3
      %p371 = pnand %p369, %p370
      %p372 = pneg %p371
      // Predicated region
      $region53: #{tpu_custom_call.1} parent=5 // pred_check
        _
      $region54: #{tpu_custom_call.1} parent=5 // pred_check_branch
        %374 = sbr.rel (%p371) target = $region56
      $region55: #{tpu_custom_call.1} parent=5 // pred_region
        %s375 = ssub.s32 %s23, 1
        // Predicated region
        $region57: #{tpu_custom_call.1} parent=55 // pred_check
          %p376 = pneg %p44
        $region58: #{tpu_custom_call.1} parent=55 // pred_check_branch
          %378 = sbr.rel (%p376) target = $region60
        $region59: #{tpu_custom_call.1} parent=55 // pred_region
          %379 = dma.done [#allocation5], 32
        $region60: #{tpu_custom_call.1} parent=55 // pred_fallthru
          _
        // Predicated region
        $region61: #{tpu_custom_call.1} parent=55 // pred_check
          %p380 = pneg %p65
        $region62: #{tpu_custom_call.1} parent=55 // pred_check_branch
          %382 = sbr.rel (%p380) target = $region64
        $region63: #{tpu_custom_call.1} parent=55 // pred_region
          %383 = dma.done [#allocation8], 64
        $region64: #{tpu_custom_call.1} parent=55 // pred_fallthru
          _
        // Predicated region
        $region65: #{tpu_custom_call.1} parent=55 // pred_check
          %p384 = pneg %p86
        $region66: #{tpu_custom_call.1} parent=55 // pred_check_branch
          %386 = sbr.rel (%p384) target = $region68
        $region67: #{tpu_custom_call.1} parent=55 // pred_region
          %387 = dma.done [#allocation8], 32
        $region68: #{tpu_custom_call.1} parent=55 // pred_fallthru
          _
        // Predicated region
        $region69: #{tpu_custom_call.1} parent=55 // pred_check
          %p388 = pneg %p107
        $region70: #{tpu_custom_call.1} parent=55 // pred_check_branch
          %390 = sbr.rel (%p388) target = $region72
        $region71: #{tpu_custom_call.1} parent=55 // pred_region
          %391 = dma.done [#allocation11], 64
        $region72: #{tpu_custom_call.1} parent=55 // pred_fallthru
          _
        // Predicated region
        $region73: #{tpu_custom_call.1} parent=55 // pred_check
          %p392 = pneg %p128
        $region74: #{tpu_custom_call.1} parent=55 // pred_check_branch
          %394 = sbr.rel (%p392) target = $region76
        $region75: #{tpu_custom_call.1} parent=55 // pred_region
          %395 = dma.done [#allocation11], 32
        $region76: #{tpu_custom_call.1} parent=55 // pred_fallthru
          _
        // Predicated region
        $region77: #{tpu_custom_call.1} parent=55 // pred_check
          %p396 = pneg %p149
        $region78: #{tpu_custom_call.1} parent=55 // pred_check_branch
          %398 = sbr.rel (%p396) target = $region80
        $region79: #{tpu_custom_call.1} parent=55 // pred_region
          %399 = dma.done [#allocation14], 64
        $region80: #{tpu_custom_call.1} parent=55 // pred_fallthru
          _
        // Predicated region
        $region81: #{tpu_custom_call.1} parent=55 // pred_check
          %p400 = pneg %p170
        $region82: #{tpu_custom_call.1} parent=55 // pred_check_branch
          %402 = sbr.rel (%p400) target = $region84
        $region83: #{tpu_custom_call.1} parent=55 // pred_region
          %403 = dma.done [#allocation14], 32
        $region84: #{tpu_custom_call.1} parent=55 // pred_fallthru
          _
        // Predicated region
        $region85: #{tpu_custom_call.1} parent=55 // pred_check
          %p404 = pneg %p191
        $region86: #{tpu_custom_call.1} parent=55 // pred_check_branch
          %406 = sbr.rel (%p404) target = $region88
        $region87: #{tpu_custom_call.1} parent=55 // pred_region
          %407 = dma.done [#allocation17], 32
        $region88: #{tpu_custom_call.1} parent=55 // pred_fallthru
          _
        %s408 = sand.u32 %s28, 1
        %s409 = scalar_lea.sflag [#allocation5], %s408
        %s410 = sand.u32 %s204, 1
        %s411 = smul.addr %s410, 6
        %s412 = scalar_lea.vmem [#allocation18], %s411
        // Predicated region
        $region89: #{tpu_custom_call.1} parent=55 // pred_check
          %p413 = pneg %p217
        $region90: #{tpu_custom_call.1} parent=55 // pred_check_branch
          %415 = sbr.rel (%p413) target = $region92
        $region91: #{tpu_custom_call.1} parent=55 // pred_region
          %416 = dma.done %s409, 96
        $region92: #{tpu_custom_call.1} parent=55 // pred_fallthru
          _
        %p417 = pneg %p44
        %p418 = pneg %p41
        %p419 = pneg %p65
        %p420 = pneg %p62
        %p421 = pneg %p86
        %p422 = pneg %p83
        %p423 = pneg %p107
        %p424 = pneg %p104
        %p425 = pneg %p128
        %p426 = pneg %p125
        %p427 = pneg %p149
        %p428 = pneg %p146
        %p429 = pneg %p170
        %p430 = pneg %p167
        %p431 = pneg %p191
        %p432 = pneg %p188
        %s433 = sand.u32 %s28, 1
        %s434 = scalar_lea.sflag [#allocation5], %s433
        %s435 = sand.u32 %s204, 1
        %s436 = smul.addr %s435, 6
        %s437 = scalar_lea.vmem [#allocation18], %s436
        %p438 = pneg %p217
        %p439 = pneg %p214
        %p440 = pneg %p243
        %p441 = pneg %p240
        %s442 = sand.u32 %s230, 1
        %s443 = scalar_lea.sflag [#allocation6], %s442
        %s444 = sand.u32 %s230, 1
        %s445 = smul.addr %s444, 12
        %s446 = scalar_lea.vmem [#allocation19], %s445
        %s447 = smul.u32 3, %s28
        %s448 = smul.u32 3, %s28
        %v450 = vlaneseq
        %v451 = vand.u32 %v450, 127
        %v452 = vadd.s32 %v451, 128
        %v453 = vadd.s32 %v451, 256
        %v454 = vcvt.s32.f32 %v451
        %v455 = vcvt.s32.f32 %v452
        %v456 = vcvt.s32.f32 %v453
        %v457 = vadd.f32 %v454, 0.5
        %v458 = vadd.f32 %v455, 0.5
        %v459 = vadd.f32 %v456, 0.5
        %v460 = vmul.f32 %v457, 0.055555556
        %v461 = vmul.f32 %v458, 0.055555556
        %v462 = vmul.f32 %v459, 0.055555556
        %v463 = vfloor.f32 %v460
        %v464 = vfloor.f32 %v461
        %v465 = vfloor.f32 %v462
        %v466 = vcvt.f32.s32.to.zero.pseudo %v463
        %v467 = vcvt.f32.s32.to.zero.pseudo %v464
        %v468 = vcvt.f32.s32.to.zero.pseudo %v465
        %v469 = vmul.u32 %v466, 18
        %v470 = vmul.u32 %v467, 18
        %v471 = vmul.u32 %v468, 18
        %v472 = vsub.s32 %v451, %v469
        %v473 = vsub.s32 %v452, %v470
        %v474 = vsub.s32 %v453, %v471
        %vm475 = vcmp.lt.s32.totalorder %v451, 324
        %vm476 = vcmp.lt.s32.totalorder %v452, 324
        %vm477 = vcmp.lt.s32.totalorder %v453, 324
        %vm478 = vcmp.ge.s32.totalorder %v466, 1
        %vm479 = vcmp.ge.s32.totalorder %v467, 1
        %vm480 = vcmp.ge.s32.totalorder %v468, 1
        %vm481 = vmand %vm475, %vm478
        %vm482 = vmand %vm476, %vm479
        %vm483 = vmand %vm477, %vm480
        %vm484 = vcmp.le.s32.totalorder %v466, 16
        %vm485 = vcmp.le.s32.totalorder %v467, 16
        %vm486 = vcmp.le.s32.totalorder %v468, 16
        %vm487 = vmand %vm481, %vm484
        %vm488 = vmand %vm482, %vm485
        %vm489 = vmand %vm483, %vm486
        %vm490 = vcmp.ge.s32.totalorder %v472, 1
        %vm491 = vcmp.ge.s32.totalorder %v473, 1
        %vm492 = vcmp.ge.s32.totalorder %v474, 1
        %vm493 = vmand %vm487, %vm490
        %vm494 = vmand %vm488, %vm491
        %vm495 = vmand %vm489, %vm492
        %vm496 = vcmp.le.s32.totalorder %v472, 16
        %vm497 = vcmp.le.s32.totalorder %v473, 16
        %vm498 = vcmp.le.s32.totalorder %v474, 16
        %vm499 = vmand %vm493, %vm496
        %vm500 = vmand %vm494, %vm497
        %vm501 = vmand %vm495, %vm498
        %v502 = vsel %vm499, 1, 0
        %v503 = vsel %vm500, 1, 0
        %v504 = vsel %vm501, 1, 0
        %v505 = vcvt.s32.f32 %v502
        %v506 = vcvt.s32.f32 %v503
        %v507 = vcvt.s32.f32 %v504
        %508 = vst [vmem:[#allocation2] sm:$0x3] 0
        %509 = vst [vmem:[#allocation2 + $0x8] sm:$0x3] 0
        %v510 = vld [vmem:[%s412] sm:$0x3f]
        %511 = vst [vmem:[#allocation2 + $0x2] sm:$0x3f] %v510
        %v512 = vld [vmem:[#allocation2] sm:$0xff]
        %v514 = vcombine.high %v512, %v512
        %v516 = vunpack.c.l.s4 1983009808
        %v517 = vunpack.c.0.s8 %v516
        %v518 = vlaneseq
        %v519 = vshrl.u32 %v518, 7
        %v520 = vsub.s32 %v517, %v519
        %v521 = vrot.slane %v512, %v520
        %v523 = vunpack.c.l.s4 1983009808
        %v524 = vunpack.c.0.s8 %v523
        %v525 = vlaneseq
        %v526 = vshrl.u32 %v525, 7
        %v527 = vsub.s32 %v524, %v526
        %v528 = vrot.slane %v514, %v527
        %529 = vrot.lane.b32.xlu0 %v521, 19
        %v530 = vpop.permute.xlu0 %529
        %531 = vrot.lane.b32.xlu0 %v528, 19
        %v532 = vpop.permute.xlu0 %531
        %v533 = vrot.slane %v530, 4
        %v534 = vrot.slane %v532, 4
        %vm535 = vcmask 1043456
        %v536 = vsel %vm535, %v533, %v534
        %vm537 = vcmask 154624
        %v538 = vsel %vm537, %v530, %v536
        %v539 = vsel %vm537, %v532, %v534
        %542 = vst [vmem:[#allocation3] sm:$0x33] %v538
        %543 = vst [vmem:[#allocation3 + $0x8] sm:$0x3] %v539
        %v544 = vld [vmem:[#allocation2] sm:$0xff]
        %v546 = vcombine.low %v544, %v544
        %v548 = vunpack.c.l.s4 1983009808
        %v549 = vunpack.c.0.s8 %v548
        %v550 = vlaneseq
        %v551 = vshrl.u32 %v550, 7
        %v552 = vsub.s32 %v549, %v551
        %v553 = vrot.slane %v546, %v552
        %v555 = vunpack.c.l.s4 1983009808
        %v556 = vunpack.c.0.s8 %v555
        %v557 = vlaneseq
        %v558 = vshrl.u32 %v557, 7
        %v559 = vsub.s32 %v556, %v558
        %v560 = vrot.slane %v544, %v559
        %561 = vrot.lane.b32.xlu0 %v553, 18
        %v562 = vpop.permute.xlu0 %561
        %563 = vrot.lane.b32.xlu0 %v560, 18
        %v564 = vpop.permute.xlu0 %563
        %v565 = vrot.slane %v562, 4
        %v566 = vrot.slane %v564, 4
        %v567 = vsel %vm535, %v565, %v566
        %vm568 = vcmask 146432
        %v569 = vsel %vm568, %v562, %v567
        %v570 = vsel %vm568, %v564, %v566
        %573 = vst [vmem:[#allocation3] sm:$0xcc] %v569
        %574 = vst [vmem:[#allocation3 + $0x8] sm:$0xc] %v570
        %v575 = vld [vmem:[#allocation2] sm:$0xff]
        %v577 = vcombine.high %v575, %v575
        %v579 = vunpack.c.l.s4 1983009808
        %v580 = vunpack.c.0.s8 %v579
        %v581 = vlaneseq
        %v582 = vshrl.u32 %v581, 7
        %v583 = vsub.s32 %v580, %v582
        %v584 = vrot.slane %v575, %v583
        %v586 = vunpack.c.l.s4 1983009808
        %v587 = vunpack.c.0.s8 %v586
        %v588 = vlaneseq
        %v589 = vshrl.u32 %v588, 7
        %v590 = vsub.s32 %v587, %v589
        %v591 = vrot.slane %v577, %v590
        %592 = vrot.lane.b32.xlu0 %v584, 17
        %v593 = vpop.permute.xlu0 %592
        %594 = vrot.lane.b32.xlu0 %v591, 17
        %v595 = vpop.permute.xlu0 %594
        %v596 = vrot.slane %v593, 4
        %v597 = vrot.slane %v595, 4
        %v598 = vsel %vm535, %v596, %v597
        %vm599 = vcmask 138240
        %v600 = vsel %vm599, %v593, %v598
        %v601 = vsel %vm599, %v595, %v597
        %604 = vst [vmem:[#allocation3 + $0xc] sm:$0x33] %v600
        %605 = vst [vmem:[#allocation3 + $0x14] sm:$0x3] %v601
        %v606 = vld [vmem:[#allocation2] sm:$0xff]
        %v608 = vcombine.low %v606, %v606
        %v610 = vunpack.c.l.s4 1983009808
        %v611 = vunpack.c.0.s8 %v610
        %v612 = vlaneseq
        %v613 = vshrl.u32 %v612, 7
        %v614 = vsub.s32 %v611, %v613
        %v615 = vrot.slane %v608, %v614
        %v617 = vunpack.c.l.s4 1983009808
        %v618 = vunpack.c.0.s8 %v617
        %v619 = vlaneseq
        %v620 = vshrl.u32 %v619, 7
        %v621 = vsub.s32 %v618, %v620
        %v622 = vrot.slane %v606, %v621
        %623 = vrot.lane.b32.xlu0 %v615, 1
        %v624 = vpop.permute.xlu0 %623
        %625 = vrot.lane.b32.xlu0 %v622, 1
        %v626 = vpop.permute.xlu0 %625
        %v627 = vrot.slane %v624, 4
        %v628 = vrot.slane %v626, 4
        %v629 = vsel %vm535, %v627, %v628
        %vm630 = vcmask 7168
        %v631 = vsel %vm630, %v624, %v629
        %v632 = vsel %vm630, %v626, %v628
        %635 = vst [vmem:[#allocation3 + $0xc] sm:$0xcc] %v631
        %636 = vst [vmem:[#allocation3 + $0x14] sm:$0xc] %v632
        %v637 = vld [vmem:[#allocation2 + $0x2] sm:$0x3f]
        %v639 = vcombine.high %v637, %v637
        %v641 = vunpack.c.l.s4 1983009808
        %v642 = vunpack.c.0.s8 %v641
        %v643 = vlaneseq
        %v644 = vshrl.u32 %v643, 7
        %v645 = vsub.s32 %v642, %v644
        %v646 = vrot.slane %v637, %v645
        %v648 = vunpack.c.l.s4 1983009808
        %v649 = vunpack.c.0.s8 %v648
        %v650 = vlaneseq
        %v651 = vshrl.u32 %v650, 7
        %v652 = vsub.s32 %v649, %v651
        %v653 = vrot.slane %v639, %v652
        %656 = vst [vmem:[#allocation3 + $0x18] sm:$0x33] %v646
        %657 = vst [vmem:[#allocation3 + $0x20] sm:$0x3] %v653
        %v658 = vld [vmem:[#allocation2 + $0x2] sm:$0xff]
        %v660 = vcombine.low %v658, %v658
        %v662 = vunpack.c.l.s4 1983009808
        %v663 = vunpack.c.0.s8 %v662
        %v664 = vlaneseq
        %v665 = vshrl.u32 %v664, 7
        %v666 = vsub.s32 %v663, %v665
        %v667 = vrot.slane %v660, %v666
        %v669 = vunpack.c.l.s4 1983009808
        %v670 = vunpack.c.0.s8 %v669
        %v671 = vlaneseq
        %v672 = vshrl.u32 %v671, 7
        %v673 = vsub.s32 %v670, %v672
        %v674 = vrot.slane %v658, %v673
        %675 = vrot.lane.b32.xlu0 %v667, 127
        %v676 = vpop.permute.xlu0 %675
        %677 = vrot.lane.b32.xlu0 %v674, 127
        %v678 = vpop.permute.xlu0 %677
        %v679 = vrot.slane %v676, 4
        %v680 = vrot.slane %v678, 4
        %v681 = vsel %vm535, %v679, %v680
        %vm682 = vcmask 1039360
        %v683 = vsel %vm682, %v676, %v681
        %v684 = vsel %vm682, %v678, %v680
        %687 = vst [vmem:[#allocation3 + $0x18] sm:$0xcc] %v683
        %688 = vst [vmem:[#allocation3 + $0x20] sm:$0xc] %v684
        %v689 = vld [vmem:[#allocation2 + $0x2] sm:$0xff]
        %v691 = vcombine.high %v689, %v689
        %v693 = vunpack.c.l.s4 1983009808
        %v694 = vunpack.c.0.s8 %v693
        %v695 = vlaneseq
        %v696 = vshrl.u32 %v695, 7
        %v697 = vsub.s32 %v694, %v696
        %v698 = vrot.slane %v689, %v697
        %v700 = vunpack.c.l.s4 1983009808
        %v701 = vunpack.c.0.s8 %v700
        %v702 = vlaneseq
        %v703 = vshrl.u32 %v702, 7
        %v704 = vsub.s32 %v701, %v703
        %v705 = vrot.slane %v691, %v704
        %706 = vrot.lane.b32.xlu0 %v698, 111
        %v707 = vpop.permute.xlu0 %706
        %708 = vrot.lane.b32.xlu0 %v705, 111
        %v709 = vpop.permute.xlu0 %708
        %v710 = vrot.slane %v707, 4
        %v711 = vrot.slane %v709, 4
        %v712 = vsel %vm535, %v710, %v711
        %vm713 = vcmask 908288
        %v714 = vsel %vm713, %v707, %v712
        %v715 = vsel %vm713, %v709, %v711
        %718 = vst [vmem:[#allocation3 + $0x24] sm:$0x33] %v714
        %719 = vst [vmem:[#allocation3 + $0x2c] sm:$0x3] %v715
        %v720 = vld [vmem:[#allocation2 + $0x2] sm:$0xff]
        %v722 = vcombine.low %v720, %v720
        %v724 = vunpack.c.l.s4 1983009808
        %v725 = vunpack.c.0.s8 %v724
        %v726 = vlaneseq
        %v727 = vshrl.u32 %v726, 7
        %v728 = vsub.s32 %v725, %v727
        %v729 = vrot.slane %v722, %v728
        %v731 = vunpack.c.l.s4 1983009808
        %v732 = vunpack.c.0.s8 %v731
        %v733 = vlaneseq
        %v734 = vshrl.u32 %v733, 7
        %v735 = vsub.s32 %v732, %v734
        %v736 = vrot.slane %v720, %v735
        %737 = vrot.lane.b32.xlu0 %v729, 110
        %v738 = vpop.permute.xlu0 %737
        %739 = vrot.lane.b32.xlu0 %v736, 110
        %v740 = vpop.permute.xlu0 %739
        %v741 = vrot.slane %v738, 4
        %v742 = vrot.slane %v740, 4
        %v743 = vsel %vm535, %v741, %v742
        %vm744 = vcmask 900096
        %v745 = vsel %vm744, %v738, %v743
        %v746 = vsel %vm744, %v740, %v742
        %749 = vst [vmem:[#allocation3 + $0x24] sm:$0xcc] %v745
        %750 = vst [vmem:[#allocation3 + $0x2c] sm:$0xc] %v746
        %v751 = vld [vmem:[#allocation2 + $0x2] sm:$0xff]
        %v753 = vcombine.high %v751, %v751
        %v755 = vunpack.c.l.s4 1983009808
        %v756 = vunpack.c.0.s8 %v755
        %v757 = vlaneseq
        %v758 = vshrl.u32 %v757, 7
        %v759 = vsub.s32 %v756, %v758
        %v760 = vrot.slane %v751, %v759
        %v762 = vunpack.c.l.s4 1983009808
        %v763 = vunpack.c.0.s8 %v762
        %v764 = vlaneseq
        %v765 = vshrl.u32 %v764, 7
        %v766 = vsub.s32 %v763, %v765
        %v767 = vrot.slane %v753, %v766
        %768 = vrot.lane.b32.xlu0 %v760, 109
        %v769 = vpop.permute.xlu0 %768
        %770 = vrot.lane.b32.xlu0 %v767, 109
        %v771 = vpop.permute.xlu0 %770
        %v772 = vrot.slane %v769, 4
        %v773 = vrot.slane %v771, 4
        %v774 = vsel %vm535, %v772, %v773
        %vm775 = vcmask 891904
        %v776 = vsel %vm775, %v769, %v774
        %v777 = vsel %vm775, %v771, %v773
        %780 = vst [vmem:[#allocation3 + $0x30] sm:$0x33] %v776
        %781 = vst [vmem:[#allocation3 + $0x38] sm:$0x3] %v777
        %v782 = vld [vmem:[#allocation4] sm:$0x3]
        %v783 = vld [vmem:[#allocation3] sm:$0xff]
        %v784 = vld [vmem:[#allocation3 + $0x8] sm:$0xf]
        %v785 = vld [vmem:[#allocation3 + $0xc] sm:$0xff]
        %v786 = vld [vmem:[#allocation3 + $0x14] sm:$0xf]
        %v787 = vld [vmem:[#allocation3 + $0x18] sm:$0xff]
        %v788 = vld [vmem:[#allocation3 + $0x20] sm:$0xf]
        %v789 = vld [vmem:[#allocation3 + $0x24] sm:$0xff]
        %v790 = vld [vmem:[#allocation3 + $0x2c] sm:$0xf]
        %v791 = vld [vmem:[#allocation3 + $0x30] sm:$0x33]
        %v792 = vld [vmem:[#allocation3 + $0x38] sm:$0x3]
        %v793 = vld [vmem:[#allocation7] sm:$0xf]
        %795 = vset.pattern.permute.xlu0 0
        %796 = vperm.xlu0 %795, %v793
        %v797 = vpop.permute.xlu0 %796
        %v809 = vunpack.c.l.b16 %v783
        %v810 = vunpack.c.h.b16 %v783
        %v811 = vunpack.c.l.b16 %v784
        %v812 = vunpack.c.l.b16 %v785
        %v813 = vunpack.c.h.b16 %v785
        %v814 = vunpack.c.l.b16 %v786
        %v815 = vunpack.c.l.b16 %v787
        %v816 = vunpack.c.h.b16 %v787
        %v817 = vunpack.c.l.b16 %v788
        %v818 = vunpack.c.l.b16 %v789
        %v819 = vunpack.c.h.b16 %v789
        %v820 = vunpack.c.l.b16 %v790
        %v821 = vunpack.c.l.b16 %v791
        %v822 = vunpack.c.h.b16 %v791
        %v823 = vunpack.c.l.b16 %v792
        %v824 = vpack.c.b16 %v812, %v809
        %v825 = vpack.c.b16 %v813, %v810
        %v826 = vpack.c.b16 %v814, %v811
        %v827 = vpack.c.b16 %v818, %v815
        %v828 = vpack.c.b16 %v819, %v816
        %v829 = vpack.c.b16 %v820, %v817
        %v830 = vpack.c.b16 %v821, %v821
        %v831 = vpack.c.b16 %v822, %v822
        %v832 = vpack.c.b16 %v823, %v823
        %vm839 = vcmask 293888
        %v841 = vsel %vm839, %v782, 0
        %vm843 = vcmask 1041408
        %v845 = vsel %vm843, %v830, 0
        %v848 = vsel %vm843, %v831, 0
        %v851 = vsel %vm843, %v832, 0
        %853 = vmatprep.subr.bf16.mxu0 %v825
        %854 = vmatpush1.bf16.msra.mxu0 %v824
        %855 = vmatprep.subr.bf16.mxu0 %v828
        %856 = vmatpush1.bf16.msra.mxu0 %v827
        %857 = vmatprep.subr.bf16.mxu0 %v848
        %858 = vmatpush1.bf16.msra.mxu0 %v845
        %859 = vmatprep.subr.bf16.mxu0 0
        %860 = vmatpush1.bf16.msra.mxu0 0
        %861 = vmatprep.subr.bf16.mxu0 0
        %862 = vmatpush1.bf16.msra.mxu0 0
        %863 = vmatprep.subr.bf16.mxu0 0
        %864 = vmatpush1.bf16.msra.mxu0 0
        %865 = vmatprep.subr.bf16.mxu0 0
        %866 = vmatpush1.bf16.msra.mxu0 0
        %867 = vmatprep.subr.bf16.mxu0 0
        %868 = vmatpush1.bf16.msra.mxu0 0
        %869 = vmatprep.subr.bf16.mxu0 0
        %870 = vmatpush1.bf16.msra.mxu0 0
        %871 = vmatprep.subr.bf16.mxu0 0
        %872 = vmatpush1.bf16.msra.mxu0 0
        %873 = vmatprep.subr.bf16.mxu0 0
        %874 = vmatpush1.bf16.msra.mxu0 0
        %875 = vmatprep.subr.bf16.mxu0 0
        %876 = vmatpush1.bf16.msra.mxu0 0
        %877 = vmatprep.subr.bf16.mxu0 0
        %878 = vmatpush1.bf16.msra.mxu0 0
        %879 = vmatprep.subr.bf16.mxu0 0
        %880 = vmatpush1.bf16.msra.mxu0 0
        %881 = vmatprep.subr.bf16.mxu0 0
        %882 = vmatpush1.bf16.msra.mxu0 0
        %883 = vmatprep.subr.bf16.mxu0 0
        %884 = vmatpush1.bf16.msra.mxu0 0
        %885 = vmatprep.mubr.bf16.mxu0 0
        %886 = vmatmul.mubr.bf16.gmra.mrb[0].mxu0 %v841
        %v887 = vpop.f32.mrb[0].mxu0
        %v888 = vadd.f32 %v797, %v887
        %v889 = vpop.f32.mrb[0].mxu0
        %v890 = vadd.f32 %v797, %v889
        %v891 = vpop.f32.mrb[0].mxu0
        %v892 = vpop.f32.mrb[0].mxu0
        %893 = vdwg.mxu0
        %894 = vmatprep.subr.bf16.mxu0 0
        %895 = vmatpush1.bf16.msra.mxu0 %v826
        %896 = vmatprep.subr.bf16.mxu0 0
        %897 = vmatpush1.bf16.msra.mxu0 %v829
        %898 = vmatprep.subr.bf16.mxu0 0
        %899 = vmatpush1.bf16.msra.mxu0 %v851
        %900 = vmatprep.subr.bf16.mxu0 0
        %901 = vmatpush1.bf16.msra.mxu0 0
        %902 = vmatprep.subr.bf16.mxu0 0
        %903 = vmatpush1.bf16.msra.mxu0 0
        %904 = vmatprep.subr.bf16.mxu0 0
        %905 = vmatpush1.bf16.msra.mxu0 0
        %906 = vmatprep.subr.bf16.mxu0 0
        %907 = vmatpush1.bf16.msra.mxu0 0
        %908 = vmatprep.subr.bf16.mxu0 0
        %909 = vmatpush1.bf16.msra.mxu0 0
        %910 = vmatprep.subr.bf16.mxu0 0
        %911 = vmatpush1.bf16.msra.mxu0 0
        %912 = vmatprep.subr.bf16.mxu0 0
        %913 = vmatpush1.bf16.msra.mxu0 0
        %914 = vmatprep.subr.bf16.mxu0 0
        %915 = vmatpush1.bf16.msra.mxu0 0
        %916 = vmatprep.subr.bf16.mxu0 0
        %917 = vmatpush1.bf16.msra.mxu0 0
        %918 = vmatprep.subr.bf16.mxu0 0
        %919 = vmatpush1.bf16.msra.mxu0 0
        %920 = vmatprep.subr.bf16.mxu0 0
        %921 = vmatpush1.bf16.msra.mxu0 0
        %922 = vmatprep.subr.bf16.mxu0 0
        %923 = vmatpush1.bf16.msra.mxu0 0
        %924 = vmatprep.subr.bf16.mxu0 0
        %925 = vmatpush1.bf16.msra.mxu0 0
        %926 = vmatprep.mubr.bf16.mxu0 0
        %927 = vmatmul.mubr.bf16.gmra.mrb[0].mxu0 %v841
        %v928 = vpop.f32.mrb[0].mxu0
        %v929 = vadd.f32 %v797, %v928
        %v930 = vpop.f32.mrb[0].mxu0
        %v931 = vpop.f32.mrb[0].mxu0
        %v932 = vpop.f32.mrb[0].mxu0
        %933 = vdwg.mxu0
        %vm934 = vcmp.gt.f32.partialorder %v888, 0.0
        %vm935 = vcmp.gt.f32.partialorder %v890, 0.0
        %vm936 = vcmp.gt.f32.partialorder %v929, 0.0
        %v937 = vmul.f32 %v888, 0.2
        %v938 = vmul.f32 %v890, 0.2
        %v939 = vmul.f32 %v929, 0.2
        %v940 = vsel %vm934, %v888, %v937
        %v941 = vsel %vm935, %v890, %v938
        %v942 = vsel %vm936, %v929, %v939
        %v943 = vmul.f32 %v940, %v505
        %v944 = vmul.f32 %v941, %v506
        %v945 = vmul.f32 %v942, %v507
        %v946 = vpack.c.bf16 %v943, %v943
        %v947 = vpack.c.bf16 %v944, %v944
        %v948 = vpack.c.bf16 %v945, %v945
        %v952 = vcombine.low %v946, %v947
        %v954 = vunpack.c.l.s4 1983009808
        %v955 = vunpack.c.0.s8 %v954
        %v956 = vlaneseq
        %v957 = vshrl.u32 %v956, 7
        %v958 = vsub.s32 %v955, %v957
        %v959 = vrot.slane %v952, %v958
        %v961 = vunpack.c.l.s4 1983009808
        %v962 = vunpack.c.0.s8 %v961
        %v963 = vlaneseq
        %v964 = vshrl.u32 %v963, 7
        %v965 = vsub.s32 %v962, %v964
        %v966 = vrot.slane %v948, %v965
        %v967 = vcombine.low %v959, %v966
        %969 = vst [vmem:[#allocation2 + $0x2] sm:$0x2a] %v967
        %v970 = vld [vmem:[#allocation15] sm:$0x3]
        %v971 = vld [vmem:[#allocation16] sm:$0x3]
        %v972 = vmul.f32 %v888, %v505
        %v973 = vmul.f32 %v890, %v506
        %v974 = vmul.f32 %v929, %v507
        %v975 = vsel %vm843, %v972, 0.0
        %v976 = vsel %vm843, %v973, 0.0
        %v977 = vadd.f32 %v975, %v976
        %v978 = vsel %vm843, %v974, 0.0
        %v979 = vadd.f32 %v977, %v978
        %980 = vadd.xlane.f32.xlu0 %v979
        %v981 = vpop.xlane.xlu0 %980
        %v982 = vmul.f32 %v972, %v972
        %v983 = vmul.f32 %v973, %v973
        %v984 = vmul.f32 %v974, %v974
        %v985 = vsel %vm843, %v982, 0.0
        %v986 = vsel %vm843, %v983, 0.0
        %v987 = vadd.f32 %v985, %v986
        %v988 = vsel %vm843, %v984, 0.0
        %v989 = vadd.f32 %v987, %v988
        %990 = vadd.xlane.f32.xlu0 %v989
        %v991 = vpop.xlane.xlu0 %990
        %v992 = vmul.f32 %v981, 0.00390625
        %v993 = vmul.f32 %v991, 0.00390625
        %v994 = vmul.f32 %v992, %v992
        %v995 = vsub.f32 %v993, %v994
        %v996 = vsub.f32 %v888, %v992
        %v997 = vsub.f32 %v890, %v992
        %v998 = vsub.f32 %v929, %v992
        %v999 = vadd.f32 %v995, 1e-05
        %v1000 = vrsqrt.pop %v999
        %v1001 = vmul.f32 %v996, %v1000
        %v1002 = vmul.f32 %v997, %v1000
        %v1003 = vmul.f32 %v998, %v1000
        %1005 = vset.pattern.permute.xlu0 0
        %1006 = vperm.xlu0 %1005, %v970
        %v1007 = vpop.permute.xlu0 %1006
        %v1009 = vmul.f32 %v1007, %v1001
        %v1010 = vmul.f32 %v1007, %v1002
        %v1011 = vmul.f32 %v1007, %v1003
        %1013 = vset.pattern.permute.xlu0 0
        %1014 = vperm.xlu0 %1013, %v971
        %v1015 = vpop.permute.xlu0 %1014
        %v1017 = vadd.f32 %v1009, %v1015
        %v1018 = vadd.f32 %v1010, %v1015
        %v1019 = vadd.f32 %v1011, %v1015
        %vm1020 = vcmp.gt.f32.partialorder %v1017, 0.0
        %vm1021 = vcmp.gt.f32.partialorder %v1018, 0.0
        %vm1022 = vcmp.gt.f32.partialorder %v1019, 0.0
        %v1023 = vmul.f32 %v1017, 0.2
        %v1024 = vmul.f32 %v1018, 0.2
        %v1025 = vmul.f32 %v1019, 0.2
        %v1026 = vsel %vm1020, %v1017, %v1023
        %v1027 = vsel %vm1021, %v1018, %v1024
        %v1028 = vsel %vm1022, %v1019, %v1025
        %v1029 = vmul.f32 %v1026, %v505
        %v1030 = vmul.f32 %v1027, %v506
        %v1031 = vmul.f32 %v1028, %v507
        %v1032 = vpack.c.bf16 %v1029, %v1029
        %v1033 = vpack.c.bf16 %v1030, %v1030
        %v1034 = vpack.c.bf16 %v1031, %v1031
        %v1038 = vcombine.low %v1032, %v1033
        %v1040 = vunpack.c.l.s4 1983009808
        %v1041 = vunpack.c.0.s8 %v1040
        %v1042 = vlaneseq
        %v1043 = vshrl.u32 %v1042, 7
        %v1044 = vsub.s32 %v1041, %v1043
        %v1045 = vrot.slane %v1038, %v1044
        %v1047 = vunpack.c.l.s4 1983009808
        %v1048 = vunpack.c.0.s8 %v1047
        %v1049 = vlaneseq
        %v1050 = vshrl.u32 %v1049, 7
        %v1051 = vsub.s32 %v1048, %v1050
        %v1052 = vrot.slane %v1034, %v1051
        %v1053 = vcombine.low %v1045, %v1052
        %1055 = vst [vmem:[#allocation2 + $0x2] sm:$0x15] %v1053
        %v1056 = vld [vmem:[#allocation2] sm:$0xff]
        %v1058 = vcombine.high %v1056, %v1056
        %v1060 = vunpack.c.l.s4 1983009808
        %v1061 = vunpack.c.0.s8 %v1060
        %v1062 = vlaneseq
        %v1063 = vshrl.u32 %v1062, 7
        %v1064 = vsub.s32 %v1061, %v1063
        %v1065 = vrot.slane %v1056, %v1064
        %v1067 = vunpack.c.l.s4 1983009808
        %v1068 = vunpack.c.0.s8 %v1067
        %v1069 = vlaneseq
        %v1070 = vshrl.u32 %v1069, 7
        %v1071 = vsub.s32 %v1068, %v1070
        %v1072 = vrot.slane %v1058, %v1071
        %1073 = vrot.lane.b32.xlu0 %v1065, 19
        %v1074 = vpop.permute.xlu0 %1073
        %1075 = vrot.lane.b32.xlu0 %v1072, 19
        %v1076 = vpop.permute.xlu0 %1075
        %v1077 = vrot.slane %v1074, 4
        %v1078 = vrot.slane %v1076, 4
        %v1079 = vsel %vm535, %v1077, %v1078
        %v1080 = vsel %vm537, %v1074, %v1079
        %v1081 = vsel %vm537, %v1076, %v1078
        %1084 = vst [vmem:[#allocation3] sm:$0x33] %v1080
        %1085 = vst [vmem:[#allocation3 + $0x8] sm:$0x3] %v1081
        %v1086 = vld [vmem:[#allocation2] sm:$0xff]
        %v1088 = vcombine.low %v1086, %v1086
        %v1090 = vunpack.c.l.s4 1983009808
        %v1091 = vunpack.c.0.s8 %v1090
        %v1092 = vlaneseq
        %v1093 = vshrl.u32 %v1092, 7
        %v1094 = vsub.s32 %v1091, %v1093
        %v1095 = vrot.slane %v1088, %v1094
        %v1097 = vunpack.c.l.s4 1983009808
        %v1098 = vunpack.c.0.s8 %v1097
        %v1099 = vlaneseq
        %v1100 = vshrl.u32 %v1099, 7
        %v1101 = vsub.s32 %v1098, %v1100
        %v1102 = vrot.slane %v1086, %v1101
        %1103 = vrot.lane.b32.xlu0 %v1095, 18
        %v1104 = vpop.permute.xlu0 %1103
        %1105 = vrot.lane.b32.xlu0 %v1102, 18
        %v1106 = vpop.permute.xlu0 %1105
        %v1107 = vrot.slane %v1104, 4
        %v1108 = vrot.slane %v1106, 4
        %v1109 = vsel %vm535, %v1107, %v1108
        %v1110 = vsel %vm568, %v1104, %v1109
        %v1111 = vsel %vm568, %v1106, %v1108
        %1114 = vst [vmem:[#allocation3] sm:$0xcc] %v1110
        %1115 = vst [vmem:[#allocation3 + $0x8] sm:$0xc] %v1111
        %v1116 = vld [vmem:[#allocation2] sm:$0xff]
        %v1118 = vcombine.high %v1116, %v1116
        %v1120 = vunpack.c.l.s4 1983009808
        %v1121 = vunpack.c.0.s8 %v1120
        %v1122 = vlaneseq
        %v1123 = vshrl.u32 %v1122, 7
        %v1124 = vsub.s32 %v1121, %v1123
        %v1125 = vrot.slane %v1116, %v1124
        %v1127 = vunpack.c.l.s4 1983009808
        %v1128 = vunpack.c.0.s8 %v1127
        %v1129 = vlaneseq
        %v1130 = vshrl.u32 %v1129, 7
        %v1131 = vsub.s32 %v1128, %v1130
        %v1132 = vrot.slane %v1118, %v1131
        %1133 = vrot.lane.b32.xlu0 %v1125, 17
        %v1134 = vpop.permute.xlu0 %1133
        %1135 = vrot.lane.b32.xlu0 %v1132, 17
        %v1136 = vpop.permute.xlu0 %1135
        %v1137 = vrot.slane %v1134, 4
        %v1138 = vrot.slane %v1136, 4
        %v1139 = vsel %vm535, %v1137, %v1138
        %v1140 = vsel %vm599, %v1134, %v1139
        %v1141 = vsel %vm599, %v1136, %v1138
        %1144 = vst [vmem:[#allocation3 + $0xc] sm:$0x33] %v1140
        %1145 = vst [vmem:[#allocation3 + $0x14] sm:$0x3] %v1141
        %v1146 = vld [vmem:[#allocation2] sm:$0xff]
        %v1148 = vcombine.low %v1146, %v1146
        %v1150 = vunpack.c.l.s4 1983009808
        %v1151 = vunpack.c.0.s8 %v1150
        %v1152 = vlaneseq
        %v1153 = vshrl.u32 %v1152, 7
        %v1154 = vsub.s32 %v1151, %v1153
        %v1155 = vrot.slane %v1148, %v1154
        %v1157 = vunpack.c.l.s4 1983009808
        %v1158 = vunpack.c.0.s8 %v1157
        %v1159 = vlaneseq
        %v1160 = vshrl.u32 %v1159, 7
        %v1161 = vsub.s32 %v1158, %v1160
        %v1162 = vrot.slane %v1146, %v1161
        %1163 = vrot.lane.b32.xlu0 %v1155, 1
        %v1164 = vpop.permute.xlu0 %1163
        %1165 = vrot.lane.b32.xlu0 %v1162, 1
        %v1166 = vpop.permute.xlu0 %1165
        %v1167 = vrot.slane %v1164, 4
        %v1168 = vrot.slane %v1166, 4
        %v1169 = vsel %vm535, %v1167, %v1168
        %v1170 = vsel %vm630, %v1164, %v1169
        %v1171 = vsel %vm630, %v1166, %v1168
        %1174 = vst [vmem:[#allocation3 + $0xc] sm:$0xcc] %v1170
        %1175 = vst [vmem:[#allocation3 + $0x14] sm:$0xc] %v1171
        %v1176 = vld [vmem:[#allocation2 + $0x2] sm:$0x3f]
        %v1178 = vcombine.high %v1176, %v1176
        %v1180 = vunpack.c.l.s4 1983009808
        %v1181 = vunpack.c.0.s8 %v1180
        %v1182 = vlaneseq
        %v1183 = vshrl.u32 %v1182, 7
        %v1184 = vsub.s32 %v1181, %v1183
        %v1185 = vrot.slane %v1176, %v1184
        %v1187 = vunpack.c.l.s4 1983009808
        %v1188 = vunpack.c.0.s8 %v1187
        %v1189 = vlaneseq
        %v1190 = vshrl.u32 %v1189, 7
        %v1191 = vsub.s32 %v1188, %v1190
        %v1192 = vrot.slane %v1178, %v1191
        %1195 = vst [vmem:[#allocation3 + $0x18] sm:$0x33] %v1185
        %1196 = vst [vmem:[#allocation3 + $0x20] sm:$0x3] %v1192
        %v1197 = vld [vmem:[#allocation2 + $0x2] sm:$0xff]
        %v1199 = vcombine.low %v1197, %v1197
        %v1201 = vunpack.c.l.s4 1983009808
        %v1202 = vunpack.c.0.s8 %v1201
        %v1203 = vlaneseq
        %v1204 = vshrl.u32 %v1203, 7
        %v1205 = vsub.s32 %v1202, %v1204
        %v1206 = vrot.slane %v1199, %v1205
        %v1208 = vunpack.c.l.s4 1983009808
        %v1209 = vunpack.c.0.s8 %v1208
        %v1210 = vlaneseq
        %v1211 = vshrl.u32 %v1210, 7
        %v1212 = vsub.s32 %v1209, %v1211
        %v1213 = vrot.slane %v1197, %v1212
        %1214 = vrot.lane.b32.xlu0 %v1206, 127
        %v1215 = vpop.permute.xlu0 %1214
        %1216 = vrot.lane.b32.xlu0 %v1213, 127
        %v1217 = vpop.permute.xlu0 %1216
        %v1218 = vrot.slane %v1215, 4
        %v1219 = vrot.slane %v1217, 4
        %v1220 = vsel %vm535, %v1218, %v1219
        %v1221 = vsel %vm682, %v1215, %v1220
        %v1222 = vsel %vm682, %v1217, %v1219
        %1225 = vst [vmem:[#allocation3 + $0x18] sm:$0xcc] %v1221
        %1226 = vst [vmem:[#allocation3 + $0x20] sm:$0xc] %v1222
        %v1227 = vld [vmem:[#allocation2 + $0x2] sm:$0xff]
        %v1229 = vcombine.high %v1227, %v1227
        %v1231 = vunpack.c.l.s4 1983009808
        %v1232 = vunpack.c.0.s8 %v1231
        %v1233 = vlaneseq
        %v1234 = vshrl.u32 %v1233, 7
        %v1235 = vsub.s32 %v1232, %v1234
        %v1236 = vrot.slane %v1227, %v1235
        %v1238 = vunpack.c.l.s4 1983009808
        %v1239 = vunpack.c.0.s8 %v1238
        %v1240 = vlaneseq
        %v1241 = vshrl.u32 %v1240, 7
        %v1242 = vsub.s32 %v1239, %v1241
        %v1243 = vrot.slane %v1229, %v1242
        %1244 = vrot.lane.b32.xlu0 %v1236, 111
        %v1245 = vpop.permute.xlu0 %1244
        %1246 = vrot.lane.b32.xlu0 %v1243, 111
        %v1247 = vpop.permute.xlu0 %1246
        %v1248 = vrot.slane %v1245, 4
        %v1249 = vrot.slane %v1247, 4
        %v1250 = vsel %vm535, %v1248, %v1249
        %v1251 = vsel %vm713, %v1245, %v1250
        %v1252 = vsel %vm713, %v1247, %v1249
        %1255 = vst [vmem:[#allocation3 + $0x24] sm:$0x33] %v1251
        %1256 = vst [vmem:[#allocation3 + $0x2c] sm:$0x3] %v1252
        %v1257 = vld [vmem:[#allocation2 + $0x2] sm:$0xff]
        %v1259 = vcombine.low %v1257, %v1257
        %v1261 = vunpack.c.l.s4 1983009808
        %v1262 = vunpack.c.0.s8 %v1261
        %v1263 = vlaneseq
        %v1264 = vshrl.u32 %v1263, 7
        %v1265 = vsub.s32 %v1262, %v1264
        %v1266 = vrot.slane %v1259, %v1265
        %v1268 = vunpack.c.l.s4 1983009808
        %v1269 = vunpack.c.0.s8 %v1268
        %v1270 = vlaneseq
        %v1271 = vshrl.u32 %v1270, 7
        %v1272 = vsub.s32 %v1269, %v1271
        %v1273 = vrot.slane %v1257, %v1272
        %1274 = vrot.lane.b32.xlu0 %v1266, 110
        %v1275 = vpop.permute.xlu0 %1274
        %1276 = vrot.lane.b32.xlu0 %v1273, 110
        %v1277 = vpop.permute.xlu0 %1276
        %v1278 = vrot.slane %v1275, 4
        %v1279 = vrot.slane %v1277, 4
        %v1280 = vsel %vm535, %v1278, %v1279
        %v1281 = vsel %vm744, %v1275, %v1280
        %v1282 = vsel %vm744, %v1277, %v1279
        %1285 = vst [vmem:[#allocation3 + $0x24] sm:$0xcc] %v1281
        %1286 = vst [vmem:[#allocation3 + $0x2c] sm:$0xc] %v1282
        %v1287 = vld [vmem:[#allocation2 + $0x2] sm:$0xff]
        %v1289 = vcombine.high %v1287, %v1287
        %v1291 = vunpack.c.l.s4 1983009808
        %v1292 = vunpack.c.0.s8 %v1291
        %v1293 = vlaneseq
        %v1294 = vshrl.u32 %v1293, 7
        %v1295 = vsub.s32 %v1292, %v1294
        %v1296 = vrot.slane %v1287, %v1295
        %v1298 = vunpack.c.l.s4 1983009808
        %v1299 = vunpack.c.0.s8 %v1298
        %v1300 = vlaneseq
        %v1301 = vshrl.u32 %v1300, 7
        %v1302 = vsub.s32 %v1299, %v1301
        %v1303 = vrot.slane %v1289, %v1302
        %1304 = vrot.lane.b32.xlu0 %v1296, 109
        %v1305 = vpop.permute.xlu0 %1304
        %1306 = vrot.lane.b32.xlu0 %v1303, 109
        %v1307 = vpop.permute.xlu0 %1306
        %v1308 = vrot.slane %v1305, 4
        %v1309 = vrot.slane %v1307, 4
        %v1310 = vsel %vm535, %v1308, %v1309
        %v1311 = vsel %vm775, %v1305, %v1310
        %v1312 = vsel %vm775, %v1307, %v1309
        %1315 = vst [vmem:[#allocation3 + $0x30] sm:$0x33] %v1311
        %1316 = vst [vmem:[#allocation3 + $0x38] sm:$0x3] %v1312
        %v1317 = vld [vmem:[#allocation9] sm:$0x3]
        %v1318 = vld [vmem:[#allocation3] sm:$0xff]
        %v1319 = vld [vmem:[#allocation3 + $0x8] sm:$0xf]
        %v1320 = vld [vmem:[#allocation3 + $0xc] sm:$0xff]
        %v1321 = vld [vmem:[#allocation3 + $0x14] sm:$0xf]
        %v1322 = vld [vmem:[#allocation3 + $0x18] sm:$0xff]
        %v1323 = vld [vmem:[#allocation3 + $0x20] sm:$0xf]
        %v1324 = vld [vmem:[#allocation3 + $0x24] sm:$0xff]
        %v1325 = vld [vmem:[#allocation3 + $0x2c] sm:$0xf]
        %v1326 = vld [vmem:[#allocation3 + $0x30] sm:$0x33]
        %v1327 = vld [vmem:[#allocation3 + $0x38] sm:$0x3]
        %v1328 = vld [vmem:[#allocation10] sm:$0xf]
        %1330 = vset.pattern.permute.xlu0 0
        %1331 = vperm.xlu0 %1330, %v1328
        %v1332 = vpop.permute.xlu0 %1331
        %v1344 = vunpack.c.l.b16 %v1318
        %v1345 = vunpack.c.h.b16 %v1318
        %v1346 = vunpack.c.l.b16 %v1319
        %v1347 = vunpack.c.l.b16 %v1320
        %v1348 = vunpack.c.h.b16 %v1320
        %v1349 = vunpack.c.l.b16 %v1321
        %v1350 = vunpack.c.l.b16 %v1322
        %v1351 = vunpack.c.h.b16 %v1322
        %v1352 = vunpack.c.l.b16 %v1323
        %v1353 = vunpack.c.l.b16 %v1324
        %v1354 = vunpack.c.h.b16 %v1324
        %v1355 = vunpack.c.l.b16 %v1325
        %v1356 = vunpack.c.l.b16 %v1326
        %v1357 = vunpack.c.h.b16 %v1326
        %v1358 = vunpack.c.l.b16 %v1327
        %v1359 = vpack.c.b16 %v1347, %v1344
        %v1360 = vpack.c.b16 %v1348, %v1345
        %v1361 = vpack.c.b16 %v1349, %v1346
        %v1362 = vpack.c.b16 %v1353, %v1350
        %v1363 = vpack.c.b16 %v1354, %v1351
        %v1364 = vpack.c.b16 %v1355, %v1352
        %v1365 = vpack.c.b16 %v1356, %v1356
        %v1366 = vpack.c.b16 %v1357, %v1357
        %v1367 = vpack.c.b16 %v1358, %v1358
        %v1375 = vsel %vm839, %v1317, 0
        %v1378 = vsel %vm843, %v1365, 0
        %v1381 = vsel %vm843, %v1366, 0
        %v1384 = vsel %vm843, %v1367, 0
        %1386 = vmatprep.subr.bf16.mxu0 %v1360
        %1387 = vmatpush1.bf16.msra.mxu0 %v1359
        %1388 = vmatprep.subr.bf16.mxu0 %v1363
        %1389 = vmatpush1.bf16.msra.mxu0 %v1362
        %1390 = vmatprep.subr.bf16.mxu0 %v1381
        %1391 = vmatpush1.bf16.msra.mxu0 %v1378
        %1392 = vmatprep.subr.bf16.mxu0 0
        %1393 = vmatpush1.bf16.msra.mxu0 0
        %1394 = vmatprep.subr.bf16.mxu0 0
        %1395 = vmatpush1.bf16.msra.mxu0 0
        %1396 = vmatprep.subr.bf16.mxu0 0
        %1397 = vmatpush1.bf16.msra.mxu0 0
        %1398 = vmatprep.subr.bf16.mxu0 0
        %1399 = vmatpush1.bf16.msra.mxu0 0
        %1400 = vmatprep.subr.bf16.mxu0 0
        %1401 = vmatpush1.bf16.msra.mxu0 0
        %1402 = vmatprep.subr.bf16.mxu0 0
        %1403 = vmatpush1.bf16.msra.mxu0 0
        %1404 = vmatprep.subr.bf16.mxu0 0
        %1405 = vmatpush1.bf16.msra.mxu0 0
        %1406 = vmatprep.subr.bf16.mxu0 0
        %1407 = vmatpush1.bf16.msra.mxu0 0
        %1408 = vmatprep.subr.bf16.mxu0 0
        %1409 = vmatpush1.bf16.msra.mxu0 0
        %1410 = vmatprep.subr.bf16.mxu0 0
        %1411 = vmatpush1.bf16.msra.mxu0 0
        %1412 = vmatprep.subr.bf16.mxu0 0
        %1413 = vmatpush1.bf16.msra.mxu0 0
        %1414 = vmatprep.subr.bf16.mxu0 0
        %1415 = vmatpush1.bf16.msra.mxu0 0
        %1416 = vmatprep.subr.bf16.mxu0 0
        %1417 = vmatpush1.bf16.msra.mxu0 0
        %1418 = vmatprep.mubr.bf16.mxu0 0
        %1419 = vmatmul.mubr.bf16.gmra.mrb[0].mxu0 %v1375
        %v1420 = vpop.f32.mrb[0].mxu0
        %v1421 = vadd.f32 %v1332, %v1420
        %v1422 = vpop.f32.mrb[0].mxu0
        %v1423 = vadd.f32 %v1332, %v1422
        %v1424 = vpop.f32.mrb[0].mxu0
        %v1425 = vpop.f32.mrb[0].mxu0
        %1426 = vdwg.mxu0
        %1427 = vmatprep.subr.bf16.mxu0 0
        %1428 = vmatpush1.bf16.msra.mxu0 %v1361
        %1429 = vmatprep.subr.bf16.mxu0 0
        %1430 = vmatpush1.bf16.msra.mxu0 %v1364
        %1431 = vmatprep.subr.bf16.mxu0 0
        %1432 = vmatpush1.bf16.msra.mxu0 %v1384
        %1433 = vmatprep.subr.bf16.mxu0 0
        %1434 = vmatpush1.bf16.msra.mxu0 0
        %1435 = vmatprep.subr.bf16.mxu0 0
        %1436 = vmatpush1.bf16.msra.mxu0 0
        %1437 = vmatprep.subr.bf16.mxu0 0
        %1438 = vmatpush1.bf16.msra.mxu0 0
        %1439 = vmatprep.subr.bf16.mxu0 0
        %1440 = vmatpush1.bf16.msra.mxu0 0
        %1441 = vmatprep.subr.bf16.mxu0 0
        %1442 = vmatpush1.bf16.msra.mxu0 0
        %1443 = vmatprep.subr.bf16.mxu0 0
        %1444 = vmatpush1.bf16.msra.mxu0 0
        %1445 = vmatprep.subr.bf16.mxu0 0
        %1446 = vmatpush1.bf16.msra.mxu0 0
        %1447 = vmatprep.subr.bf16.mxu0 0
        %1448 = vmatpush1.bf16.msra.mxu0 0
        %1449 = vmatprep.subr.bf16.mxu0 0
        %1450 = vmatpush1.bf16.msra.mxu0 0
        %1451 = vmatprep.subr.bf16.mxu0 0
        %1452 = vmatpush1.bf16.msra.mxu0 0
        %1453 = vmatprep.subr.bf16.mxu0 0
        %1454 = vmatpush1.bf16.msra.mxu0 0
        %1455 = vmatprep.subr.bf16.mxu0 0
        %1456 = vmatpush1.bf16.msra.mxu0 0
        %1457 = vmatprep.subr.bf16.mxu0 0
        %1458 = vmatpush1.bf16.msra.mxu0 0
        %1459 = vmatprep.mubr.bf16.mxu0 0
        %1460 = vmatmul.mubr.bf16.gmra.mrb[0].mxu0 %v1375
        %v1461 = vpop.f32.mrb[0].mxu0
        %v1462 = vadd.f32 %v1332, %v1461
        %v1463 = vpop.f32.mrb[0].mxu0
        %v1464 = vpop.f32.mrb[0].mxu0
        %v1465 = vpop.f32.mrb[0].mxu0
        %1466 = vdwg.mxu0
        %vm1467 = vcmp.gt.f32.partialorder %v1421, 0.0
        %vm1468 = vcmp.gt.f32.partialorder %v1423, 0.0
        %vm1469 = vcmp.gt.f32.partialorder %v1462, 0.0
        %v1470 = vmul.f32 %v1421, 0.2
        %v1471 = vmul.f32 %v1423, 0.2
        %v1472 = vmul.f32 %v1462, 0.2
        %v1473 = vsel %vm1467, %v1421, %v1470
        %v1474 = vsel %vm1468, %v1423, %v1471
        %v1475 = vsel %vm1469, %v1462, %v1472
        %v1476 = vld [vmem:[#allocation12] sm:$0x3]
        %v1477 = vld [vmem:[%s412] sm:$0x3f]
        %v1478 = vld [vmem:[#allocation13] sm:$0xf]
        %1480 = vset.pattern.permute.xlu0 0
        %1481 = vperm.xlu0 %1480, %v1478
        %v1482 = vpop.permute.xlu0 %1481
        %v1485 = vcombine.high %v1477, %v1477
        %v1487 = vunpack.c.l.s4 1983009808
        %v1488 = vunpack.c.0.s8 %v1487
        %v1489 = vlaneseq
        %v1490 = vshrl.u32 %v1489, 7
        %v1491 = vsub.s32 %v1488, %v1490
        %v1492 = vrot.slane %v1477, %v1491
        %v1494 = vunpack.c.l.s4 1983009808
        %v1495 = vunpack.c.0.s8 %v1494
        %v1496 = vlaneseq
        %v1497 = vshrl.u32 %v1496, 7
        %v1498 = vsub.s32 %v1495, %v1497
        %v1499 = vrot.slane %v1485, %v1498
        %v1500 = vcombine.high %v1492, %v1492
        %vm1501 = vcmask 31744
        %v1503 = vsel %vm1501, %v1476, 0
        %v1506 = vsel %vm843, %v1492, 0
        %v1509 = vsel %vm843, %v1500, 0
        %v1512 = vsel %vm843, %v1499, 0
        %1514 = vmatprep.subr.bf16.mxu0 %v1509
        %1515 = vmatpush1.bf16.msra.mxu0 %v1506
        %1516 = vmatprep.subr.bf16.mxu0 0
        %1517 = vmatpush1.bf16.msra.mxu0 0
        %1518 = vmatprep.subr.bf16.mxu0 0
        %1519 = vmatpush1.bf16.msra.mxu0 0
        %1520 = vmatprep.subr.bf16.mxu0 0
        %1521 = vmatpush1.bf16.msra.mxu0 0
        %1522 = vmatprep.subr.bf16.mxu0 0
        %1523 = vmatpush1.bf16.msra.mxu0 0
        %1524 = vmatprep.subr.bf16.mxu0 0
        %1525 = vmatpush1.bf16.msra.mxu0 0
        %1526 = vmatprep.subr.bf16.mxu0 0
        %1527 = vmatpush1.bf16.msra.mxu0 0
        %1528 = vmatprep.subr.bf16.mxu0 0
        %1529 = vmatpush1.bf16.msra.mxu0 0
        %1530 = vmatprep.subr.bf16.mxu0 0
        %1531 = vmatpush1.bf16.msra.mxu0 0
        %1532 = vmatprep.subr.bf16.mxu0 0
        %1533 = vmatpush1.bf16.msra.mxu0 0
        %1534 = vmatprep.subr.bf16.mxu0 0
        %1535 = vmatpush1.bf16.msra.mxu0 0
        %1536 = vmatprep.subr.bf16.mxu0 0
        %1537 = vmatpush1.bf16.msra.mxu0 0
        %1538 = vmatprep.subr.bf16.mxu0 0
        %1539 = vmatpush1.bf16.msra.mxu0 0
        %1540 = vmatprep.subr.bf16.mxu0 0
        %1541 = vmatpush1.bf16.msra.mxu0 0
        %1542 = vmatprep.subr.bf16.mxu0 0
        %1543 = vmatpush1.bf16.msra.mxu0 0
        %1544 = vmatprep.subr.bf16.mxu0 0
        %1545 = vmatpush1.bf16.msra.mxu0 0
        %1546 = vmatprep.mubr.bf16.mxu0 0
        %1547 = vmatmul.mubr.bf16.gmra.mrb[0].mxu0 %v1503
        %v1548 = vpop.f32.mrb[0].mxu0
        %v1549 = vadd.f32 %v1482, %v1548
        %v1550 = vpop.f32.mrb[0].mxu0
        %v1551 = vadd.f32 %v1482, %v1550
        %v1552 = vpop.f32.mrb[0].mxu0
        %v1553 = vpop.f32.mrb[0].mxu0
        %1554 = vdwg.mxu0
        %1555 = vmatprep.subr.bf16.mxu0 0
        %1556 = vmatpush1.bf16.msra.mxu0 %v1512
        %1557 = vmatprep.subr.bf16.mxu0 0
        %1558 = vmatpush1.bf16.msra.mxu0 0
        %1559 = vmatprep.subr.bf16.mxu0 0
        %1560 = vmatpush1.bf16.msra.mxu0 0
        %1561 = vmatprep.subr.bf16.mxu0 0
        %1562 = vmatpush1.bf16.msra.mxu0 0
        %1563 = vmatprep.subr.bf16.mxu0 0
        %1564 = vmatpush1.bf16.msra.mxu0 0
        %1565 = vmatprep.subr.bf16.mxu0 0
        %1566 = vmatpush1.bf16.msra.mxu0 0
        %1567 = vmatprep.subr.bf16.mxu0 0
        %1568 = vmatpush1.bf16.msra.mxu0 0
        %1569 = vmatprep.subr.bf16.mxu0 0
        %1570 = vmatpush1.bf16.msra.mxu0 0
        %1571 = vmatprep.subr.bf16.mxu0 0
        %1572 = vmatpush1.bf16.msra.mxu0 0
        %1573 = vmatprep.subr.bf16.mxu0 0
        %1574 = vmatpush1.bf16.msra.mxu0 0
        %1575 = vmatprep.subr.bf16.mxu0 0
        %1576 = vmatpush1.bf16.msra.mxu0 0
        %1577 = vmatprep.subr.bf16.mxu0 0
        %1578 = vmatpush1.bf16.msra.mxu0 0
        %1579 = vmatprep.subr.bf16.mxu0 0
        %1580 = vmatpush1.bf16.msra.mxu0 0
        %1581 = vmatprep.subr.bf16.mxu0 0
        %1582 = vmatpush1.bf16.msra.mxu0 0
        %1583 = vmatprep.subr.bf16.mxu0 0
        %1584 = vmatpush1.bf16.msra.mxu0 0
        %1585 = vmatprep.subr.bf16.mxu0 0
        %1586 = vmatpush1.bf16.msra.mxu0 0
        %1587 = vmatprep.mubr.bf16.mxu0 0
        %1588 = vmatmul.mubr.bf16.gmra.mrb[0].mxu0 %v1503
        %v1589 = vpop.f32.mrb[0].mxu0
        %v1590 = vadd.f32 %v1482, %v1589
        %v1591 = vpop.f32.mrb[0].mxu0
        %v1592 = vpop.f32.mrb[0].mxu0
        %v1593 = vpop.f32.mrb[0].mxu0
        %1594 = vdwg.mxu0
        %v1595 = vadd.f32 %v1473, %v1549
        %v1596 = vadd.f32 %v1474, %v1551
        %v1597 = vadd.f32 %v1475, %v1590
        %v1600 = vcombine.low %v1595, %v1596
        %1602 = vst [vmem:[%s446] sm:$0xff] %v1600
        %1603 = vst [vmem:[%s446 + $0x8] sm:$0xf] %v1597
        %s1604 = sand.u32 %s230, 1
        %s1605 = scalar_lea.sflag [#allocation6], %s1604
        %s1606 = sand.u32 %s230, 1
        %s1607 = smul.addr %s1606, 12
        %s1608 = scalar_lea.vmem [#allocation19], %s1607
        // Predicated region
        $region93: #{tpu_custom_call.1} parent=55 // pred_check
          %p1609 = pneg %p240
        $region94: #{tpu_custom_call.1} parent=55 // pred_check_branch
          %1611 = sbr.rel (%p1609) target = $region96
        $region95: #{tpu_custom_call.1} parent=55 // pred_region
          %s1612 = smul.u32 3, %s28
          %s1614 = ssub.s32 192, 192
          %1615 = vsyncadd %s1605, %s1614
          %s1616 = smul.addr %s1612, 64
          %s1617 = scalar_lea.hbm %s9, %s1616
          %s1619 = sshll.u32 %s1608, 4
          %s1620 = int_to_ptr.vmem [resolvable:$true] %s1619
          %1622 = dma.vmem_to_hbm [thread:$0]  %s1620, 192, %s1617, %s1605
        $region96: #{tpu_custom_call.1} parent=55 // pred_fallthru
          _
      $region56: #{tpu_custom_call.1} parent=5 // pred_fallthru
        _
      %p1623 = scmp.le.s32.totalorder 2, %s23
      // Predicated region
      $region97: #{tpu_custom_call.1} parent=5 // pred_check
        %p1624 = pneg %p1623
      $region98: #{tpu_custom_call.1} parent=5 // pred_check_branch
        %1626 = sbr.rel (%p1624) target = $region100
      $region99: #{tpu_custom_call.1} parent=5 // pred_region
        %s1627 = ssub.s32 %s23, 2
        // Predicated region
        $region101: #{tpu_custom_call.1} parent=99 // pred_check
          %p1628 = pneg %p246
        $region102: #{tpu_custom_call.1} parent=99 // pred_check_branch
          %1630 = sbr.rel (%p1628) target = $region104
        $region103: #{tpu_custom_call.1} parent=99 // pred_region
          %s1631 = sand.u32 %s231, 1
          %s1632 = scalar_lea.sflag [#allocation6], %s1631
          %s1633 = sand.u32 %s231, 1
          %s1634 = smul.addr %s1633, 12
          %s1635 = scalar_lea.vmem [#allocation19], %s1634
          %1636 = dma.done %s1632, 192
        $region104: #{tpu_custom_call.1} parent=99 // pred_fallthru
          _
      $region100: #{tpu_custom_call.1} parent=5 // pred_fallthru
        _
    $region6: #{tpu_custom_call.1} parent=1 // loop_footer
      %s27 = sadd.s32 1, %s23
    $region7: #{tpu_custom_call.1} parent=1 // loop_footer_branch
      %22 = sbr.rel target = $region3
    $region8: #{tpu_custom_call.1} parent=1 // loop_exit
      _
    %1637 = vsyncpa [#allocation5], 1
    %s1638 = scalar_lea.sflag [#allocation5], 1
    %1639 = vsyncpa %s1638, 1
    %1640 = vsyncpa [#allocation8], 1
    %1641 = vsyncpa [#allocation11], 1
    %1642 = vsyncpa [#allocation14], 1
    %1643 = vsyncpa [#allocation17], 1
    %1644 = vsyncpa [#allocation6], 1
    %s1645 = scalar_lea.sflag [#allocation6], 1
    %1646 = vsyncpa %s1645, 1

// kernel: tpu_custom_call.1
$region0: #{tpu_custom_call.1}
  #allocation0 [shape = 'u32[]', space=smem, size = 0x4, offset = 0x4, fixed_abs, tag = 'smem constant byte address 0x4 - core index']
  #allocation1 [shape = 'u32[144,128]{1,0:T(1,128)}', space=vmem, size = 0x12000, scoped, tag = 'internal scratch']
  #allocation2 [shape = 'bf16[4,640]{1,0:T(4,128)(2,1)}', space=vmem, size = 0x1400, scoped, tag = 'scratch operand']
  #allocation3 [shape = 'bf16[36,384]{1,0:T(8,128)(2,1)}', space=vmem, size = 0x7800, scoped, tag = 'scratch operand']
  %s0 = inlined_call_operand.hbm [shape: bf16[4,36], index: 0, kind: input, shape index: {}]
  %s1 = inlined_call_operand.hbm [shape: f32[4,1], index: 1, kind: input, shape index: {}]
  %s2 = inlined_call_operand.hbm [shape: bf16[4,36], index: 2, kind: input, shape index: {}]
  %s3 = inlined_call_operand.hbm [shape: f32[4,1], index: 3, kind: input, shape index: {}]
  %s4 = inlined_call_operand.hbm [shape: bf16[4,4], index: 4, kind: input, shape index: {}]
  %s5 = inlined_call_operand.hbm [shape: f32[4,1], index: 5, kind: input, shape index: {}]
  %s6 = inlined_call_operand.hbm [shape: f32[2,1], index: 6, kind: input, shape index: {}]
  %s7 = inlined_call_operand.hbm [shape: f32[2,1], index: 7, kind: input, shape index: {}]
  %s8 = inlined_call_operand.hbm [shape: bf16[4,768], index: 8, kind: input, shape index: {}]
  %s9 = inlined_call_operand.hbm [shape: f32[4,768], index: 9, kind: output, shape index: {}]
  %s10 = sld [smem:[#allocation0]]
  $region105: #{tpu_custom_call.1} parent=0
    _
  %s12 = ssub.s32 1, %s10
  %s13 = scalar_select 0, %s12, %s10
  $region1: #{tpu_custom_call.1} parent=0
    #allocation4 [shape = 'u8[1024]{0}', space=vmem, size = 0x400, scoped, tag = 'input window, operand 0, single buffered']
    #allocation5 [shape = 's32[2]{0}', space=sflag, size = 0x8, scoped, tag = 'scoped memory for tpu_custom_call.1']
    #allocation6 [shape = 's32[2]{0}', space=sflag, size = 0x8, scoped, tag = 'scoped memory for tpu_custom_call.1']
    #allocation7 [shape = 'u8[2048]{0}', space=vmem, size = 0x800, scoped, tag = 'input window, operand 1, single buffered']
    #allocation8 [shape = 's32[1]{0}', space=sflag, size = 0x4, scoped, tag = 'scoped memory for tpu_custom_call.1']
    #allocation9 [shape = 'u8[1024]{0}', space=vmem, size = 0x400, scoped, tag = 'input window, operand 2, single buffered']
    #allocation10 [shape = 'u8[2048]{0}', space=vmem, size = 0x800, scoped, tag = 'input window, operand 3, single buffered']
    #allocation11 [shape = 's32[1]{0}', space=sflag, size = 0x4, scoped, tag = 'scoped memory for tpu_custom_call.1']
    #allocation12 [shape = 'u8[1024]{0}', space=vmem, size = 0x400, scoped, tag = 'input window, operand 4, single buffered']
    #allocation13 [shape = 'u8[2048]{0}', space=vmem, size = 0x800, scoped, tag = 'input window, operand 5, single buffered']
    #allocation14 [shape = 's32[1]{0}', space=sflag, size = 0x4, scoped, tag = 'scoped memory for tpu_custom_call.1']
    #allocation15 [shape = 'u8[1024]{0}', space=vmem, size = 0x400, scoped, tag = 'input window, operand 6, single buffered']
    #allocation16 [shape = 'u8[1024]{0}', space=vmem, size = 0x400, scoped, tag = 'input window, operand 7, single buffered']
    #allocation17 [shape = 's32[1]{0}', space=sflag, size = 0x4, scoped, tag = 'scoped memory for tpu_custom_call.1']
    #allocation18 [shape = 'u8[6144]{0}', space=vmem, size = 0x1800, scoped, tag = 'input window, operand 8']
    #allocation19 [shape = 'u8[12288]{0}', space=vmem, size = 0x3000, scoped, tag = 'output window, operand 0']
    %14 = vsyncpa [#allocation5], 0
    %15 = vsyncpa [#allocation8], 0
    %16 = vsyncpa [#allocation11], 0
    %17 = vsyncpa [#allocation14], 0
    %18 = vsyncpa [#allocation17], 0
    %19 = vsyncpa [#allocation6], 0
    %s20 = scalar_lea.sflag [#allocation6], 1
    %21 = vsyncpa %s20, 0
    loop: start=0, step=1, limit=4
    $region2: #{tpu_custom_call.1} parent=1 // loop_pre_header
      _
    $region3: #{tpu_custom_call.1} parent=1 // loop_header
      %s23 = sphi 0, %s27
      %p24 = scmp.ge.s32.totalorder %s23, 4
      %s31 = sphi 0, %s31
      %s33 = sphi 0, %s31
      %s34 = sphi 0, %s33
      %s48 = sphi 0, %s34
      %s52 = sphi 0, %s52
      %s54 = sphi 0, %s52
      %s55 = sphi 0, %s54
      %s69 = sphi 0, %s55
      %s73 = sphi 0, %s73
      %s75 = sphi 0, %s73
      %s76 = sphi 0, %s75
      %s90 = sphi 0, %s76
      %s94 = sphi 0, %s94
      %s96 = sphi 0, %s94
      %s97 = sphi 0, %s96
      %s111 = sphi 0, %s97
      %s115 = sphi 0, %s115
      %s117 = sphi 0, %s115
      %s118 = sphi 0, %s117
      %s132 = sphi 0, %s118
      %s136 = sphi 0, %s136
      %s138 = sphi 0, %s136
      %s139 = sphi 0, %s138
      %s153 = sphi 0, %s139
      %s157 = sphi 0, %s157
      %s159 = sphi 0, %s157
      %s160 = sphi 0, %s159
      %s174 = sphi 0, %s160
      %s178 = sphi 0, %s178
      %s180 = sphi 0, %s178
      %s181 = sphi 0, %s180
      %s195 = sphi 0, %s181
      %s201 = sphi 0, %s203
      %s204 = sphi 0, %s201
      %s205 = sphi 0, %s204
      %s221 = sphi 0, %s205
      %s227 = sphi 0, %s229
      %s230 = sphi 0, %s227
      %s231 = sphi 0, %s230
      %s247 = sphi 0, %s231
    $region4: #{tpu_custom_call.1} parent=1 // loop_header_branch
      %26 = sbr.rel (%p24) target = $region8
    $region5: #{tpu_custom_call.1} parent=1 // loop_body
      %s28 = ssub.s32 %s23, 1
      %s29 = ssub.s32 %s23, 2
      %s30 = sadd.s32 %s23, 1
      %s32 = sadd.s32 %s31, 1
      %p35 = scmp.eq.s32.totalorder %s23, 1
      %p36 = scmp.ne.s32.totalorder %s31, %s33
      %p37 = scmp.eq.s32.totalorder %s23, 0
      %p38 = por %p36, %p37
      %p39 = scmp.ne.s32.totalorder %s31, %s33
      %p40 = scmp.eq.s32.totalorder %s28, 1
      %p41 = por %p39, %p40
      %p42 = scmp.ne.s32.totalorder %s33, %s34
      %p43 = scmp.eq.s32.totalorder %s28, 0
      %p44 = por %p42, %p43
      %p45 = scmp.ne.s32.totalorder %s33, %s34
      %p46 = scmp.eq.s32.totalorder %s29, 1
      %p47 = por %p45, %p46
      %p49 = scmp.ne.s32.totalorder %s34, %s48
      %p50 = scmp.eq.s32.totalorder %s29, 0
      %p51 = por %p49, %p50
      %s53 = sadd.s32 %s52, 1
      %p56 = scmp.eq.s32.totalorder %s23, 1
      %p57 = scmp.ne.s32.totalorder %s52, %s54
      %p58 = scmp.eq.s32.totalorder %s23, 0
      %p59 = por %p57, %p58
      %p60 = scmp.ne.s32.totalorder %s52, %s54
      %p61 = scmp.eq.s32.totalorder %s28, 1
      %p62 = por %p60, %p61
      %p63 = scmp.ne.s32.totalorder %s54, %s55
      %p64 = scmp.eq.s32.totalorder %s28, 0
      %p65 = por %p63, %p64
      %p66 = scmp.ne.s32.totalorder %s54, %s55
      %p67 = scmp.eq.s32.totalorder %s29, 1
      %p68 = por %p66, %p67
      %p70 = scmp.ne.s32.totalorder %s55, %s69
      %p71 = scmp.eq.s32.totalorder %s29, 0
      %p72 = por %p70, %p71
      %s74 = sadd.s32 %s73, 1
      %p77 = scmp.eq.s32.totalorder %s23, 1
      %p78 = scmp.ne.s32.totalorder %s73, %s75
      %p79 = scmp.eq.s32.totalorder %s23, 0
      %p80 = por %p78, %p79
      %p81 = scmp.ne.s32.totalorder %s73, %s75
      %p82 = scmp.eq.s32.totalorder %s28, 1
      %p83 = por %p81, %p82
      %p84 = scmp.ne.s32.totalorder %s75, %s76
      %p85 = scmp.eq.s32.totalorder %s28, 0
      %p86 = por %p84, %p85
      %p87 = scmp.ne.s32.totalorder %s75, %s76
      %p88 = scmp.eq.s32.totalorder %s29, 1
      %p89 = por %p87, %p88
      %p91 = scmp.ne.s32.totalorder %s76, %s90
      %p92 = scmp.eq.s32.totalorder %s29, 0
      %p93 = por %p91, %p92
      %s95 = sadd.s32 %s94, 1
      %p98 = scmp.eq.s32.totalorder %s23, 1
      %p99 = scmp.ne.s32.totalorder %s94, %s96
      %p100 = scmp.eq.s32.totalorder %s23, 0
      %p101 = por %p99, %p100
      %p102 = scmp.ne.s32.totalorder %s94, %s96
      %p103 = scmp.eq.s32.totalorder %s28, 1
      %p104 = por %p102, %p103
      %p105 = scmp.ne.s32.totalorder %s96, %s97
      %p106 = scmp.eq.s32.totalorder %s28, 0
      %p107 = por %p105, %p106
      %p108 = scmp.ne.s32.totalorder %s96, %s97
      %p109 = scmp.eq.s32.totalorder %s29, 1
      %p110 = por %p108, %p109
      %p112 = scmp.ne.s32.totalorder %s97, %s111
      %p113 = scmp.eq.s32.totalorder %s29, 0
      %p114 = por %p112, %p113
      %s116 = sadd.s32 %s115, 1
      %p119 = scmp.eq.s32.totalorder %s23, 1
      %p120 = scmp.ne.s32.totalorder %s115, %s117
      %p121 = scmp.eq.s32.totalorder %s23, 0
      %p122 = por %p120, %p121
      %p123 = scmp.ne.s32.totalorder %s115, %s117
      %p124 = scmp.eq.s32.totalorder %s28, 1
      %p125 = por %p123, %p124
      %p126 = scmp.ne.s32.totalorder %s117, %s118
      %p127 = scmp.eq.s32.totalorder %s28, 0
      %p128 = por %p126, %p127
      %p129 = scmp.ne.s32.totalorder %s117, %s118
      %p130 = scmp.eq.s32.totalorder %s29, 1
      %p131 = por %p129, %p130
      %p133 = scmp.ne.s32.totalorder %s118, %s132
      %p134 = scmp.eq.s32.totalorder %s29, 0
      %p135 = por %p133, %p134
      %s137 = sadd.s32 %s136, 1
      %p140 = scmp.eq.s32.totalorder %s23, 1
      %p141 = scmp.ne.s32.totalorder %s136, %s138
      %p142 = scmp.eq.s32.totalorder %s23, 0
      %p143 = por %p141, %p142
      %p144 = scmp.ne.s32.totalorder %s136, %s138
      %p145 = scmp.eq.s32.totalorder %s28, 1
      %p146 = por %p144, %p145
      %p147 = scmp.ne.s32.totalorder %s138, %s139
      %p148 = scmp.eq.s32.totalorder %s28, 0
      %p149 = por %p147, %p148
      %p150 = scmp.ne.s32.totalorder %s138, %s139
      %p151 = scmp.eq.s32.totalorder %s29, 1
      %p152 = por %p150, %p151
      %p154 = scmp.ne.s32.totalorder %s139, %s153
      %p155 = scmp.eq.s32.totalorder %s29, 0
      %p156 = por %p154, %p155
      %s158 = sadd.s32 %s157, 1
      %p161 = scmp.eq.s32.totalorder %s23, 1
      %p162 = scmp.ne.s32.totalorder %s157, %s159
      %p163 = scmp.eq.s32.totalorder %s23, 0
      %p164 = por %p162, %p163
      %p165 = scmp.ne.s32.totalorder %s157, %s159
      %p166 = scmp.eq.s32.totalorder %s28, 1
      %p167 = por %p165, %p166
      %p168 = scmp.ne.s32.totalorder %s159, %s160
      %p169 = scmp.eq.s32.totalorder %s28, 0
      %p170 = por %p168, %p169
      %p171 = scmp.ne.s32.totalorder %s159, %s160
      %p172 = scmp.eq.s32.totalorder %s29, 1
      %p173 = por %p171, %p172
      %p175 = scmp.ne.s32.totalorder %s160, %s174
      %p176 = scmp.eq.s32.totalorder %s29, 0
      %p177 = por %p175, %p176
      %s179 = sadd.s32 %s178, 1
      %p182 = scmp.eq.s32.totalorder %s23, 1
      %p183 = scmp.ne.s32.totalorder %s178, %s180
      %p184 = scmp.eq.s32.totalorder %s23, 0
      %p185 = por %p183, %p184
      %p186 = scmp.ne.s32.totalorder %s178, %s180
      %p187 = scmp.eq.s32.totalorder %s28, 1
      %p188 = por %p186, %p187
      %p189 = scmp.ne.s32.totalorder %s180, %s181
      %p190 = scmp.eq.s32.totalorder %s28, 0
      %p191 = por %p189, %p190
      %p192 = scmp.ne.s32.totalorder %s180, %s181
      %p193 = scmp.eq.s32.totalorder %s29, 1
      %p194 = por %p192, %p193
      %p196 = scmp.ne.s32.totalorder %s181, %s195
      %p197 = scmp.eq.s32.totalorder %s29, 0
      %p198 = por %p196, %p197
      %s199 = ssub.s32 %s23, %s30
      %p200 = scmp.eq.s32.totalorder %s199, 0
      %s202 = sadd.s32 %s201, 1
      %s203 = scalar_select %p200, %s201, %s202
      %p206 = pneg %p200
      %p207 = scmp.eq.s32.totalorder %s23, 1
      %p208 = por %p206, %p207
      %p209 = scmp.ne.s32.totalorder %s201, %s204
      %p210 = scmp.eq.s32.totalorder %s23, 0
      %p211 = por %p209, %p210
      %p212 = scmp.ne.s32.totalorder %s201, %s204
      %p213 = scmp.eq.s32.totalorder %s28, 1
      %p214 = por %p212, %p213
      %p215 = scmp.ne.s32.totalorder %s204, %s205
      %p216 = scmp.eq.s32.totalorder %s28, 0
      %p217 = por %p215, %p216
      %p218 = scmp.ne.s32.totalorder %s204, %s205
      %p219 = scmp.eq.s32.totalorder %s29, 1
      %p220 = por %p218, %p219
      %p222 = scmp.ne.s32.totalorder %s205, %s221
      %p223 = scmp.eq.s32.totalorder %s29, 0
      %p224 = por %p222, %p223
      %s225 = ssub.s32 %s23, %s30
      %p226 = scmp.eq.s32.totalorder %s225, 0
      %s228 = sadd.s32 %s227, 1
      %s229 = scalar_select %p226, %s227, %s228
      %p232 = pneg %p226
      %p233 = scmp.eq.s32.totalorder %s23, 1
      %p234 = por %p232, %p233
      %p235 = scmp.ne.s32.totalorder %s227, %s230
      %p236 = scmp.eq.s32.totalorder %s23, 0
      %p237 = por %p235, %p236
      %p238 = scmp.ne.s32.totalorder %s227, %s230
      %p239 = scmp.eq.s32.totalorder %s28, 1
      %p240 = por %p238, %p239
      %p241 = scmp.ne.s32.totalorder %s230, %s231
      %p242 = scmp.eq.s32.totalorder %s28, 0
      %p243 = por %p241, %p242
      %p244 = scmp.ne.s32.totalorder %s230, %s231
      %p245 = scmp.eq.s32.totalorder %s29, 1
      %p246 = por %p244, %p245
      %p248 = scmp.ne.s32.totalorder %s231, %s247
      %p249 = scmp.eq.s32.totalorder %s29, 0
      %p250 = por %p248, %p249
      %p251 = scmp.le.s32.totalorder 1, %s23
      %p252 = scmp.lt.s32.totalorder %s23, 3
      %p253 = pnand %p251, %p252
      %p254 = pneg %p253
      // Predicated region
      $region9: #{tpu_custom_call.1} parent=5 // pred_check
        _
      $region10: #{tpu_custom_call.1} parent=5 // pred_check_branch
        %256 = sbr.rel (%p253) target = $region12
      $region11: #{tpu_custom_call.1} parent=5 // pred_region
        %s257 = ssub.s32 %s23, 1
        // Predicated region
        $region13: #{tpu_custom_call.1} parent=11 // pred_check
          %p258 = pneg %p44
        $region14: #{tpu_custom_call.1} parent=11 // pred_check_branch
          %260 = sbr.rel (%p258) target = $region16
        $region15: #{tpu_custom_call.1} parent=11 // pred_region
          %s262 = ssub.s32 32, 32
          %263 = vsyncadd [#allocation5], %s262
          %s265 = sshll.u32 [#allocation4], 4
          %s266 = int_to_ptr.vmem [resolvable:$true] %s265
          %268 = dma.hbm_to_vmem [thread:$0]  %s0, 32, %s266, [#allocation5]
        $region16: #{tpu_custom_call.1} parent=11 // pred_fallthru
          _
        // Predicated region
        $region17: #{tpu_custom_call.1} parent=11 // pred_check
          %p269 = pneg %p65
        $region18: #{tpu_custom_call.1} parent=11 // pred_check_branch
          %271 = sbr.rel (%p269) target = $region20
        $region19: #{tpu_custom_call.1} parent=11 // pred_region
          %s273 = ssub.s32 64, 64
          %274 = vsyncadd [#allocation8], %s273
          %s276 = sshll.u32 [#allocation7], 4
          %s277 = int_to_ptr.vmem [resolvable:$true] %s276
          %279 = dma.hbm_to_vmem [thread:$0]  %s1, 64, %s277, [#allocation8]
        $region20: #{tpu_custom_call.1} parent=11 // pred_fallthru
          _
        // Predicated region
        $region21: #{tpu_custom_call.1} parent=11 // pred_check
          %p280 = pneg %p86
        $region22: #{tpu_custom_call.1} parent=11 // pred_check_branch
          %282 = sbr.rel (%p280) target = $region24
        $region23: #{tpu_custom_call.1} parent=11 // pred_region
          %s284 = ssub.s32 32, 32
          %285 = vsyncadd [#allocation8], %s284
          %s287 = sshll.u32 [#allocation9], 4
          %s288 = int_to_ptr.vmem [resolvable:$true] %s287
          %290 = dma.hbm_to_vmem [thread:$0]  %s2, 32, %s288, [#allocation8]
        $region24: #{tpu_custom_call.1} parent=11 // pred_fallthru
          _
        // Predicated region
        $region25: #{tpu_custom_call.1} parent=11 // pred_check
          %p291 = pneg %p107
        $region26: #{tpu_custom_call.1} parent=11 // pred_check_branch
          %293 = sbr.rel (%p291) target = $region28
        $region27: #{tpu_custom_call.1} parent=11 // pred_region
          %s295 = ssub.s32 64, 64
          %296 = vsyncadd [#allocation11], %s295
          %s298 = sshll.u32 [#allocation10], 4
          %s299 = int_to_ptr.vmem [resolvable:$true] %s298
          %301 = dma.hbm_to_vmem [thread:$0]  %s3, 64, %s299, [#allocation11]
        $region28: #{tpu_custom_call.1} parent=11 // pred_fallthru
          _
        // Predicated region
        $region29: #{tpu_custom_call.1} parent=11 // pred_check
          %p302 = pneg %p128
        $region30: #{tpu_custom_call.1} parent=11 // pred_check_branch
          %304 = sbr.rel (%p302) target = $region32
        $region31: #{tpu_custom_call.1} parent=11 // pred_region
          %s306 = ssub.s32 32, 32
          %307 = vsyncadd [#allocation11], %s306
          %s309 = sshll.u32 [#allocation12], 4
          %s310 = int_to_ptr.vmem [resolvable:$true] %s309
          %312 = dma.hbm_to_vmem [thread:$0]  %s4, 32, %s310, [#allocation11]
        $region32: #{tpu_custom_call.1} parent=11 // pred_fallthru
          _
        // Predicated region
        $region33: #{tpu_custom_call.1} parent=11 // pred_check
          %p313 = pneg %p149
        $region34: #{tpu_custom_call.1} parent=11 // pred_check_branch
          %315 = sbr.rel (%p313) target = $region36
        $region35: #{tpu_custom_call.1} parent=11 // pred_region
          %s317 = ssub.s32 64, 64
          %318 = vsyncadd [#allocation14], %s317
          %s320 = sshll.u32 [#allocation13], 4
          %s321 = int_to_ptr.vmem [resolvable:$true] %s320
          %323 = dma.hbm_to_vmem [thread:$0]  %s5, 64, %s321, [#allocation14]
        $region36: #{tpu_custom_call.1} parent=11 // pred_fallthru
          _
        // Predicated region
        $region37: #{tpu_custom_call.1} parent=11 // pred_check
          %p324 = pneg %p170
        $region38: #{tpu_custom_call.1} parent=11 // pred_check_branch
          %326 = sbr.rel (%p324) target = $region40
        $region39: #{tpu_custom_call.1} parent=11 // pred_region
          %s328 = ssub.s32 32, 32
          %329 = vsyncadd [#allocation14], %s328
          %s331 = sshll.u32 [#allocation15], 4
          %s332 = int_to_ptr.vmem [resolvable:$true] %s331
          %334 = dma.hbm_to_vmem [thread:$0]  %s6, 32, %s332, [#allocation14]
        $region40: #{tpu_custom_call.1} parent=11 // pred_fallthru
          _
        // Predicated region
        $region41: #{tpu_custom_call.1} parent=11 // pred_check
          %p335 = pneg %p191
        $region42: #{tpu_custom_call.1} parent=11 // pred_check_branch
          %337 = sbr.rel (%p335) target = $region44
        $region43: #{tpu_custom_call.1} parent=11 // pred_region
          %s339 = ssub.s32 32, 32
          %340 = vsyncadd [#allocation17], %s339
          %s342 = sshll.u32 [#allocation16], 4
          %s343 = int_to_ptr.vmem [resolvable:$true] %s342
          %345 = dma.hbm_to_vmem [thread:$0]  %s7, 32, %s343, [#allocation17]
        $region44: #{tpu_custom_call.1} parent=11 // pred_fallthru
          _
      $region12: #{tpu_custom_call.1} parent=5 // pred_fallthru
        _
      %p346 = scmp.lt.s32.totalorder %s23, 2
      // Predicated region
      $region45: #{tpu_custom_call.1} parent=5 // pred_check
        %p347 = pneg %p346
      $region46: #{tpu_custom_call.1} parent=5 // pred_check_branch
        %349 = sbr.rel (%p347) target = $region48
      $region47: #{tpu_custom_call.1} parent=5 // pred_region
        // Predicated region
        $region49: #{tpu_custom_call.1} parent=47 // pred_check
          %p350 = pneg %p211
        $region50: #{tpu_custom_call.1} parent=47 // pred_check_branch
          %352 = sbr.rel (%p350) target = $region52
        $region51: #{tpu_custom_call.1} parent=47 // pred_region
          %s353 = sand.u32 %s23, 1
          %s354 = scalar_lea.sflag [#allocation5], %s353
          %s355 = sand.u32 %s201, 1
          %s356 = smul.addr %s355, 6
          %s357 = scalar_lea.vmem [#allocation18], %s356
          %s358 = smul.u32 3, %s23
          %s360 = ssub.s32 96, 96
          %361 = vsyncadd %s354, %s360
          %s362 = smul.addr %s358, 32
          %s363 = scalar_lea.hbm %s8, %s362
          %s365 = sshll.u32 %s357, 4
          %s366 = int_to_ptr.vmem [resolvable:$true] %s365
          %368 = dma.hbm_to_vmem [thread:$0]  %s363, 96, %s366, %s354
        $region52: #{tpu_custom_call.1} parent=47 // pred_fallthru
          _
      $region48: #{tpu_custom_call.1} parent=5 // pred_fallthru
        _
      %p369 = scmp.le.s32.totalorder 1, %s23
      %p370 = scmp.lt.s32.totalorder %s23, 3
      %p371 = pnand %p369, %p370
      %p372 = pneg %p371
      // Predicated region
      $region53: #{tpu_custom_call.1} parent=5 // pred_check
        _
      $region54: #{tpu_custom_call.1} parent=5 // pred_check_branch
        %374 = sbr.rel (%p371) target = $region56
      $region55: #{tpu_custom_call.1} parent=5 // pred_region
        %s375 = ssub.s32 %s23, 1
        // Predicated region
        $region57: #{tpu_custom_call.1} parent=55 // pred_check
          %p376 = pneg %p44
        $region58: #{tpu_custom_call.1} parent=55 // pred_check_branch
          %378 = sbr.rel (%p376) target = $region60
        $region59: #{tpu_custom_call.1} parent=55 // pred_region
          %379 = dma.done [#allocation5], 32
        $region60: #{tpu_custom_call.1} parent=55 // pred_fallthru
          _
        // Predicated region
        $region61: #{tpu_custom_call.1} parent=55 // pred_check
          %p380 = pneg %p65
        $region62: #{tpu_custom_call.1} parent=55 // pred_check_branch
          %382 = sbr.rel (%p380) target = $region64
        $region63: #{tpu_custom_call.1} parent=55 // pred_region
          %383 = dma.done [#allocation8], 64
        $region64: #{tpu_custom_call.1} parent=55 // pred_fallthru
          _
        // Predicated region
        $region65: #{tpu_custom_call.1} parent=55 // pred_check
          %p384 = pneg %p86
        $region66: #{tpu_custom_call.1} parent=55 // pred_check_branch
          %386 = sbr.rel (%p384) target = $region68
        $region67: #{tpu_custom_call.1} parent=55 // pred_region
          %387 = dma.done [#allocation8], 32
        $region68: #{tpu_custom_call.1} parent=55 // pred_fallthru
          _
        // Predicated region
        $region69: #{tpu_custom_call.1} parent=55 // pred_check
          %p388 = pneg %p107
        $region70: #{tpu_custom_call.1} parent=55 // pred_check_branch
          %390 = sbr.rel (%p388) target = $region72
        $region71: #{tpu_custom_call.1} parent=55 // pred_region
          %391 = dma.done [#allocation11], 64
        $region72: #{tpu_custom_call.1} parent=55 // pred_fallthru
          _
        // Predicated region
        $region73: #{tpu_custom_call.1} parent=55 // pred_check
          %p392 = pneg %p128
        $region74: #{tpu_custom_call.1} parent=55 // pred_check_branch
          %394 = sbr.rel (%p392) target = $region76
        $region75: #{tpu_custom_call.1} parent=55 // pred_region
          %395 = dma.done [#allocation11], 32
        $region76: #{tpu_custom_call.1} parent=55 // pred_fallthru
          _
        // Predicated region
        $region77: #{tpu_custom_call.1} parent=55 // pred_check
          %p396 = pneg %p149
        $region78: #{tpu_custom_call.1} parent=55 // pred_check_branch
          %398 = sbr.rel (%p396) target = $region80
        $region79: #{tpu_custom_call.1} parent=55 // pred_region
          %399 = dma.done [#allocation14], 64
        $region80: #{tpu_custom_call.1} parent=55 // pred_fallthru
          _
        // Predicated region
        $region81: #{tpu_custom_call.1} parent=55 // pred_check
          %p400 = pneg %p170
        $region82: #{tpu_custom_call.1} parent=55 // pred_check_branch
          %402 = sbr.rel (%p400) target = $region84
        $region83: #{tpu_custom_call.1} parent=55 // pred_region
          %403 = dma.done [#allocation14], 32
        $region84: #{tpu_custom_call.1} parent=55 // pred_fallthru
          _
        // Predicated region
        $region85: #{tpu_custom_call.1} parent=55 // pred_check
          %p404 = pneg %p191
        $region86: #{tpu_custom_call.1} parent=55 // pred_check_branch
          %406 = sbr.rel (%p404) target = $region88
        $region87: #{tpu_custom_call.1} parent=55 // pred_region
          %407 = dma.done [#allocation17], 32
        $region88: #{tpu_custom_call.1} parent=55 // pred_fallthru
          _
        %s408 = sand.u32 %s28, 1
        %s409 = scalar_lea.sflag [#allocation5], %s408
        %s410 = sand.u32 %s204, 1
        %s411 = smul.addr %s410, 6
        %s412 = scalar_lea.vmem [#allocation18], %s411
        // Predicated region
        $region89: #{tpu_custom_call.1} parent=55 // pred_check
          %p413 = pneg %p217
        $region90: #{tpu_custom_call.1} parent=55 // pred_check_branch
          %415 = sbr.rel (%p413) target = $region92
        $region91: #{tpu_custom_call.1} parent=55 // pred_region
          %416 = dma.done %s409, 96
        $region92: #{tpu_custom_call.1} parent=55 // pred_fallthru
          _
        %p417 = pneg %p44
        %p418 = pneg %p41
        %p419 = pneg %p65
        %p420 = pneg %p62
        %p421 = pneg %p86
        %p422 = pneg %p83
        %p423 = pneg %p107
        %p424 = pneg %p104
        %p425 = pneg %p128
        %p426 = pneg %p125
        %p427 = pneg %p149
        %p428 = pneg %p146
        %p429 = pneg %p170
        %p430 = pneg %p167
        %p431 = pneg %p191
        %p432 = pneg %p188
        %s433 = sand.u32 %s28, 1
        %s434 = scalar_lea.sflag [#allocation5], %s433
        %s435 = sand.u32 %s204, 1
        %s436 = smul.addr %s435, 6
        %s437 = scalar_lea.vmem [#allocation18], %s436
        %p438 = pneg %p217
        %p439 = pneg %p214
        %p440 = pneg %p243
        %p441 = pneg %p240
        %s442 = sand.u32 %s230, 1
        %s443 = scalar_lea.sflag [#allocation6], %s442
        %s444 = sand.u32 %s230, 1
        %s445 = smul.addr %s444, 12
        %s446 = scalar_lea.vmem [#allocation19], %s445
        %s447 = smul.u32 3, %s28
        %s448 = smul.u32 3, %s28
        %v450 = vlaneseq
        %v451 = vand.u32 %v450, 127
        %v452 = vadd.s32 %v451, 128
        %v453 = vadd.s32 %v451, 256
        %v454 = vcvt.s32.f32 %v451
        %v455 = vcvt.s32.f32 %v452
        %v456 = vcvt.s32.f32 %v453
        %v457 = vadd.f32 %v454, 0.5
        %v458 = vadd.f32 %v455, 0.5
        %v459 = vadd.f32 %v456, 0.5
        %v460 = vmul.f32 %v457, 0.055555556
        %v461 = vmul.f32 %v458, 0.055555556
        %v462 = vmul.f32 %v459, 0.055555556
        %v463 = vfloor.f32 %v460
        %v464 = vfloor.f32 %v461
        %v465 = vfloor.f32 %v462
        %v466 = vcvt.f32.s32.to.zero.pseudo %v463
        %v467 = vcvt.f32.s32.to.zero.pseudo %v464
        %v468 = vcvt.f32.s32.to.zero.pseudo %v465
        %v469 = vmul.u32 %v466, 18
        %v470 = vmul.u32 %v467, 18
        %v471 = vmul.u32 %v468, 18
        %v472 = vsub.s32 %v451, %v469
        %v473 = vsub.s32 %v452, %v470
        %v474 = vsub.s32 %v453, %v471
        %vm475 = vcmp.lt.s32.totalorder %v451, 324
        %vm476 = vcmp.lt.s32.totalorder %v452, 324
        %vm477 = vcmp.lt.s32.totalorder %v453, 324
        %vm478 = vcmp.ge.s32.totalorder %v466, 1
        %vm479 = vcmp.ge.s32.totalorder %v467, 1
        %vm480 = vcmp.ge.s32.totalorder %v468, 1
        %vm481 = vmand %vm475, %vm478
        %vm482 = vmand %vm476, %vm479
        %vm483 = vmand %vm477, %vm480
        %vm484 = vcmp.le.s32.totalorder %v466, 16
        %vm485 = vcmp.le.s32.totalorder %v467, 16
        %vm486 = vcmp.le.s32.totalorder %v468, 16
        %vm487 = vmand %vm481, %vm484
        %vm488 = vmand %vm482, %vm485
        %vm489 = vmand %vm483, %vm486
        %vm490 = vcmp.ge.s32.totalorder %v472, 1
        %vm491 = vcmp.ge.s32.totalorder %v473, 1
        %vm492 = vcmp.ge.s32.totalorder %v474, 1
        %vm493 = vmand %vm487, %vm490
        %vm494 = vmand %vm488, %vm491
        %vm495 = vmand %vm489, %vm492
        %vm496 = vcmp.le.s32.totalorder %v472, 16
        %vm497 = vcmp.le.s32.totalorder %v473, 16
        %vm498 = vcmp.le.s32.totalorder %v474, 16
        %vm499 = vmand %vm493, %vm496
        %vm500 = vmand %vm494, %vm497
        %vm501 = vmand %vm495, %vm498
        %v502 = vsel %vm499, 1, 0
        %v503 = vsel %vm500, 1, 0
        %v504 = vsel %vm501, 1, 0
        %v505 = vcvt.s32.f32 %v502
        %v506 = vcvt.s32.f32 %v503
        %v507 = vcvt.s32.f32 %v504
        %508 = vst [vmem:[#allocation2] sm:$0x3] 0
        %509 = vst [vmem:[#allocation2 + $0x8] sm:$0x3] 0
        %v510 = vld [vmem:[%s412] sm:$0x3f]
        %511 = vst [vmem:[#allocation2 + $0x2] sm:$0x3f] %v510
        %v512 = vld [vmem:[#allocation2] sm:$0xff]
        %v514 = vcombine.high %v512, %v512
        %v516 = vunpack.c.l.s4 1983009808
        %v517 = vunpack.c.0.s8 %v516
        %v518 = vlaneseq
        %v519 = vshrl.u32 %v518, 7
        %v520 = vsub.s32 %v517, %v519
        %v521 = vrot.slane %v512, %v520
        %v523 = vunpack.c.l.s4 1983009808
        %v524 = vunpack.c.0.s8 %v523
        %v525 = vlaneseq
        %v526 = vshrl.u32 %v525, 7
        %v527 = vsub.s32 %v524, %v526
        %v528 = vrot.slane %v514, %v527
        %529 = vrot.lane.b32.xlu0 %v521, 19
        %v530 = vpop.permute.xlu0 %529
        %531 = vrot.lane.b32.xlu0 %v528, 19
        %v532 = vpop.permute.xlu0 %531
        %v533 = vrot.slane %v530, 4
        %v534 = vrot.slane %v532, 4
        %vm535 = vcmask 1043456
        %v536 = vsel %vm535, %v533, %v534
        %vm537 = vcmask 154624
        %v538 = vsel %vm537, %v530, %v536
        %v539 = vsel %vm537, %v532, %v534
        %542 = vst [vmem:[#allocation3] sm:$0x33] %v538
        %543 = vst [vmem:[#allocation3 + $0x8] sm:$0x3] %v539
        %v544 = vld [vmem:[#allocation2] sm:$0xff]
        %v546 = vcombine.low %v544, %v544
        %v548 = vunpack.c.l.s4 1983009808
        %v549 = vunpack.c.0.s8 %v548
        %v550 = vlaneseq
        %v551 = vshrl.u32 %v550, 7
        %v552 = vsub.s32 %v549, %v551
        %v553 = vrot.slane %v546, %v552
        %v555 = vunpack.c.l.s4 1983009808
        %v556 = vunpack.c.0.s8 %v555
        %v557 = vlaneseq
        %v558 = vshrl.u32 %v557, 7
        %v559 = vsub.s32 %v556, %v558
        %v560 = vrot.slane %v544, %v559
        %561 = vrot.lane.b32.xlu0 %v553, 18
        %v562 = vpop.permute.xlu0 %561
        %563 = vrot.lane.b32.xlu0 %v560, 18
        %v564 = vpop.permute.xlu0 %563
        %v565 = vrot.slane %v562, 4
        %v566 = vrot.slane %v564, 4
        %v567 = vsel %vm535, %v565, %v566
        %vm568 = vcmask 146432
        %v569 = vsel %vm568, %v562, %v567
        %v570 = vsel %vm568, %v564, %v566
        %573 = vst [vmem:[#allocation3] sm:$0xcc] %v569
        %574 = vst [vmem:[#allocation3 + $0x8] sm:$0xc] %v570
        %v575 = vld [vmem:[#allocation2] sm:$0xff]
        %v577 = vcombine.high %v575, %v575
        %v579 = vunpack.c.l.s4 1983009808
        %v580 = vunpack.c.0.s8 %v579
        %v581 = vlaneseq
        %v582 = vshrl.u32 %v581, 7
        %v583 = vsub.s32 %v580, %v582
        %v584 = vrot.slane %v575, %v583
        %v586 = vunpack.c.l.s4 1983009808
        %v587 = vunpack.c.0.s8 %v586
        %v588 = vlaneseq
        %v589 = vshrl.u32 %v588, 7
        %v590 = vsub.s32 %v587, %v589
        %v591 = vrot.slane %v577, %v590
        %592 = vrot.lane.b32.xlu0 %v584, 17
        %v593 = vpop.permute.xlu0 %592
        %594 = vrot.lane.b32.xlu0 %v591, 17
        %v595 = vpop.permute.xlu0 %594
        %v596 = vrot.slane %v593, 4
        %v597 = vrot.slane %v595, 4
        %v598 = vsel %vm535, %v596, %v597
        %vm599 = vcmask 138240
        %v600 = vsel %vm599, %v593, %v598
        %v601 = vsel %vm599, %v595, %v597
        %604 = vst [vmem:[#allocation3 + $0xc] sm:$0x33] %v600
        %605 = vst [vmem:[#allocation3 + $0x14] sm:$0x3] %v601
        %v606 = vld [vmem:[#allocation2] sm:$0xff]
        %v608 = vcombine.low %v606, %v606
        %v610 = vunpack.c.l.s4 1983009808
        %v611 = vunpack.c.0.s8 %v610
        %v612 = vlaneseq
        %v613 = vshrl.u32 %v612, 7
        %v614 = vsub.s32 %v611, %v613
        %v615 = vrot.slane %v608, %v614
        %v617 = vunpack.c.l.s4 1983009808
        %v618 = vunpack.c.0.s8 %v617
        %v619 = vlaneseq
        %v620 = vshrl.u32 %v619, 7
        %v621 = vsub.s32 %v618, %v620
        %v622 = vrot.slane %v606, %v621
        %623 = vrot.lane.b32.xlu0 %v615, 1
        %v624 = vpop.permute.xlu0 %623
        %625 = vrot.lane.b32.xlu0 %v622, 1
        %v626 = vpop.permute.xlu0 %625
        %v627 = vrot.slane %v624, 4
        %v628 = vrot.slane %v626, 4
        %v629 = vsel %vm535, %v627, %v628
        %vm630 = vcmask 7168
        %v631 = vsel %vm630, %v624, %v629
        %v632 = vsel %vm630, %v626, %v628
        %635 = vst [vmem:[#allocation3 + $0xc] sm:$0xcc] %v631
        %636 = vst [vmem:[#allocation3 + $0x14] sm:$0xc] %v632
        %v637 = vld [vmem:[#allocation2 + $0x2] sm:$0x3f]
        %v639 = vcombine.high %v637, %v637
        %v641 = vunpack.c.l.s4 1983009808
        %v642 = vunpack.c.0.s8 %v641
        %v643 = vlaneseq
        %v644 = vshrl.u32 %v643, 7
        %v645 = vsub.s32 %v642, %v644
        %v646 = vrot.slane %v637, %v645
        %v648 = vunpack.c.l.s4 1983009808
        %v649 = vunpack.c.0.s8 %v648
        %v650 = vlaneseq
        %v651 = vshrl.u32 %v650, 7
        %v652 = vsub.s32 %v649, %v651
        %v653 = vrot.slane %v639, %v652
        %656 = vst [vmem:[#allocation3 + $0x18] sm:$0x33] %v646
        %657 = vst [vmem:[#allocation3 + $0x20] sm:$0x3] %v653
        %v658 = vld [vmem:[#allocation2 + $0x2] sm:$0xff]
        %v660 = vcombine.low %v658, %v658
        %v662 = vunpack.c.l.s4 1983009808
        %v663 = vunpack.c.0.s8 %v662
        %v664 = vlaneseq
        %v665 = vshrl.u32 %v664, 7
        %v666 = vsub.s32 %v663, %v665
        %v667 = vrot.slane %v660, %v666
        %v669 = vunpack.c.l.s4 1983009808
        %v670 = vunpack.c.0.s8 %v669
        %v671 = vlaneseq
        %v672 = vshrl.u32 %v671, 7
        %v673 = vsub.s32 %v670, %v672
        %v674 = vrot.slane %v658, %v673
        %675 = vrot.lane.b32.xlu0 %v667, 127
        %v676 = vpop.permute.xlu0 %675
        %677 = vrot.lane.b32.xlu0 %v674, 127
        %v678 = vpop.permute.xlu0 %677
        %v679 = vrot.slane %v676, 4
        %v680 = vrot.slane %v678, 4
        %v681 = vsel %vm535, %v679, %v680
        %vm682 = vcmask 1039360
        %v683 = vsel %vm682, %v676, %v681
        %v684 = vsel %vm682, %v678, %v680
        %687 = vst [vmem:[#allocation3 + $0x18] sm:$0xcc] %v683
        %688 = vst [vmem:[#allocation3 + $0x20] sm:$0xc] %v684
        %v689 = vld [vmem:[#allocation2 + $0x2] sm:$0xff]
        %v691 = vcombine.high %v689, %v689
        %v693 = vunpack.c.l.s4 1983009808
        %v694 = vunpack.c.0.s8 %v693
        %v695 = vlaneseq
        %v696 = vshrl.u32 %v695, 7
        %v697 = vsub.s32 %v694, %v696
        %v698 = vrot.slane %v689, %v697
        %v700 = vunpack.c.l.s4 1983009808
        %v701 = vunpack.c.0.s8 %v700
        %v702 = vlaneseq
        %v703 = vshrl.u32 %v702, 7
        %v704 = vsub.s32 %v701, %v703
        %v705 = vrot.slane %v691, %v704
        %706 = vrot.lane.b32.xlu0 %v698, 111
        %v707 = vpop.permute.xlu0 %706
        %708 = vrot.lane.b32.xlu0 %v705, 111
        %v709 = vpop.permute.xlu0 %708
        %v710 = vrot.slane %v707, 4
        %v711 = vrot.slane %v709, 4
        %v712 = vsel %vm535, %v710, %v711
        %vm713 = vcmask 908288
        %v714 = vsel %vm713, %v707, %v712
        %v715 = vsel %vm713, %v709, %v711
        %718 = vst [vmem:[#allocation3 + $0x24] sm:$0x33] %v714
        %719 = vst [vmem:[#allocation3 + $0x2c] sm:$0x3] %v715
        %v720 = vld [vmem:[#allocation2 + $0x2] sm:$0xff]
        %v722 = vcombine.low %v720, %v720
        %v724 = vunpack.c.l.s4 1983009808
        %v725 = vunpack.c.0.s8 %v724
        %v726 = vlaneseq
        %v727 = vshrl.u32 %v726, 7
        %v728 = vsub.s32 %v725, %v727
        %v729 = vrot.slane %v722, %v728
        %v731 = vunpack.c.l.s4 1983009808
        %v732 = vunpack.c.0.s8 %v731
        %v733 = vlaneseq
        %v734 = vshrl.u32 %v733, 7
        %v735 = vsub.s32 %v732, %v734
        %v736 = vrot.slane %v720, %v735
        %737 = vrot.lane.b32.xlu0 %v729, 110
        %v738 = vpop.permute.xlu0 %737
        %739 = vrot.lane.b32.xlu0 %v736, 110
        %v740 = vpop.permute.xlu0 %739
        %v741 = vrot.slane %v738, 4
        %v742 = vrot.slane %v740, 4
        %v743 = vsel %vm535, %v741, %v742
        %vm744 = vcmask 900096
        %v745 = vsel %vm744, %v738, %v743
        %v746 = vsel %vm744, %v740, %v742
        %749 = vst [vmem:[#allocation3 + $0x24] sm:$0xcc] %v745
        %750 = vst [vmem:[#allocation3 + $0x2c] sm:$0xc] %v746
        %v751 = vld [vmem:[#allocation2 + $0x2] sm:$0xff]
        %v753 = vcombine.high %v751, %v751
        %v755 = vunpack.c.l.s4 1983009808
        %v756 = vunpack.c.0.s8 %v755
        %v757 = vlaneseq
        %v758 = vshrl.u32 %v757, 7
        %v759 = vsub.s32 %v756, %v758
        %v760 = vrot.slane %v751, %v759
        %v762 = vunpack.c.l.s4 1983009808
        %v763 = vunpack.c.0.s8 %v762
        %v764 = vlaneseq
        %v765 = vshrl.u32 %v764, 7
        %v766 = vsub.s32 %v763, %v765
        %v767 = vrot.slane %v753, %v766
        %768 = vrot.lane.b32.xlu0 %v760, 109
        %v769 = vpop.permute.xlu0 %768
        %770 = vrot.lane.b32.xlu0 %v767, 109
        %v771 = vpop.permute.xlu0 %770
        %v772 = vrot.slane %v769, 4
        %v773 = vrot.slane %v771, 4
        %v774 = vsel %vm535, %v772, %v773
        %vm775 = vcmask 891904
        %v776 = vsel %vm775, %v769, %v774
        %v777 = vsel %vm775, %v771, %v773
        %780 = vst [vmem:[#allocation3 + $0x30] sm:$0x33] %v776
        %781 = vst [vmem:[#allocation3 + $0x38] sm:$0x3] %v777
        %v782 = vld [vmem:[#allocation4] sm:$0x3]
        %v783 = vld [vmem:[#allocation3] sm:$0xff]
        %v784 = vld [vmem:[#allocation3 + $0x8] sm:$0xf]
        %v785 = vld [vmem:[#allocation3 + $0xc] sm:$0xff]
        %v786 = vld [vmem:[#allocation3 + $0x14] sm:$0xf]
        %v787 = vld [vmem:[#allocation3 + $0x18] sm:$0xff]
        %v788 = vld [vmem:[#allocation3 + $0x20] sm:$0xf]
        %v789 = vld [vmem:[#allocation3 + $0x24] sm:$0xff]
        %v790 = vld [vmem:[#allocation3 + $0x2c] sm:$0xf]
        %v791 = vld [vmem:[#allocation3 + $0x30] sm:$0x33]
        %v792 = vld [vmem:[#allocation3 + $0x38] sm:$0x3]
        %v793 = vld [vmem:[#allocation7] sm:$0xf]
        %795 = vset.pattern.permute.xlu0 0
        %796 = vperm.xlu0 %795, %v793
        %v797 = vpop.permute.xlu0 %796
        %v809 = vunpack.c.l.b16 %v783
        %v810 = vunpack.c.h.b16 %v783
        %v811 = vunpack.c.l.b16 %v784
        %v812 = vunpack.c.l.b16 %v785
        %v813 = vunpack.c.h.b16 %v785
        %v814 = vunpack.c.l.b16 %v786
        %v815 = vunpack.c.l.b16 %v787
        %v816 = vunpack.c.h.b16 %v787
        %v817 = vunpack.c.l.b16 %v788
        %v818 = vunpack.c.l.b16 %v789
        %v819 = vunpack.c.h.b16 %v789
        %v820 = vunpack.c.l.b16 %v790
        %v821 = vunpack.c.l.b16 %v791
        %v822 = vunpack.c.h.b16 %v791
        %v823 = vunpack.c.l.b16 %v792
        %v824 = vpack.c.b16 %v812, %v809
        %v825 = vpack.c.b16 %v813, %v810
        %v826 = vpack.c.b16 %v814, %v811
        %v827 = vpack.c.b16 %v818, %v815
        %v828 = vpack.c.b16 %v819, %v816
        %v829 = vpack.c.b16 %v820, %v817
        %v830 = vpack.c.b16 %v821, %v821
        %v831 = vpack.c.b16 %v822, %v822
        %v832 = vpack.c.b16 %v823, %v823
        %vm839 = vcmask 293888
        %v841 = vsel %vm839, %v782, 0
        %vm843 = vcmask 1041408
        %v845 = vsel %vm843, %v830, 0
        %v848 = vsel %vm843, %v831, 0
        %v851 = vsel %vm843, %v832, 0
        %853 = vmatprep.subr.bf16.mxu0 %v825
        %854 = vmatpush1.bf16.msra.mxu0 %v824
        %855 = vmatprep.subr.bf16.mxu0 %v828
        %856 = vmatpush1.bf16.msra.mxu0 %v827
        %857 = vmatprep.subr.bf16.mxu0 %v848
        %858 = vmatpush1.bf16.msra.mxu0 %v845
        %859 = vmatprep.subr.bf16.mxu0 0
        %860 = vmatpush1.bf16.msra.mxu0 0
        %861 = vmatprep.subr.bf16.mxu0 0
        %862 = vmatpush1.bf16.msra.mxu0 0
        %863 = vmatprep.subr.bf16.mxu0 0
        %864 = vmatpush1.bf16.msra.mxu0 0
        %865 = vmatprep.subr.bf16.mxu0 0
        %866 = vmatpush1.bf16.msra.mxu0 0
        %867 = vmatprep.subr.bf16.mxu0 0
        %868 = vmatpush1.bf16.msra.mxu0 0
        %869 = vmatprep.subr.bf16.mxu0 0
        %870 = vmatpush1.bf16.msra.mxu0 0
        %871 = vmatprep.subr.bf16.mxu0 0
        %872 = vmatpush1.bf16.msra.mxu0 0
        %873 = vmatprep.subr.bf16.mxu0 0
        %874 = vmatpush1.bf16.msra.mxu0 0
        %875 = vmatprep.subr.bf16.mxu0 0
        %876 = vmatpush1.bf16.msra.mxu0 0
        %877 = vmatprep.subr.bf16.mxu0 0
        %878 = vmatpush1.bf16.msra.mxu0 0
        %879 = vmatprep.subr.bf16.mxu0 0
        %880 = vmatpush1.bf16.msra.mxu0 0
        %881 = vmatprep.subr.bf16.mxu0 0
        %882 = vmatpush1.bf16.msra.mxu0 0
        %883 = vmatprep.subr.bf16.mxu0 0
        %884 = vmatpush1.bf16.msra.mxu0 0
        %885 = vmatprep.mubr.bf16.mxu0 0
        %886 = vmatmul.mubr.bf16.gmra.mrb[0].mxu0 %v841
        %v887 = vpop.f32.mrb[0].mxu0
        %v888 = vadd.f32 %v797, %v887
        %v889 = vpop.f32.mrb[0].mxu0
        %v890 = vadd.f32 %v797, %v889
        %v891 = vpop.f32.mrb[0].mxu0
        %v892 = vpop.f32.mrb[0].mxu0
        %893 = vdwg.mxu0
        %894 = vmatprep.subr.bf16.mxu0 0
        %895 = vmatpush1.bf16.msra.mxu0 %v826
        %896 = vmatprep.subr.bf16.mxu0 0
        %897 = vmatpush1.bf16.msra.mxu0 %v829
        %898 = vmatprep.subr.bf16.mxu0 0
        %899 = vmatpush1.bf16.msra.mxu0 %v851
        %900 = vmatprep.subr.bf16.mxu0 0
        %901 = vmatpush1.bf16.msra.mxu0 0
        %902 = vmatprep.subr.bf16.mxu0 0
        %903 = vmatpush1.bf16.msra.mxu0 0
        %904 = vmatprep.subr.bf16.mxu0 0
        %905 = vmatpush1.bf16.msra.mxu0 0
        %906 = vmatprep.subr.bf16.mxu0 0
        %907 = vmatpush1.bf16.msra.mxu0 0
        %908 = vmatprep.subr.bf16.mxu0 0
        %909 = vmatpush1.bf16.msra.mxu0 0
        %910 = vmatprep.subr.bf16.mxu0 0
        %911 = vmatpush1.bf16.msra.mxu0 0
        %912 = vmatprep.subr.bf16.mxu0 0
        %913 = vmatpush1.bf16.msra.mxu0 0
        %914 = vmatprep.subr.bf16.mxu0 0
        %915 = vmatpush1.bf16.msra.mxu0 0
        %916 = vmatprep.subr.bf16.mxu0 0
        %917 = vmatpush1.bf16.msra.mxu0 0
        %918 = vmatprep.subr.bf16.mxu0 0
        %919 = vmatpush1.bf16.msra.mxu0 0
        %920 = vmatprep.subr.bf16.mxu0 0
        %921 = vmatpush1.bf16.msra.mxu0 0
        %922 = vmatprep.subr.bf16.mxu0 0
        %923 = vmatpush1.bf16.msra.mxu0 0
        %924 = vmatprep.subr.bf16.mxu0 0
        %925 = vmatpush1.bf16.msra.mxu0 0
        %926 = vmatprep.mubr.bf16.mxu0 0
        %927 = vmatmul.mubr.bf16.gmra.mrb[0].mxu0 %v841
        %v928 = vpop.f32.mrb[0].mxu0
        %v929 = vadd.f32 %v797, %v928
        %v930 = vpop.f32.mrb[0].mxu0
        %v931 = vpop.f32.mrb[0].mxu0
        %v932 = vpop.f32.mrb[0].mxu0
        %933 = vdwg.mxu0
        %vm934 = vcmp.gt.f32.partialorder %v888, 0.0
        %vm935 = vcmp.gt.f32.partialorder %v890, 0.0
        %vm936 = vcmp.gt.f32.partialorder %v929, 0.0
        %v937 = vmul.f32 %v888, 0.2
        %v938 = vmul.f32 %v890, 0.2
        %v939 = vmul.f32 %v929, 0.2
        %v940 = vsel %vm934, %v888, %v937
        %v941 = vsel %vm935, %v890, %v938
        %v942 = vsel %vm936, %v929, %v939
        %v943 = vmul.f32 %v940, %v505
        %v944 = vmul.f32 %v941, %v506
        %v945 = vmul.f32 %v942, %v507
        %v946 = vpack.c.bf16 %v943, %v943
        %v947 = vpack.c.bf16 %v944, %v944
        %v948 = vpack.c.bf16 %v945, %v945
        %v952 = vcombine.low %v946, %v947
        %v954 = vunpack.c.l.s4 1983009808
        %v955 = vunpack.c.0.s8 %v954
        %v956 = vlaneseq
        %v957 = vshrl.u32 %v956, 7
        %v958 = vsub.s32 %v955, %v957
        %v959 = vrot.slane %v952, %v958
        %v961 = vunpack.c.l.s4 1983009808
        %v962 = vunpack.c.0.s8 %v961
        %v963 = vlaneseq
        %v964 = vshrl.u32 %v963, 7
        %v965 = vsub.s32 %v962, %v964
        %v966 = vrot.slane %v948, %v965
        %v967 = vcombine.low %v959, %v966
        %969 = vst [vmem:[#allocation2 + $0x2] sm:$0x2a] %v967
        %v970 = vld [vmem:[#allocation15] sm:$0x3]
        %v971 = vld [vmem:[#allocation16] sm:$0x3]
        %v972 = vmul.f32 %v888, %v505
        %v973 = vmul.f32 %v890, %v506
        %v974 = vmul.f32 %v929, %v507
        %v975 = vsel %vm843, %v972, 0.0
        %v976 = vsel %vm843, %v973, 0.0
        %v977 = vadd.f32 %v975, %v976
        %v978 = vsel %vm843, %v974, 0.0
        %v979 = vadd.f32 %v977, %v978
        %980 = vadd.xlane.f32.xlu0 %v979
        %v981 = vpop.xlane.xlu0 %980
        %v982 = vmul.f32 %v972, %v972
        %v983 = vmul.f32 %v973, %v973
        %v984 = vmul.f32 %v974, %v974
        %v985 = vsel %vm843, %v982, 0.0
        %v986 = vsel %vm843, %v983, 0.0
        %v987 = vadd.f32 %v985, %v986
        %v988 = vsel %vm843, %v984, 0.0
        %v989 = vadd.f32 %v987, %v988
        %990 = vadd.xlane.f32.xlu0 %v989
        %v991 = vpop.xlane.xlu0 %990
        %v992 = vmul.f32 %v981, 0.00390625
        %v993 = vmul.f32 %v991, 0.00390625
        %v994 = vmul.f32 %v992, %v992
        %v995 = vsub.f32 %v993, %v994
        %v996 = vsub.f32 %v888, %v992
        %v997 = vsub.f32 %v890, %v992
        %v998 = vsub.f32 %v929, %v992
        %v999 = vadd.f32 %v995, 1e-05
        %v1000 = vrsqrt.pop %v999
        %v1001 = vmul.f32 %v996, %v1000
        %v1002 = vmul.f32 %v997, %v1000
        %v1003 = vmul.f32 %v998, %v1000
        %1005 = vset.pattern.permute.xlu0 0
        %1006 = vperm.xlu0 %1005, %v970
        %v1007 = vpop.permute.xlu0 %1006
        %v1009 = vmul.f32 %v1007, %v1001
        %v1010 = vmul.f32 %v1007, %v1002
        %v1011 = vmul.f32 %v1007, %v1003
        %1013 = vset.pattern.permute.xlu0 0
        %1014 = vperm.xlu0 %1013, %v971
        %v1015 = vpop.permute.xlu0 %1014
        %v1017 = vadd.f32 %v1009, %v1015
        %v1018 = vadd.f32 %v1010, %v1015
        %v1019 = vadd.f32 %v1011, %v1015
        %vm1020 = vcmp.gt.f32.partialorder %v1017, 0.0
        %vm1021 = vcmp.gt.f32.partialorder %v1018, 0.0
        %vm1022 = vcmp.gt.f32.partialorder %v1019, 0.0
        %v1023 = vmul.f32 %v1017, 0.2
        %v1024 = vmul.f32 %v1018, 0.2
        %v1025 = vmul.f32 %v1019, 0.2
        %v1026 = vsel %vm1020, %v1017, %v1023
        %v1027 = vsel %vm1021, %v1018, %v1024
        %v1028 = vsel %vm1022, %v1019, %v1025
        %v1029 = vmul.f32 %v1026, %v505
        %v1030 = vmul.f32 %v1027, %v506
        %v1031 = vmul.f32 %v1028, %v507
        %v1032 = vpack.c.bf16 %v1029, %v1029
        %v1033 = vpack.c.bf16 %v1030, %v1030
        %v1034 = vpack.c.bf16 %v1031, %v1031
        %v1038 = vcombine.low %v1032, %v1033
        %v1040 = vunpack.c.l.s4 1983009808
        %v1041 = vunpack.c.0.s8 %v1040
        %v1042 = vlaneseq
        %v1043 = vshrl.u32 %v1042, 7
        %v1044 = vsub.s32 %v1041, %v1043
        %v1045 = vrot.slane %v1038, %v1044
        %v1047 = vunpack.c.l.s4 1983009808
        %v1048 = vunpack.c.0.s8 %v1047
        %v1049 = vlaneseq
        %v1050 = vshrl.u32 %v1049, 7
        %v1051 = vsub.s32 %v1048, %v1050
        %v1052 = vrot.slane %v1034, %v1051
        %v1053 = vcombine.low %v1045, %v1052
        %1055 = vst [vmem:[#allocation2 + $0x2] sm:$0x15] %v1053
        %v1056 = vld [vmem:[#allocation2] sm:$0xff]
        %v1058 = vcombine.high %v1056, %v1056
        %v1060 = vunpack.c.l.s4 1983009808
        %v1061 = vunpack.c.0.s8 %v1060
        %v1062 = vlaneseq
        %v1063 = vshrl.u32 %v1062, 7
        %v1064 = vsub.s32 %v1061, %v1063
        %v1065 = vrot.slane %v1056, %v1064
        %v1067 = vunpack.c.l.s4 1983009808
        %v1068 = vunpack.c.0.s8 %v1067
        %v1069 = vlaneseq
        %v1070 = vshrl.u32 %v1069, 7
        %v1071 = vsub.s32 %v1068, %v1070
        %v1072 = vrot.slane %v1058, %v1071
        %1073 = vrot.lane.b32.xlu0 %v1065, 19
        %v1074 = vpop.permute.xlu0 %1073
        %1075 = vrot.lane.b32.xlu0 %v1072, 19
        %v1076 = vpop.permute.xlu0 %1075
        %v1077 = vrot.slane %v1074, 4
        %v1078 = vrot.slane %v1076, 4
        %v1079 = vsel %vm535, %v1077, %v1078
        %v1080 = vsel %vm537, %v1074, %v1079
        %v1081 = vsel %vm537, %v1076, %v1078
        %1084 = vst [vmem:[#allocation3] sm:$0x33] %v1080
        %1085 = vst [vmem:[#allocation3 + $0x8] sm:$0x3] %v1081
        %v1086 = vld [vmem:[#allocation2] sm:$0xff]
        %v1088 = vcombine.low %v1086, %v1086
        %v1090 = vunpack.c.l.s4 1983009808
        %v1091 = vunpack.c.0.s8 %v1090
        %v1092 = vlaneseq
        %v1093 = vshrl.u32 %v1092, 7
        %v1094 = vsub.s32 %v1091, %v1093
        %v1095 = vrot.slane %v1088, %v1094
        %v1097 = vunpack.c.l.s4 1983009808
        %v1098 = vunpack.c.0.s8 %v1097
        %v1099 = vlaneseq
        %v1100 = vshrl.u32 %v1099, 7
        %v1101 = vsub.s32 %v1098, %v1100
        %v1102 = vrot.slane %v1086, %v1101
        %1103 = vrot.lane.b32.xlu0 %v1095, 18
        %v1104 = vpop.permute.xlu0 %1103
        %1105 = vrot.lane.b32.xlu0 %v1102, 18
        %v1106 = vpop.permute.xlu0 %1105
        %v1107 = vrot.slane %v1104, 4
        %v1108 = vrot.slane %v1106, 4
        %v1109 = vsel %vm535, %v1107, %v1108
        %v1110 = vsel %vm568, %v1104, %v1109
        %v1111 = vsel %vm568, %v1106, %v1108
        %1114 = vst [vmem:[#allocation3] sm:$0xcc] %v1110
        %1115 = vst [vmem:[#allocation3 + $0x8] sm:$0xc] %v1111
        %v1116 = vld [vmem:[#allocation2] sm:$0xff]
        %v1118 = vcombine.high %v1116, %v1116
        %v1120 = vunpack.c.l.s4 1983009808
        %v1121 = vunpack.c.0.s8 %v1120
        %v1122 = vlaneseq
        %v1123 = vshrl.u32 %v1122, 7
        %v1124 = vsub.s32 %v1121, %v1123
        %v1125 = vrot.slane %v1116, %v1124
        %v1127 = vunpack.c.l.s4 1983009808
        %v1128 = vunpack.c.0.s8 %v1127
        %v1129 = vlaneseq
        %v1130 = vshrl.u32 %v1129, 7
        %v1131 = vsub.s32 %v1128, %v1130
        %v1132 = vrot.slane %v1118, %v1131
        %1133 = vrot.lane.b32.xlu0 %v1125, 17
        %v1134 = vpop.permute.xlu0 %1133
        %1135 = vrot.lane.b32.xlu0 %v1132, 17
        %v1136 = vpop.permute.xlu0 %1135
        %v1137 = vrot.slane %v1134, 4
        %v1138 = vrot.slane %v1136, 4
        %v1139 = vsel %vm535, %v1137, %v1138
        %v1140 = vsel %vm599, %v1134, %v1139
        %v1141 = vsel %vm599, %v1136, %v1138
        %1144 = vst [vmem:[#allocation3 + $0xc] sm:$0x33] %v1140
        %1145 = vst [vmem:[#allocation3 + $0x14] sm:$0x3] %v1141
        %v1146 = vld [vmem:[#allocation2] sm:$0xff]
        %v1148 = vcombine.low %v1146, %v1146
        %v1150 = vunpack.c.l.s4 1983009808
        %v1151 = vunpack.c.0.s8 %v1150
        %v1152 = vlaneseq
        %v1153 = vshrl.u32 %v1152, 7
        %v1154 = vsub.s32 %v1151, %v1153
        %v1155 = vrot.slane %v1148, %v1154
        %v1157 = vunpack.c.l.s4 1983009808
        %v1158 = vunpack.c.0.s8 %v1157
        %v1159 = vlaneseq
        %v1160 = vshrl.u32 %v1159, 7
        %v1161 = vsub.s32 %v1158, %v1160
        %v1162 = vrot.slane %v1146, %v1161
        %1163 = vrot.lane.b32.xlu0 %v1155, 1
        %v1164 = vpop.permute.xlu0 %1163
        %1165 = vrot.lane.b32.xlu0 %v1162, 1
        %v1166 = vpop.permute.xlu0 %1165
        %v1167 = vrot.slane %v1164, 4
        %v1168 = vrot.slane %v1166, 4
        %v1169 = vsel %vm535, %v1167, %v1168
        %v1170 = vsel %vm630, %v1164, %v1169
        %v1171 = vsel %vm630, %v1166, %v1168
        %1174 = vst [vmem:[#allocation3 + $0xc] sm:$0xcc] %v1170
        %1175 = vst [vmem:[#allocation3 + $0x14] sm:$0xc] %v1171
        %v1176 = vld [vmem:[#allocation2 + $0x2] sm:$0x3f]
        %v1178 = vcombine.high %v1176, %v1176
        %v1180 = vunpack.c.l.s4 1983009808
        %v1181 = vunpack.c.0.s8 %v1180
        %v1182 = vlaneseq
        %v1183 = vshrl.u32 %v1182, 7
        %v1184 = vsub.s32 %v1181, %v1183
        %v1185 = vrot.slane %v1176, %v1184
        %v1187 = vunpack.c.l.s4 1983009808
        %v1188 = vunpack.c.0.s8 %v1187
        %v1189 = vlaneseq
        %v1190 = vshrl.u32 %v1189, 7
        %v1191 = vsub.s32 %v1188, %v1190
        %v1192 = vrot.slane %v1178, %v1191
        %1195 = vst [vmem:[#allocation3 + $0x18] sm:$0x33] %v1185
        %1196 = vst [vmem:[#allocation3 + $0x20] sm:$0x3] %v1192
        %v1197 = vld [vmem:[#allocation2 + $0x2] sm:$0xff]
        %v1199 = vcombine.low %v1197, %v1197
        %v1201 = vunpack.c.l.s4 1983009808
        %v1202 = vunpack.c.0.s8 %v1201
        %v1203 = vlaneseq
        %v1204 = vshrl.u32 %v1203, 7
        %v1205 = vsub.s32 %v1202, %v1204
        %v1206 = vrot.slane %v1199, %v1205
        %v1208 = vunpack.c.l.s4 1983009808
        %v1209 = vunpack.c.0.s8 %v1208
        %v1210 = vlaneseq
        %v1211 = vshrl.u32 %v1210, 7
        %v1212 = vsub.s32 %v1209, %v1211
        %v1213 = vrot.slane %v1197, %v1212
        %1214 = vrot.lane.b32.xlu0 %v1206, 127
        %v1215 = vpop.permute.xlu0 %1214
        %1216 = vrot.lane.b32.xlu0 %v1213, 127
        %v1217 = vpop.permute.xlu0 %1216
        %v1218 = vrot.slane %v1215, 4
        %v1219 = vrot.slane %v1217, 4
        %v1220 = vsel %vm535, %v1218, %v1219
        %v1221 = vsel %vm682, %v1215, %v1220
        %v1222 = vsel %vm682, %v1217, %v1219
        %1225 = vst [vmem:[#allocation3 + $0x18] sm:$0xcc] %v1221
        %1226 = vst [vmem:[#allocation3 + $0x20] sm:$0xc] %v1222
        %v1227 = vld [vmem:[#allocation2 + $0x2] sm:$0xff]
        %v1229 = vcombine.high %v1227, %v1227
        %v1231 = vunpack.c.l.s4 1983009808
        %v1232 = vunpack.c.0.s8 %v1231
        %v1233 = vlaneseq
        %v1234 = vshrl.u32 %v1233, 7
        %v1235 = vsub.s32 %v1232, %v1234
        %v1236 = vrot.slane %v1227, %v1235
        %v1238 = vunpack.c.l.s4 1983009808
        %v1239 = vunpack.c.0.s8 %v1238
        %v1240 = vlaneseq
        %v1241 = vshrl.u32 %v1240, 7
        %v1242 = vsub.s32 %v1239, %v1241
        %v1243 = vrot.slane %v1229, %v1242
        %1244 = vrot.lane.b32.xlu0 %v1236, 111
        %v1245 = vpop.permute.xlu0 %1244
        %1246 = vrot.lane.b32.xlu0 %v1243, 111
        %v1247 = vpop.permute.xlu0 %1246
        %v1248 = vrot.slane %v1245, 4
        %v1249 = vrot.slane %v1247, 4
        %v1250 = vsel %vm535, %v1248, %v1249
        %v1251 = vsel %vm713, %v1245, %v1250
        %v1252 = vsel %vm713, %v1247, %v1249
        %1255 = vst [vmem:[#allocation3 + $0x24] sm:$0x33] %v1251
        %1256 = vst [vmem:[#allocation3 + $0x2c] sm:$0x3] %v1252
        %v1257 = vld [vmem:[#allocation2 + $0x2] sm:$0xff]
        %v1259 = vcombine.low %v1257, %v1257
        %v1261 = vunpack.c.l.s4 1983009808
        %v1262 = vunpack.c.0.s8 %v1261
        %v1263 = vlaneseq
        %v1264 = vshrl.u32 %v1263, 7
        %v1265 = vsub.s32 %v1262, %v1264
        %v1266 = vrot.slane %v1259, %v1265
        %v1268 = vunpack.c.l.s4 1983009808
        %v1269 = vunpack.c.0.s8 %v1268
        %v1270 = vlaneseq
        %v1271 = vshrl.u32 %v1270, 7
        %v1272 = vsub.s32 %v1269, %v1271
        %v1273 = vrot.slane %v1257, %v1272
        %1274 = vrot.lane.b32.xlu0 %v1266, 110
        %v1275 = vpop.permute.xlu0 %1274
        %1276 = vrot.lane.b32.xlu0 %v1273, 110
        %v1277 = vpop.permute.xlu0 %1276
        %v1278 = vrot.slane %v1275, 4
        %v1279 = vrot.slane %v1277, 4
        %v1280 = vsel %vm535, %v1278, %v1279
        %v1281 = vsel %vm744, %v1275, %v1280
        %v1282 = vsel %vm744, %v1277, %v1279
        %1285 = vst [vmem:[#allocation3 + $0x24] sm:$0xcc] %v1281
        %1286 = vst [vmem:[#allocation3 + $0x2c] sm:$0xc] %v1282
        %v1287 = vld [vmem:[#allocation2 + $0x2] sm:$0xff]
        %v1289 = vcombine.high %v1287, %v1287
        %v1291 = vunpack.c.l.s4 1983009808
        %v1292 = vunpack.c.0.s8 %v1291
        %v1293 = vlaneseq
        %v1294 = vshrl.u32 %v1293, 7
        %v1295 = vsub.s32 %v1292, %v1294
        %v1296 = vrot.slane %v1287, %v1295
        %v1298 = vunpack.c.l.s4 1983009808
        %v1299 = vunpack.c.0.s8 %v1298
        %v1300 = vlaneseq
        %v1301 = vshrl.u32 %v1300, 7
        %v1302 = vsub.s32 %v1299, %v1301
        %v1303 = vrot.slane %v1289, %v1302
        %1304 = vrot.lane.b32.xlu0 %v1296, 109
        %v1305 = vpop.permute.xlu0 %1304
        %1306 = vrot.lane.b32.xlu0 %v1303, 109
        %v1307 = vpop.permute.xlu0 %1306
        %v1308 = vrot.slane %v1305, 4
        %v1309 = vrot.slane %v1307, 4
        %v1310 = vsel %vm535, %v1308, %v1309
        %v1311 = vsel %vm775, %v1305, %v1310
        %v1312 = vsel %vm775, %v1307, %v1309
        %1315 = vst [vmem:[#allocation3 + $0x30] sm:$0x33] %v1311
        %1316 = vst [vmem:[#allocation3 + $0x38] sm:$0x3] %v1312
        %v1317 = vld [vmem:[#allocation9] sm:$0x3]
        %v1318 = vld [vmem:[#allocation3] sm:$0xff]
        %v1319 = vld [vmem:[#allocation3 + $0x8] sm:$0xf]
        %v1320 = vld [vmem:[#allocation3 + $0xc] sm:$0xff]
        %v1321 = vld [vmem:[#allocation3 + $0x14] sm:$0xf]
        %v1322 = vld [vmem:[#allocation3 + $0x18] sm:$0xff]
        %v1323 = vld [vmem:[#allocation3 + $0x20] sm:$0xf]
        %v1324 = vld [vmem:[#allocation3 + $0x24] sm:$0xff]
        %v1325 = vld [vmem:[#allocation3 + $0x2c] sm:$0xf]
        %v1326 = vld [vmem:[#allocation3 + $0x30] sm:$0x33]
        %v1327 = vld [vmem:[#allocation3 + $0x38] sm:$0x3]
        %v1328 = vld [vmem:[#allocation10] sm:$0xf]
        %1330 = vset.pattern.permute.xlu0 0
        %1331 = vperm.xlu0 %1330, %v1328
        %v1332 = vpop.permute.xlu0 %1331
        %v1344 = vunpack.c.l.b16 %v1318
        %v1345 = vunpack.c.h.b16 %v1318
        %v1346 = vunpack.c.l.b16 %v1319
        %v1347 = vunpack.c.l.b16 %v1320
        %v1348 = vunpack.c.h.b16 %v1320
        %v1349 = vunpack.c.l.b16 %v1321
        %v1350 = vunpack.c.l.b16 %v1322
        %v1351 = vunpack.c.h.b16 %v1322
        %v1352 = vunpack.c.l.b16 %v1323
        %v1353 = vunpack.c.l.b16 %v1324
        %v1354 = vunpack.c.h.b16 %v1324
        %v1355 = vunpack.c.l.b16 %v1325
        %v1356 = vunpack.c.l.b16 %v1326
        %v1357 = vunpack.c.h.b16 %v1326
        %v1358 = vunpack.c.l.b16 %v1327
        %v1359 = vpack.c.b16 %v1347, %v1344
        %v1360 = vpack.c.b16 %v1348, %v1345
        %v1361 = vpack.c.b16 %v1349, %v1346
        %v1362 = vpack.c.b16 %v1353, %v1350
        %v1363 = vpack.c.b16 %v1354, %v1351
        %v1364 = vpack.c.b16 %v1355, %v1352
        %v1365 = vpack.c.b16 %v1356, %v1356
        %v1366 = vpack.c.b16 %v1357, %v1357
        %v1367 = vpack.c.b16 %v1358, %v1358
        %v1375 = vsel %vm839, %v1317, 0
        %v1378 = vsel %vm843, %v1365, 0
        %v1381 = vsel %vm843, %v1366, 0
        %v1384 = vsel %vm843, %v1367, 0
        %1386 = vmatprep.subr.bf16.mxu0 %v1360
        %1387 = vmatpush1.bf16.msra.mxu0 %v1359
        %1388 = vmatprep.subr.bf16.mxu0 %v1363
        %1389 = vmatpush1.bf16.msra.mxu0 %v1362
        %1390 = vmatprep.subr.bf16.mxu0 %v1381
        %1391 = vmatpush1.bf16.msra.mxu0 %v1378
        %1392 = vmatprep.subr.bf16.mxu0 0
        %1393 = vmatpush1.bf16.msra.mxu0 0
        %1394 = vmatprep.subr.bf16.mxu0 0
        %1395 = vmatpush1.bf16.msra.mxu0 0
        %1396 = vmatprep.subr.bf16.mxu0 0
        %1397 = vmatpush1.bf16.msra.mxu0 0
        %1398 = vmatprep.subr.bf16.mxu0 0
        %1399 = vmatpush1.bf16.msra.mxu0 0
        %1400 = vmatprep.subr.bf16.mxu0 0
        %1401 = vmatpush1.bf16.msra.mxu0 0
        %1402 = vmatprep.subr.bf16.mxu0 0
        %1403 = vmatpush1.bf16.msra.mxu0 0
        %1404 = vmatprep.subr.bf16.mxu0 0
        %1405 = vmatpush1.bf16.msra.mxu0 0
        %1406 = vmatprep.subr.bf16.mxu0 0
        %1407 = vmatpush1.bf16.msra.mxu0 0
        %1408 = vmatprep.subr.bf16.mxu0 0
        %1409 = vmatpush1.bf16.msra.mxu0 0
        %1410 = vmatprep.subr.bf16.mxu0 0
        %1411 = vmatpush1.bf16.msra.mxu0 0
        %1412 = vmatprep.subr.bf16.mxu0 0
        %1413 = vmatpush1.bf16.msra.mxu0 0
        %1414 = vmatprep.subr.bf16.mxu0 0
        %1415 = vmatpush1.bf16.msra.mxu0 0
        %1416 = vmatprep.subr.bf16.mxu0 0
        %1417 = vmatpush1.bf16.msra.mxu0 0
        %1418 = vmatprep.mubr.bf16.mxu0 0
        %1419 = vmatmul.mubr.bf16.gmra.mrb[0].mxu0 %v1375
        %v1420 = vpop.f32.mrb[0].mxu0
        %v1421 = vadd.f32 %v1332, %v1420
        %v1422 = vpop.f32.mrb[0].mxu0
        %v1423 = vadd.f32 %v1332, %v1422
        %v1424 = vpop.f32.mrb[0].mxu0
        %v1425 = vpop.f32.mrb[0].mxu0
        %1426 = vdwg.mxu0
        %1427 = vmatprep.subr.bf16.mxu0 0
        %1428 = vmatpush1.bf16.msra.mxu0 %v1361
        %1429 = vmatprep.subr.bf16.mxu0 0
        %1430 = vmatpush1.bf16.msra.mxu0 %v1364
        %1431 = vmatprep.subr.bf16.mxu0 0
        %1432 = vmatpush1.bf16.msra.mxu0 %v1384
        %1433 = vmatprep.subr.bf16.mxu0 0
        %1434 = vmatpush1.bf16.msra.mxu0 0
        %1435 = vmatprep.subr.bf16.mxu0 0
        %1436 = vmatpush1.bf16.msra.mxu0 0
        %1437 = vmatprep.subr.bf16.mxu0 0
        %1438 = vmatpush1.bf16.msra.mxu0 0
        %1439 = vmatprep.subr.bf16.mxu0 0
        %1440 = vmatpush1.bf16.msra.mxu0 0
        %1441 = vmatprep.subr.bf16.mxu0 0
        %1442 = vmatpush1.bf16.msra.mxu0 0
        %1443 = vmatprep.subr.bf16.mxu0 0
        %1444 = vmatpush1.bf16.msra.mxu0 0
        %1445 = vmatprep.subr.bf16.mxu0 0
        %1446 = vmatpush1.bf16.msra.mxu0 0
        %1447 = vmatprep.subr.bf16.mxu0 0
        %1448 = vmatpush1.bf16.msra.mxu0 0
        %1449 = vmatprep.subr.bf16.mxu0 0
        %1450 = vmatpush1.bf16.msra.mxu0 0
        %1451 = vmatprep.subr.bf16.mxu0 0
        %1452 = vmatpush1.bf16.msra.mxu0 0
        %1453 = vmatprep.subr.bf16.mxu0 0
        %1454 = vmatpush1.bf16.msra.mxu0 0
        %1455 = vmatprep.subr.bf16.mxu0 0
        %1456 = vmatpush1.bf16.msra.mxu0 0
        %1457 = vmatprep.subr.bf16.mxu0 0
        %1458 = vmatpush1.bf16.msra.mxu0 0
        %1459 = vmatprep.mubr.bf16.mxu0 0
        %1460 = vmatmul.mubr.bf16.gmra.mrb[0].mxu0 %v1375
        %v1461 = vpop.f32.mrb[0].mxu0
        %v1462 = vadd.f32 %v1332, %v1461
        %v1463 = vpop.f32.mrb[0].mxu0
        %v1464 = vpop.f32.mrb[0].mxu0
        %v1465 = vpop.f32.mrb[0].mxu0
        %1466 = vdwg.mxu0
        %vm1467 = vcmp.gt.f32.partialorder %v1421, 0.0
        %vm1468 = vcmp.gt.f32.partialorder %v1423, 0.0
        %vm1469 = vcmp.gt.f32.partialorder %v1462, 0.0
        %v1470 = vmul.f32 %v1421, 0.2
        %v1471 = vmul.f32 %v1423, 0.2
        %v1472 = vmul.f32 %v1462, 0.2
        %v1473 = vsel %vm1467, %v1421, %v1470
        %v1474 = vsel %vm1468, %v1423, %v1471
        %v1475 = vsel %vm1469, %v1462, %v1472
        %v1476 = vld [vmem:[#allocation12] sm:$0x3]
        %v1477 = vld [vmem:[%s412] sm:$0x3f]
        %v1478 = vld [vmem:[#allocation13] sm:$0xf]
        %1480 = vset.pattern.permute.xlu0 0
        %1481 = vperm.xlu0 %1480, %v1478
        %v1482 = vpop.permute.xlu0 %1481
        %v1485 = vcombine.high %v1477, %v1477
        %v1487 = vunpack.c.l.s4 1983009808
        %v1488 = vunpack.c.0.s8 %v1487
        %v1489 = vlaneseq
        %v1490 = vshrl.u32 %v1489, 7
        %v1491 = vsub.s32 %v1488, %v1490
        %v1492 = vrot.slane %v1477, %v1491
        %v1494 = vunpack.c.l.s4 1983009808
        %v1495 = vunpack.c.0.s8 %v1494
        %v1496 = vlaneseq
        %v1497 = vshrl.u32 %v1496, 7
        %v1498 = vsub.s32 %v1495, %v1497
        %v1499 = vrot.slane %v1485, %v1498
        %v1500 = vcombine.high %v1492, %v1492
        %vm1501 = vcmask 31744
        %v1503 = vsel %vm1501, %v1476, 0
        %v1506 = vsel %vm843, %v1492, 0
        %v1509 = vsel %vm843, %v1500, 0
        %v1512 = vsel %vm843, %v1499, 0
        %1514 = vmatprep.subr.bf16.mxu0 %v1509
        %1515 = vmatpush1.bf16.msra.mxu0 %v1506
        %1516 = vmatprep.subr.bf16.mxu0 0
        %1517 = vmatpush1.bf16.msra.mxu0 0
        %1518 = vmatprep.subr.bf16.mxu0 0
        %1519 = vmatpush1.bf16.msra.mxu0 0
        %1520 = vmatprep.subr.bf16.mxu0 0
        %1521 = vmatpush1.bf16.msra.mxu0 0
        %1522 = vmatprep.subr.bf16.mxu0 0
        %1523 = vmatpush1.bf16.msra.mxu0 0
        %1524 = vmatprep.subr.bf16.mxu0 0
        %1525 = vmatpush1.bf16.msra.mxu0 0
        %1526 = vmatprep.subr.bf16.mxu0 0
        %1527 = vmatpush1.bf16.msra.mxu0 0
        %1528 = vmatprep.subr.bf16.mxu0 0
        %1529 = vmatpush1.bf16.msra.mxu0 0
        %1530 = vmatprep.subr.bf16.mxu0 0
        %1531 = vmatpush1.bf16.msra.mxu0 0
        %1532 = vmatprep.subr.bf16.mxu0 0
        %1533 = vmatpush1.bf16.msra.mxu0 0
        %1534 = vmatprep.subr.bf16.mxu0 0
        %1535 = vmatpush1.bf16.msra.mxu0 0
        %1536 = vmatprep.subr.bf16.mxu0 0
        %1537 = vmatpush1.bf16.msra.mxu0 0
        %1538 = vmatprep.subr.bf16.mxu0 0
        %1539 = vmatpush1.bf16.msra.mxu0 0
        %1540 = vmatprep.subr.bf16.mxu0 0
        %1541 = vmatpush1.bf16.msra.mxu0 0
        %1542 = vmatprep.subr.bf16.mxu0 0
        %1543 = vmatpush1.bf16.msra.mxu0 0
        %1544 = vmatprep.subr.bf16.mxu0 0
        %1545 = vmatpush1.bf16.msra.mxu0 0
        %1546 = vmatprep.mubr.bf16.mxu0 0
        %1547 = vmatmul.mubr.bf16.gmra.mrb[0].mxu0 %v1503
        %v1548 = vpop.f32.mrb[0].mxu0
        %v1549 = vadd.f32 %v1482, %v1548
        %v1550 = vpop.f32.mrb[0].mxu0
        %v1551 = vadd.f32 %v1482, %v1550
        %v1552 = vpop.f32.mrb[0].mxu0
        %v1553 = vpop.f32.mrb[0].mxu0
        %1554 = vdwg.mxu0
        %1555 = vmatprep.subr.bf16.mxu0 0
        %1556 = vmatpush1.bf16.msra.mxu0 %v1512
        %1557 = vmatprep.subr.bf16.mxu0 0
        %1558 = vmatpush1.bf16.msra.mxu0 0
        %1559 = vmatprep.subr.bf16.mxu0 0
        %1560 = vmatpush1.bf16.msra.mxu0 0
        %1561 = vmatprep.subr.bf16.mxu0 0
        %1562 = vmatpush1.bf16.msra.mxu0 0
        %1563 = vmatprep.subr.bf16.mxu0 0
        %1564 = vmatpush1.bf16.msra.mxu0 0
        %1565 = vmatprep.subr.bf16.mxu0 0
        %1566 = vmatpush1.bf16.msra.mxu0 0
        %1567 = vmatprep.subr.bf16.mxu0 0
        %1568 = vmatpush1.bf16.msra.mxu0 0
        %1569 = vmatprep.subr.bf16.mxu0 0
        %1570 = vmatpush1.bf16.msra.mxu0 0
        %1571 = vmatprep.subr.bf16.mxu0 0
        %1572 = vmatpush1.bf16.msra.mxu0 0
        %1573 = vmatprep.subr.bf16.mxu0 0
        %1574 = vmatpush1.bf16.msra.mxu0 0
        %1575 = vmatprep.subr.bf16.mxu0 0
        %1576 = vmatpush1.bf16.msra.mxu0 0
        %1577 = vmatprep.subr.bf16.mxu0 0
        %1578 = vmatpush1.bf16.msra.mxu0 0
        %1579 = vmatprep.subr.bf16.mxu0 0
        %1580 = vmatpush1.bf16.msra.mxu0 0
        %1581 = vmatprep.subr.bf16.mxu0 0
        %1582 = vmatpush1.bf16.msra.mxu0 0
        %1583 = vmatprep.subr.bf16.mxu0 0
        %1584 = vmatpush1.bf16.msra.mxu0 0
        %1585 = vmatprep.subr.bf16.mxu0 0
        %1586 = vmatpush1.bf16.msra.mxu0 0
        %1587 = vmatprep.mubr.bf16.mxu0 0
        %1588 = vmatmul.mubr.bf16.gmra.mrb[0].mxu0 %v1503
        %v1589 = vpop.f32.mrb[0].mxu0
        %v1590 = vadd.f32 %v1482, %v1589
        %v1591 = vpop.f32.mrb[0].mxu0
        %v1592 = vpop.f32.mrb[0].mxu0
        %v1593 = vpop.f32.mrb[0].mxu0
        %1594 = vdwg.mxu0
        %v1595 = vadd.f32 %v1473, %v1549
        %v1596 = vadd.f32 %v1474, %v1551
        %v1597 = vadd.f32 %v1475, %v1590
        %v1600 = vcombine.low %v1595, %v1596
        %1602 = vst [vmem:[%s446] sm:$0xff] %v1600
        %1603 = vst [vmem:[%s446 + $0x8] sm:$0xf] %v1597
        %s1604 = sand.u32 %s230, 1
        %s1605 = scalar_lea.sflag [#allocation6], %s1604
        %s1606 = sand.u32 %s230, 1
        %s1607 = smul.addr %s1606, 12
        %s1608 = scalar_lea.vmem [#allocation19], %s1607
        // Predicated region
        $region93: #{tpu_custom_call.1} parent=55 // pred_check
          %p1609 = pneg %p240
        $region94: #{tpu_custom_call.1} parent=55 // pred_check_branch
          %1611 = sbr.rel (%p1609) target = $region96
        $region95: #{tpu_custom_call.1} parent=55 // pred_region
          %s1612 = smul.u32 3, %s28
          %s1614 = ssub.s32 192, 192
          %1615 = vsyncadd %s1605, %s1614
          %s1616 = smul.addr %s1612, 64
          %s1617 = scalar_lea.hbm %s9, %s1616
          %s1619 = sshll.u32 %s1608, 4
          %s1620 = int_to_ptr.vmem [resolvable:$true] %s1619
          %1622 = dma.vmem_to_hbm [thread:$0]  %s1620, 192, %s1617, %s1605
        $region96: #{tpu_custom_call.1} parent=55 // pred_fallthru
          _
      $region56: #{tpu_custom_call.1} parent=5 // pred_fallthru
        _
      %p1623 = scmp.le.s32.totalorder 2, %s23
      // Predicated region
      $region97: #{tpu_custom_call.1} parent=5 // pred_check
        %p1624 = pneg %p1623
      $region98: #{tpu_custom_call.1} parent=5 // pred_check_branch
        %1626 = sbr.rel (%p1624) target = $region100
      $region99: #{tpu_custom_call.1} parent=5 // pred_region
        %s1627 = ssub.s32 %s23, 2
        // Predicated region
        $region101: #{tpu_custom_call.1} parent=99 // pred_check
          %p1628 = pneg %p246
        $region102: #{tpu_custom_call.1} parent=99 // pred_check_branch
          %1630 = sbr.rel (%p1628) target = $region104
        $region103: #{tpu_custom_call.1} parent=99 // pred_region
          %s1631 = sand.u32 %s231, 1
          %s1632 = scalar_lea.sflag [#allocation6], %s1631
          %s1633 = sand.u32 %s231, 1
          %s1634 = smul.addr %s1633, 12
          %s1635 = scalar_lea.vmem [#allocation19], %s1634
          %1636 = dma.done %s1632, 192
        $region104: #{tpu_custom_call.1} parent=99 // pred_fallthru
          _
      $region100: #{tpu_custom_call.1} parent=5 // pred_fallthru
        _
    $region6: #{tpu_custom_call.1} parent=1 // loop_footer
      %s27 = sadd.s32 1, %s23
    $region7: #{tpu_custom_call.1} parent=1 // loop_footer_branch
      %22 = sbr.rel target = $region3
    $region8: #{tpu_custom_call.1} parent=1 // loop_exit
      _
    %1637 = vsyncpa [#allocation5], 1
    %s1638 = scalar_lea.sflag [#allocation5], 1
    %1639 = vsyncpa %s1638, 1
    %1640 = vsyncpa [#allocation8], 1
    %1641 = vsyncpa [#allocation11], 1
    %1642 = vsyncpa [#allocation14], 1
    %1643 = vsyncpa [#allocation17], 1
    %1644 = vsyncpa [#allocation6], 1
    %s1645 = scalar_lea.sflag [#allocation6], 1
    %1646 = vsyncpa %s1645, 1

</llo_original>
